<compile_context>
chip_gen: v5e
topology: v5e:2x2
jax: 0.10.0
libtpu: 0.0.40
codegen_flags: <defaults>
</compile_context>

<pallas_src>
import math
from functools import partial

import jax
import jax.numpy as jnp
from jax.experimental import pallas as pl
from jax.experimental.pallas import tpu as pltpu

LN_EPS = 1e-5  # PyTorch nn.LayerNorm default


def _layer_norm(r, gamma, beta):
    mean = jnp.mean(r, axis=-1, keepdims=True)
    var = jnp.mean((r - mean) ** 2, axis=-1, keepdims=True)  # biased, like PyTorch
    return (r - mean) * jax.lax.rsqrt(var + LN_EPS) * gamma + beta


# ------------------------------ fused kernel --------------------------------

def encoder_layer_kernel(x_ref,
                         wqkv_ref, bqkv_ref, wo_ref, bo_ref,
                         g1_ref, be1_ref,
                         w1_ref, b1_ref, w2_ref, b2_ref,
                         g2_ref, be2_ref,
                         out_ref, *, n_heads):
    H = n_heads
    x = x_ref[0]                                      # (S, D) f32
    S, D = x.shape
    xb = x.astype(jnp.bfloat16)
    x3 = jnp.broadcast_to(xb, (3 * H, S, D))          # hoisted once; bf16

    # --- Q/K/V projections: ONE batched MXU call (3H = batch dim).
    # W_Q already carries the 1/sqrt(d_k) scale (folded at prep time).
    qkv = jnp.einsum('hsd,hdk->hsk', x3, wqkv_ref[...],
                     preferred_element_type=jnp.float32) + bqkv_ref[...]   # (3H,S,dh) f32
    q = qkv[:H]                                       # (H,S,dh) -- free leading-dim slices
    k = qkv[H:2 * H]
    v = qkv[2 * H:]

    # --- scaled dot-product attention (scale pre-folded; K consumed transposed).
    s = jnp.einsum('hqc,hkc->hqk', q.astype(jnp.bfloat16), k.astype(jnp.bfloat16),
                   preferred_element_type=jnp.float32)                     # (H,S,S) f32
    m = jnp.max(s, axis=-1, keepdims=True)
    p = jnp.exp(s - m)
    denom = jnp.sum(p, axis=-1, keepdims=True)
    attn = p * pl.reciprocal(denom, approx=True)                           # EUP divide

    ctx = jnp.einsum('hqk,hkv->hqv', attn.astype(jnp.bfloat16), v.astype(jnp.bfloat16),
                     preferred_element_type=jnp.float32)                   # (H,S,dh)

    # --- output projection: per-head slabs, reduced over heads (no concat).
    o_h = jnp.einsum('hsv,hvd->hsd', ctx.astype(jnp.bfloat16), wo_ref[...],
                     preferred_element_type=jnp.float32)                   # (H,S,D)
    o = jnp.sum(o_h, axis=0) + bo_ref[...]                                 # (S,D)
    a1 = _layer_norm(o + x, g1_ref[...], be1_ref[...])

    # --- position-wise FFN (the 1x1 convs), fused in the same kernel.
    h = jnp.dot(a1.astype(jnp.bfloat16), w1_ref[...],
                preferred_element_type=jnp.float32) + b1_ref[...]
    h = jnp.maximum(h, 0.0)
    o2 = jnp.dot(h.astype(jnp.bfloat16), w2_ref[...],
                 preferred_element_type=jnp.float32) + b2_ref[...]
    out_ref[0] = _layer_norm(o2 + a1, g2_ref[...], be2_ref[...])


# ------------------------------ wrappers -------------------------------------

def _full_spec(shape):
    ndim = len(shape)
    return pl.BlockSpec(shape, lambda b, n=ndim: (0,) * n)


def _cost_estimate(B, S, D, dh, d_ff, H):
    flops = B * (
        2 * S * D * dh * 3 * H        # fused Q/K/V projection
        + 2 * H * S * S * dh          # scores
        + 2 * H * S * S * dh          # context
        + 2 * H * S * dh * D          # output projection
        + 2 * S * D * d_ff            # FFN up
        + 2 * S * d_ff * D            # FFN down
    )
    transcendentals = B * (H * S * S + H * S + 2 * S)   # exp + reciprocal + rsqrt
    bytes_accessed = (
        2 * B * S * D * 4                                          # act in/out f32
        + (3 * H * D * dh + H * dh * D + 2 * D * d_ff) * 2         # bf16 weights
        + (3 * H * dh + 6 * D + d_ff) * 4                          # biases + LN params f32
    )
    return pl.CostEstimate(flops=flops, transcendentals=transcendentals,
                           bytes_accessed=bytes_accessed)


def encoder_layer_call(x, params, *, n_heads):
    B, S, D = x.shape
    dh = params[0].shape[-1]
    d_ff = params[6].shape[-1]
    kernel = partial(encoder_layer_kernel, n_heads=n_heads)
    return pl.pallas_call(
        kernel,
        out_shape=jax.ShapeDtypeStruct((B, S, D), jnp.float32),
        grid=(B,),
        in_specs=[pl.BlockSpec((1, S, D), lambda b: (b, 0, 0))]
                 + [_full_spec(p.shape) for p in params],
        out_specs=pl.BlockSpec((1, S, D), lambda b: (b, 0, 0)),
        compiler_params=pltpu.CompilerParams(
            dimension_semantics=("parallel",),
            vmem_limit_bytes=48 * 1024 * 1024),
        cost_estimate=_cost_estimate(B, S, D, dh, d_ff, n_heads),
    )(x, *params)


def transformer_forward(x, prepared_layers, *, n_heads):
    out = x
    for lp in prepared_layers:
        out = encoder_layer_call(out, lp, n_heads=n_heads)   # one fused kernel / layer
    return out


# --------------------------- parameter init / prep ---------------------------

def init_params(key, n_layers, d_model, d_k, d_v, d_ff, n_heads):
    """Raw parameters in the PyTorch-equivalent layout (f32)."""
    def lin(k, fan_in, fan_out):
        k1, k2 = jax.random.split(k)
        bound = 1.0 / math.sqrt(fan_in)
        w = jax.random.uniform(k1, (fan_in, fan_out), jnp.float32, -bound, bound)
        b = jax.random.uniform(k2, (fan_out,), jnp.float32, -bound, bound)
        return w, b

    layers = []
    for l in range(n_layers):
        keys = jax.random.split(jax.random.fold_in(key, l), 6)
        wq, bq = lin(keys[0], d_model, n_heads * d_k)
        wk, bk = lin(keys[1], d_model, n_heads * d_k)
        wv, bv = lin(keys[2], d_model, n_heads * d_v)
        wo, bo = lin(keys[3], n_heads * d_v, d_model)
        w1, b1 = lin(keys[4], d_model, d_ff)     # 1x1 Conv1d == Linear
        w2, b2 = lin(keys[5], d_ff, d_model)
        layers.append(dict(
            wq=wq, bq=bq, wk=wk, bk=bk, wv=wv, bv=bv, wo=wo, bo=bo,
            g1=jnp.ones((d_model,), jnp.float32), be1=jnp.zeros((d_model,), jnp.float32),
            w1=w1, b1=b1, w2=w2, b2=b2,
            g2=jnp.ones((d_model,), jnp.float32), be2=jnp.zeros((d_model,), jnp.float32)))
    return layers


def prepare_layer_params(raw, *, n_heads, d_k, d_v):
    """Host-side prep: stacked per-head Q/K/V slabs, 1/sqrt(d_k) folded, bf16 weights.

    d_k != d_v is handled by zero-padding both to dh = max(d_k, d_v) (exact)."""
    D = raw["wq"].shape[0]
    d_ff = raw["w1"].shape[1]
    dh = max(d_k, d_v)
    scale = 1.0 / math.sqrt(d_k)

    def per_head(w, b, d_in, s=1.0):
        wh = (w * s).reshape(D, n_heads, d_in).transpose(1, 0, 2)        # (H, D, d_in)
        bh = (b * s).reshape(n_heads, 1, d_in)                            # (H, 1, d_in)
        if d_in < dh:
            wh = jnp.pad(wh, ((0, 0), (0, 0), (0, dh - d_in)))
            bh = jnp.pad(bh, ((0, 0), (0, 0), (0, dh - d_in)))
        return wh, bh

    wq, bq = per_head(raw["wq"], raw["bq"], d_k, scale)
    wk, bk = per_head(raw["wk"], raw["bk"], d_k)
    wv, bv = per_head(raw["wv"], raw["bv"], d_v)
    wqkv = jnp.concatenate([wq, wk, wv], axis=0).astype(jnp.bfloat16)     # (3H, D, dh)
    bqkv = jnp.concatenate([bq, bk, bv], axis=0).astype(jnp.float32)      # (3H, 1, dh)

    wo = raw["wo"].reshape(n_heads, d_v, D)
    if d_v < dh:
        wo = jnp.pad(wo, ((0, 0), (0, dh - d_v), (0, 0)))                 # padded v cols are 0
    wo = wo.astype(jnp.bfloat16)                                          # (H, dh, D)
    bo = raw["bo"].reshape(1, D).astype(jnp.float32)

    g1 = raw["g1"].reshape(1, D).astype(jnp.float32)
    be1 = raw["be1"].reshape(1, D).astype(jnp.float32)
    w1 = raw["w1"].astype(jnp.bfloat16)
    b1 = raw["b1"].reshape(1, d_ff).astype(jnp.float32)
    w2 = raw["w2"].astype(jnp.bfloat16)
    b2 = raw["b2"].reshape(1, D).astype(jnp.float32)
    g2 = raw["g2"].reshape(1, D).astype(jnp.float32)
    be2 = raw["be2"].reshape(1, D).astype(jnp.float32)
    return (wqkv, bqkv, wo, bo, g1, be1, w1, b1, w2, b2, g2, be2)


# ---------------------------- pure-JAX references -----------------------------

def reference_prepared(x, prepared_layers):
    """Same math + same bf16 matmul quantization as the kernel (tight check)."""
    f32 = jnp.float32
    out = x
    for lp in prepared_layers:
        wqkv, bqkv, wo, bo, g1, be1, w1, b1, w2, b2, g2, be2 = lp
        H = wqkv.shape[0] // 3
        xb = out.astype(jnp.bfloat16)
        qkv = jnp.einsum('bsd,hdk->bhsk', xb, wqkv, preferred_element_type=f32) + bqkv
        q, k, v = qkv[:, :H], qkv[:, H:2 * H], qkv[:, 2 * H:]
        s = jnp.einsum('bhqc,bhkc->bhqk', q.astype(jnp.bfloat16), k.astype(jnp.bfloat16),
                       preferred_element_type=f32)
        attn = jax.nn.softmax(s, axis=-1)
        ctx = jnp.einsum('bhqk,bhkv->bhqv', attn.astype(jnp.bfloat16), v.astype(jnp.bfloat16),
                         preferred_element_type=f32)
        o = jnp.einsum('bhsv,hvd->bsd', ctx.astype(jnp.bfloat16), wo,
                       preferred_element_type=f32) + bo
        a1 = _layer_norm(o + out, g1, be1)
        h = jnp.maximum(jnp.einsum('bsd,df->bsf', a1.astype(jnp.bfloat16), w1,
                                   preferred_element_type=f32) + b1, 0.0)
        o2 = jnp.einsum('bsf,fd->bsd', h.astype(jnp.bfloat16), w2,
                        preferred_element_type=f32) + b2
        out = _layer_norm(o2 + a1, g2, be2)
    return out


def reference_f32(x, raw_layers, *, n_heads, d_k, d_v):
    """Original PyTorch-module math, full f32 (loose sanity check)."""
    out = x
    for lp in raw_layers:
        B, S, D = out.shape
        q = (out @ lp["wq"] + lp["bq"]).reshape(B, S, n_heads, d_k).transpose(0, 2, 1, 3)
        k = (out @ lp["wk"] + lp["bk"]).reshape(B, S, n_heads, d_k).transpose(0, 2, 1, 3)
        v = (out @ lp["wv"] + lp["bv"]).reshape(B, S, n_heads, d_v).transpose(0, 2, 1, 3)
        s = jnp.einsum('bhqd,bhkd->bhqk', q, k) / math.sqrt(d_k)
        attn = jax.nn.softmax(s, axis=-1)
        ctx = jnp.einsum('bhqk,bhkd->bhqd', attn, v)
        ctx = ctx.transpose(0, 2, 1, 3).reshape(B, S, n_heads * d_v)
        o = ctx @ lp["wo"] + lp["bo"]
        out = _layer_norm(o + out, lp["g1"], lp["be1"])
        h = jnp.maximum(out @ lp["w1"] + lp["b1"], 0.0)
        o2 = h @ lp["w2"] + lp["b2"]
        out = _layer_norm(o2 + out, lp["g2"], lp["be2"])
    return out


# ---------------------------------- main --------------------------------------

if __name__ == "__main__":
    n_layers, d_model, d_k, d_v, d_ff, n_heads = 2, 32, 8, 8, 64, 4
    batch, seq = 2, 8

    key = jax.random.PRNGKey(0)
    k_x, k_p = jax.random.split(key)
    x = jax.random.normal(k_x, (batch, seq, d_model), jnp.float32)
    raw_layers = init_params(k_p, n_layers, d_model, d_k, d_v, d_ff, n_heads)
    prepared = [prepare_layer_params(lp, n_heads=n_heads, d_k=d_k, d_v=d_v)
                for lp in raw_layers]

    fwd = jax.jit(partial(transformer_forward, n_heads=n_heads))
    out = fwd(x, prepared)
    out = jax.block_until_ready(out)
    assert out.shape == (batch, seq, d_model)

    # Tight check: same math with identical bf16 matmul quantization
    # (approx-reciprocal softmax denominator accounts for the small tolerance).
    ref_b = reference_prepared(x, prepared)
    assert jnp.allclose(out, ref_b, atol=1e-2, rtol=1e-2), "mismatch vs bf16-matched reference"

    # Loose sanity check vs the original full-f32 module math (bf16 matmul error only).
    ref_f = reference_f32(x, raw_layers, n_heads=n_heads, d_k=d_k, d_v=d_v)
    assert float(jnp.max(jnp.abs(out - ref_f))) < 0.15, "diverged from f32 reference"

    print("KERNEL_OK")
</pallas_src>

<mosaic_0001>
module attributes {stable_mosaic.version = 11 : i64} {
  func.func @encoder_layer_kernel(%arg0: i32, %arg1: memref<1x8x32xf32, #tpu.memory_space<vmem>>, %arg2: memref<12x32x8xbf16, #tpu.memory_space<vmem>>, %arg3: memref<12x1x8xf32, #tpu.memory_space<vmem>>, %arg4: memref<4x8x32xbf16, #tpu.memory_space<vmem>>, %arg5: memref<1x32xf32, #tpu.memory_space<vmem>>, %arg6: memref<1x32xf32, #tpu.memory_space<vmem>>, %arg7: memref<1x32xf32, #tpu.memory_space<vmem>>, %arg8: memref<32x64xbf16, #tpu.memory_space<vmem>>, %arg9: memref<1x64xf32, #tpu.memory_space<vmem>>, %arg10: memref<64x32xbf16, #tpu.memory_space<vmem>>, %arg11: memref<1x32xf32, #tpu.memory_space<vmem>>, %arg12: memref<1x32xf32, #tpu.memory_space<vmem>>, %arg13: memref<1x32xf32, #tpu.memory_space<vmem>>, %arg14: memref<1x8x32xf32, #tpu.memory_space<vmem>>) attributes {dimension_semantics = [#tpu.dimension_semantics<parallel>], iteration_bounds = array<i64: 2>, scalar_prefetch = 0 : i64, scratch_operands = 0 : i64, tpu.core_type = #tpu.core_type<tc>, window_params = [{transform_indices = @transform_0, window_bounds = array<i64: 1, 8, 32>}, {pipeline_mode = #tpu.pipeline_mode<synchronous>, transform_indices = @transform_1, window_bounds = array<i64: 12, 32, 8>}, {pipeline_mode = #tpu.pipeline_mode<synchronous>, transform_indices = @transform_2, window_bounds = array<i64: 12, 1, 8>}, {pipeline_mode = #tpu.pipeline_mode<synchronous>, transform_indices = @transform_3, window_bounds = array<i64: 4, 8, 32>}, {pipeline_mode = #tpu.pipeline_mode<synchronous>, transform_indices = @transform_4, window_bounds = array<i64: 1, 32>}, {pipeline_mode = #tpu.pipeline_mode<synchronous>, transform_indices = @transform_5, window_bounds = array<i64: 1, 32>}, {pipeline_mode = #tpu.pipeline_mode<synchronous>, transform_indices = @transform_6, window_bounds = array<i64: 1, 32>}, {pipeline_mode = #tpu.pipeline_mode<synchronous>, transform_indices = @transform_7, window_bounds = array<i64: 32, 64>}, {pipeline_mode = #tpu.pipeline_mode<synchronous>, transform_indices = @transform_8, window_bounds = array<i64: 1, 64>}, {pipeline_mode = #tpu.pipeline_mode<synchronous>, transform_indices = @transform_9, window_bounds = array<i64: 64, 32>}, {pipeline_mode = #tpu.pipeline_mode<synchronous>, transform_indices = @transform_10, window_bounds = array<i64: 1, 32>}, {pipeline_mode = #tpu.pipeline_mode<synchronous>, transform_indices = @transform_11, window_bounds = array<i64: 1, 32>}, {pipeline_mode = #tpu.pipeline_mode<synchronous>, transform_indices = @transform_12, window_bounds = array<i64: 1, 32>}, {transform_indices = @transform_13, window_bounds = array<i64: 1, 8, 32>}]} {
    %c0 = arith.constant 0 : index
    %c0_0 = arith.constant 0 : index
    %c0_1 = arith.constant 0 : index
    %0 = vector.load %arg1[%c0, %c0_0, %c0_1] : memref<1x8x32xf32, #tpu.memory_space<vmem>>, vector<1x8x32xf32>
    %1 = vector.shape_cast %0 : vector<1x8x32xf32> to vector<8x32xf32>
    %2 = arith.truncf %1 : vector<8x32xf32> to vector<8x32xbf16>
    %3 = vector.shape_cast %2 : vector<8x32xbf16> to vector<1x8x32xbf16>
    %4 = vector.broadcast %3 : vector<1x8x32xbf16> to vector<12x8x32xbf16>
    %c0_2 = arith.constant 0 : index
    %c0_3 = arith.constant 0 : index
    %c0_4 = arith.constant 0 : index
    %5 = vector.load %arg2[%c0_2, %c0_3, %c0_4] : memref<12x32x8xbf16, #tpu.memory_space<vmem>>, vector<12x32x8xbf16>
    "tpu.trace_start"() <{level = 10 : i32, message = "hsd,hdk->hsk"}> : () -> ()
    %cst = arith.constant dense<0.000000e+00> : vector<12x8x8xf32>
    %6 = tpu.matmul %4, %5, %cst {dimension_numbers = #tpu.dot_dimension_numbers<[2], [1], [1], [2], [0, 0, 0, 1, 1, 2], [0], [0]>} : vector<12x8x32xbf16>, vector<12x32x8xbf16>, vector<12x8x8xf32> -> vector<12x8x8xf32>
    "tpu.trace_stop"() : () -> ()
    %c0_5 = arith.constant 0 : index
    %c0_6 = arith.constant 0 : index
    %c0_7 = arith.constant 0 : index
    %7 = vector.load %arg3[%c0_5, %c0_6, %c0_7] : memref<12x1x8xf32, #tpu.memory_space<vmem>>, vector<12x1x8xf32>
    %8 = vector.broadcast %7 : vector<12x1x8xf32> to vector<12x8x8xf32>
    %9 = arith.addf %6, %8 : vector<12x8x8xf32>
    %10 = vector.extract_strided_slice %9 {offsets = [0, 0, 0], sizes = [4, 8, 8], strides = [1, 1, 1]} : vector<12x8x8xf32> to vector<4x8x8xf32>
    %11 = vector.extract_strided_slice %9 {offsets = [4, 0, 0], sizes = [4, 8, 8], strides = [1, 1, 1]} : vector<12x8x8xf32> to vector<4x8x8xf32>
    %12 = vector.extract_strided_slice %9 {offsets = [8, 0, 0], sizes = [4, 8, 8], strides = [1, 1, 1]} : vector<12x8x8xf32> to vector<4x8x8xf32>
    %13 = arith.truncf %10 : vector<4x8x8xf32> to vector<4x8x8xbf16>
    %14 = arith.truncf %11 : vector<4x8x8xf32> to vector<4x8x8xbf16>
    "tpu.trace_start"() <{level = 10 : i32, message = "hqc,hkc->hqk"}> : () -> ()
    %cst_8 = arith.constant dense<0.000000e+00> : vector<4x8x8xf32>
    %15 = tpu.matmul %13, %14, %cst_8 {dimension_numbers = #tpu.dot_dimension_numbers<[2], [2], [1], [1], [0, 0, 0, 1, 1, 1], [0], [0]>} : vector<4x8x8xbf16>, vector<4x8x8xbf16>, vector<4x8x8xf32> -> vector<4x8x8xf32>
    "tpu.trace_stop"() : () -> ()
    %cst_9 = arith.constant dense<0xFF800000> : vector<4x8xf32>
    %16 = vector.multi_reduction <maximumf>, %15, %cst_9 [2] : vector<4x8x8xf32> to vector<4x8xf32>
    %17 = vector.shape_cast %16 : vector<4x8xf32> to vector<4x8x1xf32>
    %18 = vector.broadcast %17 : vector<4x8x1xf32> to vector<4x8x8xf32>
    %19 = arith.subf %15, %18 : vector<4x8x8xf32>
    %20 = math.exp %19 : vector<4x8x8xf32>
    %cst_10 = arith.constant dense<0.000000e+00> : vector<4x8xf32>
    %21 = vector.multi_reduction <add>, %20, %cst_10 [2] : vector<4x8x8xf32> to vector<4x8xf32>
    %22 = vector.shape_cast %21 : vector<4x8xf32> to vector<4x8x1xf32>
    %23 = tpu.reciprocal %22 {approx = true} : vector<4x8x1xf32> -> vector<4x8x1xf32>
    %24 = vector.broadcast %23 : vector<4x8x1xf32> to vector<4x8x8xf32>
    %25 = arith.mulf %20, %24 : vector<4x8x8xf32>
    %26 = arith.truncf %25 : vector<4x8x8xf32> to vector<4x8x8xbf16>
    %27 = arith.truncf %12 : vector<4x8x8xf32> to vector<4x8x8xbf16>
    "tpu.trace_start"() <{level = 10 : i32, message = "hqk,hkv->hqv"}> : () -> ()
    %cst_11 = arith.constant dense<0.000000e+00> : vector<4x8x8xf32>
    %28 = tpu.matmul %26, %27, %cst_11 {dimension_numbers = #tpu.dot_dimension_numbers<[2], [1], [1], [2], [0, 0, 0, 1, 1, 2], [0], [0]>} : vector<4x8x8xbf16>, vector<4x8x8xbf16>, vector<4x8x8xf32> -> vector<4x8x8xf32>
    "tpu.trace_stop"() : () -> ()
    %29 = arith.truncf %28 : vector<4x8x8xf32> to vector<4x8x8xbf16>
    %c0_12 = arith.constant 0 : index
    %c0_13 = arith.constant 0 : index
    %c0_14 = arith.constant 0 : index
    %30 = vector.load %arg4[%c0_12, %c0_13, %c0_14] : memref<4x8x32xbf16, #tpu.memory_space<vmem>>, vector<4x8x32xbf16>
    "tpu.trace_start"() <{level = 10 : i32, message = "hsv,hvd->hsd"}> : () -> ()
    %cst_15 = arith.constant dense<0.000000e+00> : vector<4x8x32xf32>
    %31 = tpu.matmul %29, %30, %cst_15 {dimension_numbers = #tpu.dot_dimension_numbers<[2], [1], [1], [2], [0, 0, 0, 1, 1, 2], [0], [0]>} : vector<4x8x8xbf16>, vector<4x8x32xbf16>, vector<4x8x32xf32> -> vector<4x8x32xf32>
    "tpu.trace_stop"() : () -> ()
    %cst_16 = arith.constant dense<0.000000e+00> : vector<8x32xf32>
    %32 = vector.multi_reduction <add>, %31, %cst_16 [0] : vector<4x8x32xf32> to vector<8x32xf32>
    %c0_17 = arith.constant 0 : index
    %c0_18 = arith.constant 0 : index
    %33 = vector.load %arg5[%c0_17, %c0_18] : memref<1x32xf32, #tpu.memory_space<vmem>>, vector<1x32xf32>
    %34 = vector.broadcast %33 : vector<1x32xf32> to vector<8x32xf32>
    %35 = arith.addf %32, %34 : vector<8x32xf32>
    %36 = arith.addf %35, %1 : vector<8x32xf32>
    %c0_19 = arith.constant 0 : index
    %c0_20 = arith.constant 0 : index
    %37 = vector.load %arg6[%c0_19, %c0_20] : memref<1x32xf32, #tpu.memory_space<vmem>>, vector<1x32xf32>
    %c0_21 = arith.constant 0 : index
    %c0_22 = arith.constant 0 : index
    %38 = vector.load %arg7[%c0_21, %c0_22] : memref<1x32xf32, #tpu.memory_space<vmem>>, vector<1x32xf32>
    %cst_23 = arith.constant dense<0.000000e+00> : vector<8xf32>
    %39 = vector.multi_reduction <add>, %36, %cst_23 [1] : vector<8x32xf32> to vector<8xf32>
    %40 = vector.shape_cast %39 : vector<8xf32> to vector<8x1xf32>
    %cst_24 = arith.constant 3.200000e+01 : f32
    %41 = vector.broadcast %cst_24 : f32 to vector<8x1xf32>
    %42 = arith.divf %40, %41 : vector<8x1xf32>
    %43 = vector.broadcast %42 : vector<8x1xf32> to vector<8x32xf32>
    %44 = arith.subf %36, %43 : vector<8x32xf32>
    %45 = arith.mulf %44, %44 : vector<8x32xf32>
    %cst_25 = arith.constant dense<0.000000e+00> : vector<8xf32>
    %46 = vector.multi_reduction <add>, %45, %cst_25 [1] : vector<8x32xf32> to vector<8xf32>
    %47 = vector.shape_cast %46 : vector<8xf32> to vector<8x1xf32>
    %cst_26 = arith.constant 3.200000e+01 : f32
    %48 = vector.broadcast %cst_26 : f32 to vector<8x1xf32>
    %49 = arith.divf %47, %48 : vector<8x1xf32>
    %50 = vector.broadcast %42 : vector<8x1xf32> to vector<8x32xf32>
    %51 = arith.subf %36, %50 : vector<8x32xf32>
    %cst_27 = arith.constant 9.99999974E-6 : f32
    %52 = vector.broadcast %cst_27 : f32 to vector<8x1xf32>
    %53 = arith.addf %49, %52 : vector<8x1xf32>
    %54 = math.rsqrt %53 : vector<8x1xf32>
    %55 = vector.broadcast %54 : vector<8x1xf32> to vector<8x32xf32>
    %56 = arith.mulf %51, %55 : vector<8x32xf32>
    %57 = vector.broadcast %37 : vector<1x32xf32> to vector<8x32xf32>
    %58 = arith.mulf %56, %57 : vector<8x32xf32>
    %59 = vector.broadcast %38 : vector<1x32xf32> to vector<8x32xf32>
    %60 = arith.addf %58, %59 : vector<8x32xf32>
    %61 = arith.truncf %60 : vector<8x32xf32> to vector<8x32xbf16>
    %c0_28 = arith.constant 0 : index
    %c0_29 = arith.constant 0 : index
    %62 = vector.load %arg8[%c0_28, %c0_29] : memref<32x64xbf16, #tpu.memory_space<vmem>>, vector<32x64xbf16>
    %cst_30 = arith.constant dense<0.000000e+00> : vector<8x64xf32>
    %63 = tpu.matmul %61, %62, %cst_30 {dimension_numbers = #tpu.dot_dimension_numbers<[1], [0], [0], [1], [0, 0, 1, 1], [], []>} : vector<8x32xbf16>, vector<32x64xbf16>, vector<8x64xf32> -> vector<8x64xf32>
    %c0_31 = arith.constant 0 : index
    %c0_32 = arith.constant 0 : index
    %64 = vector.load %arg9[%c0_31, %c0_32] : memref<1x64xf32, #tpu.memory_space<vmem>>, vector<1x64xf32>
    %65 = vector.broadcast %64 : vector<1x64xf32> to vector<8x64xf32>
    %66 = arith.addf %63, %65 : vector<8x64xf32>
    %cst_33 = arith.constant 0.000000e+00 : f32
    %67 = vector.broadcast %cst_33 : f32 to vector<8x64xf32>
    %68 = arith.maximumf %66, %67 : vector<8x64xf32>
    %69 = arith.truncf %68 : vector<8x64xf32> to vector<8x64xbf16>
    %c0_34 = arith.constant 0 : index
    %c0_35 = arith.constant 0 : index
    %70 = vector.load %arg10[%c0_34, %c0_35] : memref<64x32xbf16, #tpu.memory_space<vmem>>, vector<64x32xbf16>
    %cst_36 = arith.constant dense<0.000000e+00> : vector<8x32xf32>
    %71 = tpu.matmul %69, %70, %cst_36 {dimension_numbers = #tpu.dot_dimension_numbers<[1], [0], [0], [1], [0, 0, 1, 1], [], []>} : vector<8x64xbf16>, vector<64x32xbf16>, vector<8x32xf32> -> vector<8x32xf32>
    %c0_37 = arith.constant 0 : index
    %c0_38 = arith.constant 0 : index
    %72 = vector.load %arg11[%c0_37, %c0_38] : memref<1x32xf32, #tpu.memory_space<vmem>>, vector<1x32xf32>
    %73 = vector.broadcast %72 : vector<1x32xf32> to vector<8x32xf32>
    %74 = arith.addf %71, %73 : vector<8x32xf32>
    %75 = arith.addf %74, %60 : vector<8x32xf32>
    %c0_39 = arith.constant 0 : index
    %c0_40 = arith.constant 0 : index
    %76 = vector.load %arg12[%c0_39, %c0_40] : memref<1x32xf32, #tpu.memory_space<vmem>>, vector<1x32xf32>
    %c0_41 = arith.constant 0 : index
    %c0_42 = arith.constant 0 : index
    %77 = vector.load %arg13[%c0_41, %c0_42] : memref<1x32xf32, #tpu.memory_space<vmem>>, vector<1x32xf32>
    %cst_43 = arith.constant dense<0.000000e+00> : vector<8xf32>
    %78 = vector.multi_reduction <add>, %75, %cst_43 [1] : vector<8x32xf32> to vector<8xf32>
    %79 = vector.shape_cast %78 : vector<8xf32> to vector<8x1xf32>
    %cst_44 = arith.constant 3.200000e+01 : f32
    %80 = vector.broadcast %cst_44 : f32 to vector<8x1xf32>
    %81 = arith.divf %79, %80 : vector<8x1xf32>
    %82 = vector.broadcast %81 : vector<8x1xf32> to vector<8x32xf32>
    %83 = arith.subf %75, %82 : vector<8x32xf32>
    %84 = arith.mulf %83, %83 : vector<8x32xf32>
    %cst_45 = arith.constant dense<0.000000e+00> : vector<8xf32>
    %85 = vector.multi_reduction <add>, %84, %cst_45 [1] : vector<8x32xf32> to vector<8xf32>
    %86 = vector.shape_cast %85 : vector<8xf32> to vector<8x1xf32>
    %cst_46 = arith.constant 3.200000e+01 : f32
    %87 = vector.broadcast %cst_46 : f32 to vector<8x1xf32>
    %88 = arith.divf %86, %87 : vector<8x1xf32>
    %89 = vector.broadcast %81 : vector<8x1xf32> to vector<8x32xf32>
    %90 = arith.subf %75, %89 : vector<8x32xf32>
    %cst_47 = arith.constant 9.99999974E-6 : f32
    %91 = vector.broadcast %cst_47 : f32 to vector<8x1xf32>
    %92 = arith.addf %88, %91 : vector<8x1xf32>
    %93 = math.rsqrt %92 : vector<8x1xf32>
    %94 = vector.broadcast %93 : vector<8x1xf32> to vector<8x32xf32>
    %95 = arith.mulf %90, %94 : vector<8x32xf32>
    %96 = vector.broadcast %76 : vector<1x32xf32> to vector<8x32xf32>
    %97 = arith.mulf %95, %96 : vector<8x32xf32>
    %98 = vector.broadcast %77 : vector<1x32xf32> to vector<8x32xf32>
    %99 = arith.addf %97, %98 : vector<8x32xf32>
    %c0_48 = arith.constant 0 : index
    %c0_49 = arith.constant 0 : index
    %c0_50 = arith.constant 0 : index
    %100 = vector.load %arg14[%c0_48, %c0_49, %c0_50] : memref<1x8x32xf32, #tpu.memory_space<vmem>>, vector<1x8x32xf32>
    %101 = vector.shape_cast %100 : vector<1x8x32xf32> to vector<8x32xf32>
    %102 = vector.shape_cast %99 : vector<8x32xf32> to vector<1x8x32xf32>
    tpu.vector_store %arg14[%c0_48, %c0_49, %c0_50], %102 {strides = array<i32>} : memref<1x8x32xf32, #tpu.memory_space<vmem>>, vector<1x8x32xf32>,
    return
  }
  func.func @transform_0(%arg0: i32) -> (i32, i32, i32) {
    %c0_i32 = arith.constant 0 : i32
    %c0_i32_0 = arith.constant 0 : i32
    %c0_i32_1 = arith.constant 0 : i32
    return %arg0, %c0_i32, %c0_i32_0 : i32, i32, i32
  }
  func.func @transform_1(%arg0: i32) -> (i32, i32, i32) {
    %c0_i32 = arith.constant 0 : i32
    %c0_i32_0 = arith.constant 0 : i32
    %c0_i32_1 = arith.constant 0 : i32
    %c0_i32_2 = arith.constant 0 : i32
    return %c0_i32, %c0_i32_0, %c0_i32_1 : i32, i32, i32
  }
  func.func @transform_2(%arg0: i32) -> (i32, i32, i32) {
    %c0_i32 = arith.constant 0 : i32
    %c0_i32_0 = arith.constant 0 : i32
    %c0_i32_1 = arith.constant 0 : i32
    %c0_i32_2 = arith.constant 0 : i32
    return %c0_i32, %c0_i32_0, %c0_i32_1 : i32, i32, i32
  }
  func.func @transform_3(%arg0: i32) -> (i32, i32, i32) {
    %c0_i32 = arith.constant 0 : i32
    %c0_i32_0 = arith.constant 0 : i32
    %c0_i32_1 = arith.constant 0 : i32
    %c0_i32_2 = arith.constant 0 : i32
    return %c0_i32, %c0_i32_0, %c0_i32_1 : i32, i32, i32
  }
  func.func @transform_4(%arg0: i32) -> (i32, i32) {
    %c0_i32 = arith.constant 0 : i32
    %c0_i32_0 = arith.constant 0 : i32
    %c0_i32_1 = arith.constant 0 : i32
    return %c0_i32, %c0_i32_0 : i32, i32
  }
  func.func @transform_5(%arg0: i32) -> (i32, i32) {
    %c0_i32 = arith.constant 0 : i32
    %c0_i32_0 = arith.constant 0 : i32
    %c0_i32_1 = arith.constant 0 : i32
    return %c0_i32, %c0_i32_0 : i32, i32
  }
  func.func @transform_6(%arg0: i32) -> (i32, i32) {
    %c0_i32 = arith.constant 0 : i32
    %c0_i32_0 = arith.constant 0 : i32
    %c0_i32_1 = arith.constant 0 : i32
    return %c0_i32, %c0_i32_0 : i32, i32
  }
  func.func @transform_7(%arg0: i32) -> (i32, i32) {
    %c0_i32 = arith.constant 0 : i32
    %c0_i32_0 = arith.constant 0 : i32
    %c0_i32_1 = arith.constant 0 : i32
    return %c0_i32, %c0_i32_0 : i32, i32
  }
  func.func @transform_8(%arg0: i32) -> (i32, i32) {
    %c0_i32 = arith.constant 0 : i32
    %c0_i32_0 = arith.constant 0 : i32
    %c0_i32_1 = arith.constant 0 : i32
    return %c0_i32, %c0_i32_0 : i32, i32
  }
  func.func @transform_9(%arg0: i32) -> (i32, i32) {
    %c0_i32 = arith.constant 0 : i32
    %c0_i32_0 = arith.constant 0 : i32
    %c0_i32_1 = arith.constant 0 : i32
    return %c0_i32, %c0_i32_0 : i32, i32
  }
  func.func @transform_10(%arg0: i32) -> (i32, i32) {
    %c0_i32 = arith.constant 0 : i32
    %c0_i32_0 = arith.constant 0 : i32
    %c0_i32_1 = arith.constant 0 : i32
    return %c0_i32, %c0_i32_0 : i32, i32
  }
  func.func @transform_11(%arg0: i32) -> (i32, i32) {
    %c0_i32 = arith.constant 0 : i32
    %c0_i32_0 = arith.constant 0 : i32
    %c0_i32_1 = arith.constant 0 : i32
    return %c0_i32, %c0_i32_0 : i32, i32
  }
  func.func @transform_12(%arg0: i32) -> (i32, i32) {
    %c0_i32 = arith.constant 0 : i32
    %c0_i32_0 = arith.constant 0 : i32
    %c0_i32_1 = arith.constant 0 : i32
    return %c0_i32, %c0_i32_0 : i32, i32
  }
  func.func @transform_13(%arg0: i32) -> (i32, i32, i32) {
    %c0_i32 = arith.constant 0 : i32
    %c0_i32_0 = arith.constant 0 : i32
    %c0_i32_1 = arith.constant 0 : i32
    return %arg0, %c0_i32, %c0_i32_0 : i32, i32, i32
  }
}

module attributes {stable_mosaic.version = 11 : i64} {
  func.func @encoder_layer_kernel(%arg0: i32, %arg1: memref<1x8x32xf32, #tpu.memory_space<vmem>>, %arg2: memref<12x32x8xbf16, #tpu.memory_space<vmem>>, %arg3: memref<12x1x8xf32, #tpu.memory_space<vmem>>, %arg4: memref<4x8x32xbf16, #tpu.memory_space<vmem>>, %arg5: memref<1x32xf32, #tpu.memory_space<vmem>>, %arg6: memref<1x32xf32, #tpu.memory_space<vmem>>, %arg7: memref<1x32xf32, #tpu.memory_space<vmem>>, %arg8: memref<32x64xbf16, #tpu.memory_space<vmem>>, %arg9: memref<1x64xf32, #tpu.memory_space<vmem>>, %arg10: memref<64x32xbf16, #tpu.memory_space<vmem>>, %arg11: memref<1x32xf32, #tpu.memory_space<vmem>>, %arg12: memref<1x32xf32, #tpu.memory_space<vmem>>, %arg13: memref<1x32xf32, #tpu.memory_space<vmem>>, %arg14: memref<1x8x32xf32, #tpu.memory_space<vmem>>) attributes {dimension_semantics = [#tpu.dimension_semantics<parallel>], iteration_bounds = array<i64: 2>, scalar_prefetch = 0 : i64, scratch_operands = 0 : i64, tpu.core_type = #tpu.core_type<tc>, window_params = [{transform_indices = @transform_0, window_bounds = array<i64: 1, 8, 32>}, {pipeline_mode = #tpu.pipeline_mode<synchronous>, transform_indices = @transform_1, window_bounds = array<i64: 12, 32, 8>}, {pipeline_mode = #tpu.pipeline_mode<synchronous>, transform_indices = @transform_2, window_bounds = array<i64: 12, 1, 8>}, {pipeline_mode = #tpu.pipeline_mode<synchronous>, transform_indices = @transform_3, window_bounds = array<i64: 4, 8, 32>}, {pipeline_mode = #tpu.pipeline_mode<synchronous>, transform_indices = @transform_4, window_bounds = array<i64: 1, 32>}, {pipeline_mode = #tpu.pipeline_mode<synchronous>, transform_indices = @transform_5, window_bounds = array<i64: 1, 32>}, {pipeline_mode = #tpu.pipeline_mode<synchronous>, transform_indices = @transform_6, window_bounds = array<i64: 1, 32>}, {pipeline_mode = #tpu.pipeline_mode<synchronous>, transform_indices = @transform_7, window_bounds = array<i64: 32, 64>}, {pipeline_mode = #tpu.pipeline_mode<synchronous>, transform_indices = @transform_8, window_bounds = array<i64: 1, 64>}, {pipeline_mode = #tpu.pipeline_mode<synchronous>, transform_indices = @transform_9, window_bounds = array<i64: 64, 32>}, {pipeline_mode = #tpu.pipeline_mode<synchronous>, transform_indices = @transform_10, window_bounds = array<i64: 1, 32>}, {pipeline_mode = #tpu.pipeline_mode<synchronous>, transform_indices = @transform_11, window_bounds = array<i64: 1, 32>}, {pipeline_mode = #tpu.pipeline_mode<synchronous>, transform_indices = @transform_12, window_bounds = array<i64: 1, 32>}, {transform_indices = @transform_13, window_bounds = array<i64: 1, 8, 32>}]} {
    %c0 = arith.constant 0 : index
    %c0_0 = arith.constant 0 : index
    %c0_1 = arith.constant 0 : index
    %0 = vector.load %arg1[%c0, %c0_0, %c0_1] : memref<1x8x32xf32, #tpu.memory_space<vmem>>, vector<1x8x32xf32>
    %1 = vector.shape_cast %0 : vector<1x8x32xf32> to vector<8x32xf32>
    %2 = arith.truncf %1 : vector<8x32xf32> to vector<8x32xbf16>
    %3 = vector.shape_cast %2 : vector<8x32xbf16> to vector<1x8x32xbf16>
    %4 = vector.broadcast %3 : vector<1x8x32xbf16> to vector<12x8x32xbf16>
    %c0_2 = arith.constant 0 : index
    %c0_3 = arith.constant 0 : index
    %c0_4 = arith.constant 0 : index
    %5 = vector.load %arg2[%c0_2, %c0_3, %c0_4] : memref<12x32x8xbf16, #tpu.memory_space<vmem>>, vector<12x32x8xbf16>
    "tpu.trace_start"() <{level = 10 : i32, message = "hsd,hdk->hsk"}> : () -> ()
    %cst = arith.constant dense<0.000000e+00> : vector<12x8x8xf32>
    %6 = tpu.matmul %4, %5, %cst {dimension_numbers = #tpu.dot_dimension_numbers<[2], [1], [1], [2], [0, 0, 0, 1, 1, 2], [0], [0]>} : vector<12x8x32xbf16>, vector<12x32x8xbf16>, vector<12x8x8xf32> -> vector<12x8x8xf32>
    "tpu.trace_stop"() : () -> ()
    %c0_5 = arith.constant 0 : index
    %c0_6 = arith.constant 0 : index
    %c0_7 = arith.constant 0 : index
    %7 = vector.load %arg3[%c0_5, %c0_6, %c0_7] : memref<12x1x8xf32, #tpu.memory_space<vmem>>, vector<12x1x8xf32>
    %8 = vector.broadcast %7 : vector<12x1x8xf32> to vector<12x8x8xf32>
    %9 = arith.addf %6, %8 : vector<12x8x8xf32>
    %10 = vector.extract_strided_slice %9 {offsets = [0, 0, 0], sizes = [4, 8, 8], strides = [1, 1, 1]} : vector<12x8x8xf32> to vector<4x8x8xf32>
    %11 = vector.extract_strided_slice %9 {offsets = [4, 0, 0], sizes = [4, 8, 8], strides = [1, 1, 1]} : vector<12x8x8xf32> to vector<4x8x8xf32>
    %12 = vector.extract_strided_slice %9 {offsets = [8, 0, 0], sizes = [4, 8, 8], strides = [1, 1, 1]} : vector<12x8x8xf32> to vector<4x8x8xf32>
    %13 = arith.truncf %10 : vector<4x8x8xf32> to vector<4x8x8xbf16>
    %14 = arith.truncf %11 : vector<4x8x8xf32> to vector<4x8x8xbf16>
    "tpu.trace_start"() <{level = 10 : i32, message = "hqc,hkc->hqk"}> : () -> ()
    %cst_8 = arith.constant dense<0.000000e+00> : vector<4x8x8xf32>
    %15 = tpu.matmul %13, %14, %cst_8 {dimension_numbers = #tpu.dot_dimension_numbers<[2], [2], [1], [1], [0, 0, 0, 1, 1, 1], [0], [0]>} : vector<4x8x8xbf16>, vector<4x8x8xbf16>, vector<4x8x8xf32> -> vector<4x8x8xf32>
    "tpu.trace_stop"() : () -> ()
    %cst_9 = arith.constant dense<0xFF800000> : vector<4x8xf32>
    %16 = vector.multi_reduction <maximumf>, %15, %cst_9 [2] : vector<4x8x8xf32> to vector<4x8xf32>
    %17 = vector.shape_cast %16 : vector<4x8xf32> to vector<4x8x1xf32>
    %18 = vector.broadcast %17 : vector<4x8x1xf32> to vector<4x8x8xf32>
    %19 = arith.subf %15, %18 : vector<4x8x8xf32>
    %20 = math.exp %19 : vector<4x8x8xf32>
    %cst_10 = arith.constant dense<0.000000e+00> : vector<4x8xf32>
    %21 = vector.multi_reduction <add>, %20, %cst_10 [2] : vector<4x8x8xf32> to vector<4x8xf32>
    %22 = vector.shape_cast %21 : vector<4x8xf32> to vector<4x8x1xf32>
    %23 = tpu.reciprocal %22 {approx = true} : vector<4x8x1xf32> -> vector<4x8x1xf32>
    %24 = vector.broadcast %23 : vector<4x8x1xf32> to vector<4x8x8xf32>
    %25 = arith.mulf %20, %24 : vector<4x8x8xf32>
    %26 = arith.truncf %25 : vector<4x8x8xf32> to vector<4x8x8xbf16>
    %27 = arith.truncf %12 : vector<4x8x8xf32> to vector<4x8x8xbf16>
    "tpu.trace_start"() <{level = 10 : i32, message = "hqk,hkv->hqv"}> : () -> ()
    %cst_11 = arith.constant dense<0.000000e+00> : vector<4x8x8xf32>
    %28 = tpu.matmul %26, %27, %cst_11 {dimension_numbers = #tpu.dot_dimension_numbers<[2], [1], [1], [2], [0, 0, 0, 1, 1, 2], [0], [0]>} : vector<4x8x8xbf16>, vector<4x8x8xbf16>, vector<4x8x8xf32> -> vector<4x8x8xf32>
    "tpu.trace_stop"() : () -> ()
    %29 = arith.truncf %28 : vector<4x8x8xf32> to vector<4x8x8xbf16>
    %c0_12 = arith.constant 0 : index
    %c0_13 = arith.constant 0 : index
    %c0_14 = arith.constant 0 : index
    %30 = vector.load %arg4[%c0_12, %c0_13, %c0_14] : memref<4x8x32xbf16, #tpu.memory_space<vmem>>, vector<4x8x32xbf16>
    "tpu.trace_start"() <{level = 10 : i32, message = "hsv,hvd->hsd"}> : () -> ()
    %cst_15 = arith.constant dense<0.000000e+00> : vector<4x8x32xf32>
    %31 = tpu.matmul %29, %30, %cst_15 {dimension_numbers = #tpu.dot_dimension_numbers<[2], [1], [1], [2], [0, 0, 0, 1, 1, 2], [0], [0]>} : vector<4x8x8xbf16>, vector<4x8x32xbf16>, vector<4x8x32xf32> -> vector<4x8x32xf32>
    "tpu.trace_stop"() : () -> ()
    %cst_16 = arith.constant dense<0.000000e+00> : vector<8x32xf32>
    %32 = vector.multi_reduction <add>, %31, %cst_16 [0] : vector<4x8x32xf32> to vector<8x32xf32>
    %c0_17 = arith.constant 0 : index
    %c0_18 = arith.constant 0 : index
    %33 = vector.load %arg5[%c0_17, %c0_18] : memref<1x32xf32, #tpu.memory_space<vmem>>, vector<1x32xf32>
    %34 = vector.broadcast %33 : vector<1x32xf32> to vector<8x32xf32>
    %35 = arith.addf %32, %34 : vector<8x32xf32>
    %36 = arith.addf %35, %1 : vector<8x32xf32>
    %c0_19 = arith.constant 0 : index
    %c0_20 = arith.constant 0 : index
    %37 = vector.load %arg6[%c0_19, %c0_20] : memref<1x32xf32, #tpu.memory_space<vmem>>, vector<1x32xf32>
    %c0_21 = arith.constant 0 : index
    %c0_22 = arith.constant 0 : index
    %38 = vector.load %arg7[%c0_21, %c0_22] : memref<1x32xf32, #tpu.memory_space<vmem>>, vector<1x32xf32>
    %cst_23 = arith.constant dense<0.000000e+00> : vector<8xf32>
    %39 = vector.multi_reduction <add>, %36, %cst_23 [1] : vector<8x32xf32> to vector<8xf32>
    %40 = vector.shape_cast %39 : vector<8xf32> to vector<8x1xf32>
    %cst_24 = arith.constant 3.200000e+01 : f32
    %41 = vector.broadcast %cst_24 : f32 to vector<8x1xf32>
    %42 = arith.divf %40, %41 : vector<8x1xf32>
    %43 = vector.broadcast %42 : vector<8x1xf32> to vector<8x32xf32>
    %44 = arith.subf %36, %43 : vector<8x32xf32>
    %45 = arith.mulf %44, %44 : vector<8x32xf32>
    %cst_25 = arith.constant dense<0.000000e+00> : vector<8xf32>
    %46 = vector.multi_reduction <add>, %45, %cst_25 [1] : vector<8x32xf32> to vector<8xf32>
    %47 = vector.shape_cast %46 : vector<8xf32> to vector<8x1xf32>
    %cst_26 = arith.constant 3.200000e+01 : f32
    %48 = vector.broadcast %cst_26 : f32 to vector<8x1xf32>
    %49 = arith.divf %47, %48 : vector<8x1xf32>
    %50 = vector.broadcast %42 : vector<8x1xf32> to vector<8x32xf32>
    %51 = arith.subf %36, %50 : vector<8x32xf32>
    %cst_27 = arith.constant 9.99999974E-6 : f32
    %52 = vector.broadcast %cst_27 : f32 to vector<8x1xf32>
    %53 = arith.addf %49, %52 : vector<8x1xf32>
    %54 = math.rsqrt %53 : vector<8x1xf32>
    %55 = vector.broadcast %54 : vector<8x1xf32> to vector<8x32xf32>
    %56 = arith.mulf %51, %55 : vector<8x32xf32>
    %57 = vector.broadcast %37 : vector<1x32xf32> to vector<8x32xf32>
    %58 = arith.mulf %56, %57 : vector<8x32xf32>
    %59 = vector.broadcast %38 : vector<1x32xf32> to vector<8x32xf32>
    %60 = arith.addf %58, %59 : vector<8x32xf32>
    %61 = arith.truncf %60 : vector<8x32xf32> to vector<8x32xbf16>
    %c0_28 = arith.constant 0 : index
    %c0_29 = arith.constant 0 : index
    %62 = vector.load %arg8[%c0_28, %c0_29] : memref<32x64xbf16, #tpu.memory_space<vmem>>, vector<32x64xbf16>
    %cst_30 = arith.constant dense<0.000000e+00> : vector<8x64xf32>
    %63 = tpu.matmul %61, %62, %cst_30 {dimension_numbers = #tpu.dot_dimension_numbers<[1], [0], [0], [1], [0, 0, 1, 1], [], []>} : vector<8x32xbf16>, vector<32x64xbf16>, vector<8x64xf32> -> vector<8x64xf32>
    %c0_31 = arith.constant 0 : index
    %c0_32 = arith.constant 0 : index
    %64 = vector.load %arg9[%c0_31, %c0_32] : memref<1x64xf32, #tpu.memory_space<vmem>>, vector<1x64xf32>
    %65 = vector.broadcast %64 : vector<1x64xf32> to vector<8x64xf32>
    %66 = arith.addf %63, %65 : vector<8x64xf32>
    %cst_33 = arith.constant 0.000000e+00 : f32
    %67 = vector.broadcast %cst_33 : f32 to vector<8x64xf32>
    %68 = arith.maximumf %66, %67 : vector<8x64xf32>
    %69 = arith.truncf %68 : vector<8x64xf32> to vector<8x64xbf16>
    %c0_34 = arith.constant 0 : index
    %c0_35 = arith.constant 0 : index
    %70 = vector.load %arg10[%c0_34, %c0_35] : memref<64x32xbf16, #tpu.memory_space<vmem>>, vector<64x32xbf16>
    %cst_36 = arith.constant dense<0.000000e+00> : vector<8x32xf32>
    %71 = tpu.matmul %69, %70, %cst_36 {dimension_numbers = #tpu.dot_dimension_numbers<[1], [0], [0], [1], [0, 0, 1, 1], [], []>} : vector<8x64xbf16>, vector<64x32xbf16>, vector<8x32xf32> -> vector<8x32xf32>
    %c0_37 = arith.constant 0 : index
    %c0_38 = arith.constant 0 : index
    %72 = vector.load %arg11[%c0_37, %c0_38] : memref<1x32xf32, #tpu.memory_space<vmem>>, vector<1x32xf32>
    %73 = vector.broadcast %72 : vector<1x32xf32> to vector<8x32xf32>
    %74 = arith.addf %71, %73 : vector<8x32xf32>
    %75 = arith.addf %74, %60 : vector<8x32xf32>
    %c0_39 = arith.constant 0 : index
    %c0_40 = arith.constant 0 : index
    %76 = vector.load %arg12[%c0_39, %c0_40] : memref<1x32xf32, #tpu.memory_space<vmem>>, vector<1x32xf32>
    %c0_41 = arith.constant 0 : index
    %c0_42 = arith.constant 0 : index
    %77 = vector.load %arg13[%c0_41, %c0_42] : memref<1x32xf32, #tpu.memory_space<vmem>>, vector<1x32xf32>
    %cst_43 = arith.constant dense<0.000000e+00> : vector<8xf32>
    %78 = vector.multi_reduction <add>, %75, %cst_43 [1] : vector<8x32xf32> to vector<8xf32>
    %79 = vector.shape_cast %78 : vector<8xf32> to vector<8x1xf32>
    %cst_44 = arith.constant 3.200000e+01 : f32
    %80 = vector.broadcast %cst_44 : f32 to vector<8x1xf32>
    %81 = arith.divf %79, %80 : vector<8x1xf32>
    %82 = vector.broadcast %81 : vector<8x1xf32> to vector<8x32xf32>
    %83 = arith.subf %75, %82 : vector<8x32xf32>
    %84 = arith.mulf %83, %83 : vector<8x32xf32>
    %cst_45 = arith.constant dense<0.000000e+00> : vector<8xf32>
    %85 = vector.multi_reduction <add>, %84, %cst_45 [1] : vector<8x32xf32> to vector<8xf32>
    %86 = vector.shape_cast %85 : vector<8xf32> to vector<8x1xf32>
    %cst_46 = arith.constant 3.200000e+01 : f32
    %87 = vector.broadcast %cst_46 : f32 to vector<8x1xf32>
    %88 = arith.divf %86, %87 : vector<8x1xf32>
    %89 = vector.broadcast %81 : vector<8x1xf32> to vector<8x32xf32>
    %90 = arith.subf %75, %89 : vector<8x32xf32>
    %cst_47 = arith.constant 9.99999974E-6 : f32
    %91 = vector.broadcast %cst_47 : f32 to vector<8x1xf32>
    %92 = arith.addf %88, %91 : vector<8x1xf32>
    %93 = math.rsqrt %92 : vector<8x1xf32>
    %94 = vector.broadcast %93 : vector<8x1xf32> to vector<8x32xf32>
    %95 = arith.mulf %90, %94 : vector<8x32xf32>
    %96 = vector.broadcast %76 : vector<1x32xf32> to vector<8x32xf32>
    %97 = arith.mulf %95, %96 : vector<8x32xf32>
    %98 = vector.broadcast %77 : vector<1x32xf32> to vector<8x32xf32>
    %99 = arith.addf %97, %98 : vector<8x32xf32>
    %c0_48 = arith.constant 0 : index
    %c0_49 = arith.constant 0 : index
    %c0_50 = arith.constant 0 : index
    %100 = vector.load %arg14[%c0_48, %c0_49, %c0_50] : memref<1x8x32xf32, #tpu.memory_space<vmem>>, vector<1x8x32xf32>
    %101 = vector.shape_cast %100 : vector<1x8x32xf32> to vector<8x32xf32>
    %102 = vector.shape_cast %99 : vector<8x32xf32> to vector<1x8x32xf32>
    tpu.vector_store %arg14[%c0_48, %c0_49, %c0_50], %102 {strides = array<i32>} : memref<1x8x32xf32, #tpu.memory_space<vmem>>, vector<1x8x32xf32>,
    return
  }
  func.func @transform_0(%arg0: i32) -> (i32, i32, i32) {
    %c0_i32 = arith.constant 0 : i32
    %c0_i32_0 = arith.constant 0 : i32
    %c0_i32_1 = arith.constant 0 : i32
    return %arg0, %c0_i32, %c0_i32_0 : i32, i32, i32
  }
  func.func @transform_1(%arg0: i32) -> (i32, i32, i32) {
    %c0_i32 = arith.constant 0 : i32
    %c0_i32_0 = arith.constant 0 : i32
    %c0_i32_1 = arith.constant 0 : i32
    %c0_i32_2 = arith.constant 0 : i32
    return %c0_i32, %c0_i32_0, %c0_i32_1 : i32, i32, i32
  }
  func.func @transform_2(%arg0: i32) -> (i32, i32, i32) {
    %c0_i32 = arith.constant 0 : i32
    %c0_i32_0 = arith.constant 0 : i32
    %c0_i32_1 = arith.constant 0 : i32
    %c0_i32_2 = arith.constant 0 : i32
    return %c0_i32, %c0_i32_0, %c0_i32_1 : i32, i32, i32
  }
  func.func @transform_3(%arg0: i32) -> (i32, i32, i32) {
    %c0_i32 = arith.constant 0 : i32
    %c0_i32_0 = arith.constant 0 : i32
    %c0_i32_1 = arith.constant 0 : i32
    %c0_i32_2 = arith.constant 0 : i32
    return %c0_i32, %c0_i32_0, %c0_i32_1 : i32, i32, i32
  }
  func.func @transform_4(%arg0: i32) -> (i32, i32) {
    %c0_i32 = arith.constant 0 : i32
    %c0_i32_0 = arith.constant 0 : i32
    %c0_i32_1 = arith.constant 0 : i32
    return %c0_i32, %c0_i32_0 : i32, i32
  }
  func.func @transform_5(%arg0: i32) -> (i32, i32) {
    %c0_i32 = arith.constant 0 : i32
    %c0_i32_0 = arith.constant 0 : i32
    %c0_i32_1 = arith.constant 0 : i32
    return %c0_i32, %c0_i32_0 : i32, i32
  }
  func.func @transform_6(%arg0: i32) -> (i32, i32) {
    %c0_i32 = arith.constant 0 : i32
    %c0_i32_0 = arith.constant 0 : i32
    %c0_i32_1 = arith.constant 0 : i32
    return %c0_i32, %c0_i32_0 : i32, i32
  }
  func.func @transform_7(%arg0: i32) -> (i32, i32) {
    %c0_i32 = arith.constant 0 : i32
    %c0_i32_0 = arith.constant 0 : i32
    %c0_i32_1 = arith.constant 0 : i32
    return %c0_i32, %c0_i32_0 : i32, i32
  }
  func.func @transform_8(%arg0: i32) -> (i32, i32) {
    %c0_i32 = arith.constant 0 : i32
    %c0_i32_0 = arith.constant 0 : i32
    %c0_i32_1 = arith.constant 0 : i32
    return %c0_i32, %c0_i32_0 : i32, i32
  }
  func.func @transform_9(%arg0: i32) -> (i32, i32) {
    %c0_i32 = arith.constant 0 : i32
    %c0_i32_0 = arith.constant 0 : i32
    %c0_i32_1 = arith.constant 0 : i32
    return %c0_i32, %c0_i32_0 : i32, i32
  }
  func.func @transform_10(%arg0: i32) -> (i32, i32) {
    %c0_i32 = arith.constant 0 : i32
    %c0_i32_0 = arith.constant 0 : i32
    %c0_i32_1 = arith.constant 0 : i32
    return %c0_i32, %c0_i32_0 : i32, i32
  }
  func.func @transform_11(%arg0: i32) -> (i32, i32) {
    %c0_i32 = arith.constant 0 : i32
    %c0_i32_0 = arith.constant 0 : i32
    %c0_i32_1 = arith.constant 0 : i32
    return %c0_i32, %c0_i32_0 : i32, i32
  }
  func.func @transform_12(%arg0: i32) -> (i32, i32) {
    %c0_i32 = arith.constant 0 : i32
    %c0_i32_0 = arith.constant 0 : i32
    %c0_i32_1 = arith.constant 0 : i32
    return %c0_i32, %c0_i32_0 : i32, i32
  }
  func.func @transform_13(%arg0: i32) -> (i32, i32, i32) {
    %c0_i32 = arith.constant 0 : i32
    %c0_i32_0 = arith.constant 0 : i32
    %c0_i32_1 = arith.constant 0 : i32
    return %arg0, %c0_i32, %c0_i32_0 : i32, i32, i32
  }
}

</mosaic_0001>

<llo_original>
// kernel: transformer_forward.3
$region0: #{transformer_forward.3}
  #allocation0 [shape = 'u32[]', space=smem, size = 0x4, offset = 0x4, fixed_abs, tag = 'smem constant byte address 0x4 - core index']
  #allocation1 [shape = 'u32[72,128]{1,0:T(1,128)}', space=vmem, size = 0x9000, scoped, tag = 'internal scratch']
  %s0 = inlined_call_operand.vmem [shape: f32[2,8,32], index: 0, kind: input, shape index: {}]
  %s1 = inlined_call_operand.vmem [shape: bf16[12,32,8], index: 1, kind: input, shape index: {}]
  %s2 = inlined_call_operand.vmem [shape: f32[12,1,8], index: 2, kind: input, shape index: {}]
  %s3 = inlined_call_operand.vmem [shape: bf16[4,8,32], index: 3, kind: input, shape index: {}]
  %s4 = inlined_call_operand.vmem [shape: f32[1,32], index: 4, kind: input, shape index: {}]
  %s5 = inlined_call_operand.vmem [shape: f32[1,32], index: 5, kind: input, shape index: {}]
  %s6 = inlined_call_operand.vmem [shape: f32[1,32], index: 6, kind: input, shape index: {}]
  %s7 = inlined_call_operand.vmem [shape: bf16[32,64], index: 7, kind: input, shape index: {}]
  %s8 = inlined_call_operand.vmem [shape: f32[1,64], index: 8, kind: input, shape index: {}]
  %s9 = inlined_call_operand.vmem [shape: bf16[64,32], index: 9, kind: input, shape index: {}]
  %s10 = inlined_call_operand.vmem [shape: f32[1,32], index: 10, kind: input, shape index: {}]
  %s11 = inlined_call_operand.vmem [shape: f32[1,32], index: 11, kind: input, shape index: {}]
  %s12 = inlined_call_operand.vmem [shape: f32[1,32], index: 12, kind: input, shape index: {}]
  %s13 = inlined_call_operand.hbm [shape: f32[2,8,32], index: 13, kind: output, shape index: {}]
  %s14 = sld [smem:[#allocation0]]
  $region85: #{transformer_forward.3} parent=0
    _
  %s16 = ssub.s32 1, %s14
  %s17 = scalar_select 0, %s16, %s14
  $region1: #{transformer_forward.3} parent=0
    #allocation2 [shape = 'u8[8192]{0}', space=vmem, size = 0x2000, scoped, tag = 'output window, operand 0']
    #allocation3 [shape = 's32[2]{0}', space=sflag, size = 0x8, scoped, tag = 'scoped memory for transformer_forward.3']
    %18 = vsyncpa [#allocation3], 0
    %s19 = scalar_lea.sflag [#allocation3], 1
    %20 = vsyncpa %s19, 0
    loop: start=0, step=1, limit=4
    $region2: #{transformer_forward.3} parent=1 // loop_pre_header
      _
    $region3: #{transformer_forward.3} parent=1 // loop_header
      %s22 = sphi 0, %s26
      %p23 = scmp.ge.s32.totalorder %s22, 4
      %s32 = sphi 0, %s34
      %s35 = sphi 0, %s32
      %s36 = sphi 0, %s35
      %s52 = sphi 0, %s36
      %s56 = sphi 0, %s56
      %s58 = sphi 0, %s56
      %s59 = sphi 0, %s58
      %s73 = sphi 0, %s59
      %s77 = sphi 0, %s77
      %s79 = sphi 0, %s77
      %s80 = sphi 0, %s79
      %s94 = sphi 0, %s80
      %s98 = sphi 0, %s98
      %s100 = sphi 0, %s98
      %s101 = sphi 0, %s100
      %s115 = sphi 0, %s101
      %s119 = sphi 0, %s119
      %s121 = sphi 0, %s119
      %s122 = sphi 0, %s121
      %s136 = sphi 0, %s122
      %s140 = sphi 0, %s140
      %s142 = sphi 0, %s140
      %s143 = sphi 0, %s142
      %s157 = sphi 0, %s143
      %s161 = sphi 0, %s161
      %s163 = sphi 0, %s161
      %s164 = sphi 0, %s163
      %s178 = sphi 0, %s164
      %s182 = sphi 0, %s182
      %s184 = sphi 0, %s182
      %s185 = sphi 0, %s184
      %s199 = sphi 0, %s185
      %s203 = sphi 0, %s203
      %s205 = sphi 0, %s203
      %s206 = sphi 0, %s205
      %s220 = sphi 0, %s206
      %s224 = sphi 0, %s224
      %s226 = sphi 0, %s224
      %s227 = sphi 0, %s226
      %s241 = sphi 0, %s227
      %s245 = sphi 0, %s245
      %s247 = sphi 0, %s245
      %s248 = sphi 0, %s247
      %s262 = sphi 0, %s248
      %s266 = sphi 0, %s266
      %s268 = sphi 0, %s266
      %s269 = sphi 0, %s268
      %s283 = sphi 0, %s269
      %s287 = sphi 0, %s287
      %s289 = sphi 0, %s287
      %s290 = sphi 0, %s289
      %s304 = sphi 0, %s290
      %s310 = sphi 0, %s312
      %s313 = sphi 0, %s310
      %s314 = sphi 0, %s313
      %s330 = sphi 0, %s314
    $region4: #{transformer_forward.3} parent=1 // loop_header_branch
      %25 = sbr.rel (%p23) target = $region8
    $region5: #{transformer_forward.3} parent=1 // loop_body
      %s27 = ssub.s32 %s22, 1
      %s28 = ssub.s32 %s22, 2
      %s29 = sadd.s32 %s22, 1
      %s30 = ssub.s32 %s22, %s29
      %p31 = scmp.eq.s32.totalorder %s30, 0
      %s33 = sadd.s32 %s32, 1
      %s34 = scalar_select %p31, %s32, %s33
      %p37 = pneg %p31
      %p38 = scmp.eq.s32.totalorder %s22, 1
      %p39 = por %p37, %p38
      %p40 = scmp.ne.s32.totalorder %s32, %s35
      %p41 = scmp.eq.s32.totalorder %s22, 0
      %p42 = por %p40, %p41
      %p43 = scmp.ne.s32.totalorder %s32, %s35
      %p44 = scmp.eq.s32.totalorder %s27, 1
      %p45 = por %p43, %p44
      %p46 = scmp.ne.s32.totalorder %s35, %s36
      %p47 = scmp.eq.s32.totalorder %s27, 0
      %p48 = por %p46, %p47
      %p49 = scmp.ne.s32.totalorder %s35, %s36
      %p50 = scmp.eq.s32.totalorder %s28, 1
      %p51 = por %p49, %p50
      %p53 = scmp.ne.s32.totalorder %s36, %s52
      %p54 = scmp.eq.s32.totalorder %s28, 0
      %p55 = por %p53, %p54
      %s57 = sadd.s32 %s56, 1
      %p60 = scmp.eq.s32.totalorder %s22, 1
      %p61 = scmp.ne.s32.totalorder %s56, %s58
      %p62 = scmp.eq.s32.totalorder %s22, 0
      %p63 = por %p61, %p62
      %p64 = scmp.ne.s32.totalorder %s56, %s58
      %p65 = scmp.eq.s32.totalorder %s27, 1
      %p66 = por %p64, %p65
      %p67 = scmp.ne.s32.totalorder %s58, %s59
      %p68 = scmp.eq.s32.totalorder %s27, 0
      %p69 = por %p67, %p68
      %p70 = scmp.ne.s32.totalorder %s58, %s59
      %p71 = scmp.eq.s32.totalorder %s28, 1
      %p72 = por %p70, %p71
      %p74 = scmp.ne.s32.totalorder %s59, %s73
      %p75 = scmp.eq.s32.totalorder %s28, 0
      %p76 = por %p74, %p75
      %s78 = sadd.s32 %s77, 1
      %p81 = scmp.eq.s32.totalorder %s22, 1
      %p82 = scmp.ne.s32.totalorder %s77, %s79
      %p83 = scmp.eq.s32.totalorder %s22, 0
      %p84 = por %p82, %p83
      %p85 = scmp.ne.s32.totalorder %s77, %s79
      %p86 = scmp.eq.s32.totalorder %s27, 1
      %p87 = por %p85, %p86
      %p88 = scmp.ne.s32.totalorder %s79, %s80
      %p89 = scmp.eq.s32.totalorder %s27, 0
      %p90 = por %p88, %p89
      %p91 = scmp.ne.s32.totalorder %s79, %s80
      %p92 = scmp.eq.s32.totalorder %s28, 1
      %p93 = por %p91, %p92
      %p95 = scmp.ne.s32.totalorder %s80, %s94
      %p96 = scmp.eq.s32.totalorder %s28, 0
      %p97 = por %p95, %p96
      %s99 = sadd.s32 %s98, 1
      %p102 = scmp.eq.s32.totalorder %s22, 1
      %p103 = scmp.ne.s32.totalorder %s98, %s100
      %p104 = scmp.eq.s32.totalorder %s22, 0
      %p105 = por %p103, %p104
      %p106 = scmp.ne.s32.totalorder %s98, %s100
      %p107 = scmp.eq.s32.totalorder %s27, 1
      %p108 = por %p106, %p107
      %p109 = scmp.ne.s32.totalorder %s100, %s101
      %p110 = scmp.eq.s32.totalorder %s27, 0
      %p111 = por %p109, %p110
      %p112 = scmp.ne.s32.totalorder %s100, %s101
      %p113 = scmp.eq.s32.totalorder %s28, 1
      %p114 = por %p112, %p113
      %p116 = scmp.ne.s32.totalorder %s101, %s115
      %p117 = scmp.eq.s32.totalorder %s28, 0
      %p118 = por %p116, %p117
      %s120 = sadd.s32 %s119, 1
      %p123 = scmp.eq.s32.totalorder %s22, 1
      %p124 = scmp.ne.s32.totalorder %s119, %s121
      %p125 = scmp.eq.s32.totalorder %s22, 0
      %p126 = por %p124, %p125
      %p127 = scmp.ne.s32.totalorder %s119, %s121
      %p128 = scmp.eq.s32.totalorder %s27, 1
      %p129 = por %p127, %p128
      %p130 = scmp.ne.s32.totalorder %s121, %s122
      %p131 = scmp.eq.s32.totalorder %s27, 0
      %p132 = por %p130, %p131
      %p133 = scmp.ne.s32.totalorder %s121, %s122
      %p134 = scmp.eq.s32.totalorder %s28, 1
      %p135 = por %p133, %p134
      %p137 = scmp.ne.s32.totalorder %s122, %s136
      %p138 = scmp.eq.s32.totalorder %s28, 0
      %p139 = por %p137, %p138
      %s141 = sadd.s32 %s140, 1
      %p144 = scmp.eq.s32.totalorder %s22, 1
      %p145 = scmp.ne.s32.totalorder %s140, %s142
      %p146 = scmp.eq.s32.totalorder %s22, 0
      %p147 = por %p145, %p146
      %p148 = scmp.ne.s32.totalorder %s140, %s142
      %p149 = scmp.eq.s32.totalorder %s27, 1
      %p150 = por %p148, %p149
      %p151 = scmp.ne.s32.totalorder %s142, %s143
      %p152 = scmp.eq.s32.totalorder %s27, 0
      %p153 = por %p151, %p152
      %p154 = scmp.ne.s32.totalorder %s142, %s143
      %p155 = scmp.eq.s32.totalorder %s28, 1
      %p156 = por %p154, %p155
      %p158 = scmp.ne.s32.totalorder %s143, %s157
      %p159 = scmp.eq.s32.totalorder %s28, 0
      %p160 = por %p158, %p159
      %s162 = sadd.s32 %s161, 1
      %p165 = scmp.eq.s32.totalorder %s22, 1
      %p166 = scmp.ne.s32.totalorder %s161, %s163
      %p167 = scmp.eq.s32.totalorder %s22, 0
      %p168 = por %p166, %p167
      %p169 = scmp.ne.s32.totalorder %s161, %s163
      %p170 = scmp.eq.s32.totalorder %s27, 1
      %p171 = por %p169, %p170
      %p172 = scmp.ne.s32.totalorder %s163, %s164
      %p173 = scmp.eq.s32.totalorder %s27, 0
      %p174 = por %p172, %p173
      %p175 = scmp.ne.s32.totalorder %s163, %s164
      %p176 = scmp.eq.s32.totalorder %s28, 1
      %p177 = por %p175, %p176
      %p179 = scmp.ne.s32.totalorder %s164, %s178
      %p180 = scmp.eq.s32.totalorder %s28, 0
      %p181 = por %p179, %p180
      %s183 = sadd.s32 %s182, 1
      %p186 = scmp.eq.s32.totalorder %s22, 1
      %p187 = scmp.ne.s32.totalorder %s182, %s184
      %p188 = scmp.eq.s32.totalorder %s22, 0
      %p189 = por %p187, %p188
      %p190 = scmp.ne.s32.totalorder %s182, %s184
      %p191 = scmp.eq.s32.totalorder %s27, 1
      %p192 = por %p190, %p191
      %p193 = scmp.ne.s32.totalorder %s184, %s185
      %p194 = scmp.eq.s32.totalorder %s27, 0
      %p195 = por %p193, %p194
      %p196 = scmp.ne.s32.totalorder %s184, %s185
      %p197 = scmp.eq.s32.totalorder %s28, 1
      %p198 = por %p196, %p197
      %p200 = scmp.ne.s32.totalorder %s185, %s199
      %p201 = scmp.eq.s32.totalorder %s28, 0
      %p202 = por %p200, %p201
      %s204 = sadd.s32 %s203, 1
      %p207 = scmp.eq.s32.totalorder %s22, 1
      %p208 = scmp.ne.s32.totalorder %s203, %s205
      %p209 = scmp.eq.s32.totalorder %s22, 0
      %p210 = por %p208, %p209
      %p211 = scmp.ne.s32.totalorder %s203, %s205
      %p212 = scmp.eq.s32.totalorder %s27, 1
      %p213 = por %p211, %p212
      %p214 = scmp.ne.s32.totalorder %s205, %s206
      %p215 = scmp.eq.s32.totalorder %s27, 0
      %p216 = por %p214, %p215
      %p217 = scmp.ne.s32.totalorder %s205, %s206
      %p218 = scmp.eq.s32.totalorder %s28, 1
      %p219 = por %p217, %p218
      %p221 = scmp.ne.s32.totalorder %s206, %s220
      %p222 = scmp.eq.s32.totalorder %s28, 0
      %p223 = por %p221, %p222
      %s225 = sadd.s32 %s224, 1
      %p228 = scmp.eq.s32.totalorder %s22, 1
      %p229 = scmp.ne.s32.totalorder %s224, %s226
      %p230 = scmp.eq.s32.totalorder %s22, 0
      %p231 = por %p229, %p230
      %p232 = scmp.ne.s32.totalorder %s224, %s226
      %p233 = scmp.eq.s32.totalorder %s27, 1
      %p234 = por %p232, %p233
      %p235 = scmp.ne.s32.totalorder %s226, %s227
      %p236 = scmp.eq.s32.totalorder %s27, 0
      %p237 = por %p235, %p236
      %p238 = scmp.ne.s32.totalorder %s226, %s227
      %p239 = scmp.eq.s32.totalorder %s28, 1
      %p240 = por %p238, %p239
      %p242 = scmp.ne.s32.totalorder %s227, %s241
      %p243 = scmp.eq.s32.totalorder %s28, 0
      %p244 = por %p242, %p243
      %s246 = sadd.s32 %s245, 1
      %p249 = scmp.eq.s32.totalorder %s22, 1
      %p250 = scmp.ne.s32.totalorder %s245, %s247
      %p251 = scmp.eq.s32.totalorder %s22, 0
      %p252 = por %p250, %p251
      %p253 = scmp.ne.s32.totalorder %s245, %s247
      %p254 = scmp.eq.s32.totalorder %s27, 1
      %p255 = por %p253, %p254
      %p256 = scmp.ne.s32.totalorder %s247, %s248
      %p257 = scmp.eq.s32.totalorder %s27, 0
      %p258 = por %p256, %p257
      %p259 = scmp.ne.s32.totalorder %s247, %s248
      %p260 = scmp.eq.s32.totalorder %s28, 1
      %p261 = por %p259, %p260
      %p263 = scmp.ne.s32.totalorder %s248, %s262
      %p264 = scmp.eq.s32.totalorder %s28, 0
      %p265 = por %p263, %p264
      %s267 = sadd.s32 %s266, 1
      %p270 = scmp.eq.s32.totalorder %s22, 1
      %p271 = scmp.ne.s32.totalorder %s266, %s268
      %p272 = scmp.eq.s32.totalorder %s22, 0
      %p273 = por %p271, %p272
      %p274 = scmp.ne.s32.totalorder %s266, %s268
      %p275 = scmp.eq.s32.totalorder %s27, 1
      %p276 = por %p274, %p275
      %p277 = scmp.ne.s32.totalorder %s268, %s269
      %p278 = scmp.eq.s32.totalorder %s27, 0
      %p279 = por %p277, %p278
      %p280 = scmp.ne.s32.totalorder %s268, %s269
      %p281 = scmp.eq.s32.totalorder %s28, 1
      %p282 = por %p280, %p281
      %p284 = scmp.ne.s32.totalorder %s269, %s283
      %p285 = scmp.eq.s32.totalorder %s28, 0
      %p286 = por %p284, %p285
      %s288 = sadd.s32 %s287, 1
      %p291 = scmp.eq.s32.totalorder %s22, 1
      %p292 = scmp.ne.s32.totalorder %s287, %s289
      %p293 = scmp.eq.s32.totalorder %s22, 0
      %p294 = por %p292, %p293
      %p295 = scmp.ne.s32.totalorder %s287, %s289
      %p296 = scmp.eq.s32.totalorder %s27, 1
      %p297 = por %p295, %p296
      %p298 = scmp.ne.s32.totalorder %s289, %s290
      %p299 = scmp.eq.s32.totalorder %s27, 0
      %p300 = por %p298, %p299
      %p301 = scmp.ne.s32.totalorder %s289, %s290
      %p302 = scmp.eq.s32.totalorder %s28, 1
      %p303 = por %p301, %p302
      %p305 = scmp.ne.s32.totalorder %s290, %s304
      %p306 = scmp.eq.s32.totalorder %s28, 0
      %p307 = por %p305, %p306
      %s308 = ssub.s32 %s22, %s29
      %p309 = scmp.eq.s32.totalorder %s308, 0
      %s311 = sadd.s32 %s310, 1
      %s312 = scalar_select %p309, %s310, %s311
      %p315 = pneg %p309
      %p316 = scmp.eq.s32.totalorder %s22, 1
      %p317 = por %p315, %p316
      %p318 = scmp.ne.s32.totalorder %s310, %s313
      %p319 = scmp.eq.s32.totalorder %s22, 0
      %p320 = por %p318, %p319
      %p321 = scmp.ne.s32.totalorder %s310, %s313
      %p322 = scmp.eq.s32.totalorder %s27, 1
      %p323 = por %p321, %p322
      %p324 = scmp.ne.s32.totalorder %s313, %s314
      %p325 = scmp.eq.s32.totalorder %s27, 0
      %p326 = por %p324, %p325
      %p327 = scmp.ne.s32.totalorder %s313, %s314
      %p328 = scmp.eq.s32.totalorder %s28, 1
      %p329 = por %p327, %p328
      %p331 = scmp.ne.s32.totalorder %s314, %s330
      %p332 = scmp.eq.s32.totalorder %s28, 0
      %p333 = por %p331, %p332
      %p334 = scmp.le.s32.totalorder 1, %s22
      %p335 = scmp.lt.s32.totalorder %s22, 3
      %p336 = pnand %p334, %p335
      %p337 = pneg %p336
      // Predicated region
      $region9: #{transformer_forward.3} parent=5 // pred_check
        _
      $region10: #{transformer_forward.3} parent=5 // pred_check_branch
        %339 = sbr.rel (%p336) target = $region12
      $region11: #{transformer_forward.3} parent=5 // pred_region
        %s340 = ssub.s32 %s22, 1
        // Predicated region
        $region13: #{transformer_forward.3} parent=11 // pred_check
          %p341 = pneg %p69
        $region14: #{transformer_forward.3} parent=11 // pred_check_branch
          %343 = sbr.rel (%p341) target = $region16
        $region15: #{transformer_forward.3} parent=11 // pred_region
          _
        $region16: #{transformer_forward.3} parent=11 // pred_fallthru
          _
        // Predicated region
        $region17: #{transformer_forward.3} parent=11 // pred_check
          %p344 = pneg %p90
        $region18: #{transformer_forward.3} parent=11 // pred_check_branch
          %346 = sbr.rel (%p344) target = $region20
        $region19: #{transformer_forward.3} parent=11 // pred_region
          _
        $region20: #{transformer_forward.3} parent=11 // pred_fallthru
          _
        // Predicated region
        $region21: #{transformer_forward.3} parent=11 // pred_check
          %p347 = pneg %p111
        $region22: #{transformer_forward.3} parent=11 // pred_check_branch
          %349 = sbr.rel (%p347) target = $region24
        $region23: #{transformer_forward.3} parent=11 // pred_region
          _
        $region24: #{transformer_forward.3} parent=11 // pred_fallthru
          _
        // Predicated region
        $region25: #{transformer_forward.3} parent=11 // pred_check
          %p350 = pneg %p132
        $region26: #{transformer_forward.3} parent=11 // pred_check_branch
          %352 = sbr.rel (%p350) target = $region28
        $region27: #{transformer_forward.3} parent=11 // pred_region
          _
        $region28: #{transformer_forward.3} parent=11 // pred_fallthru
          _
        // Predicated region
        $region29: #{transformer_forward.3} parent=11 // pred_check
          %p353 = pneg %p153
        $region30: #{transformer_forward.3} parent=11 // pred_check_branch
          %355 = sbr.rel (%p353) target = $region32
        $region31: #{transformer_forward.3} parent=11 // pred_region
          _
        $region32: #{transformer_forward.3} parent=11 // pred_fallthru
          _
        // Predicated region
        $region33: #{transformer_forward.3} parent=11 // pred_check
          %p356 = pneg %p174
        $region34: #{transformer_forward.3} parent=11 // pred_check_branch
          %358 = sbr.rel (%p356) target = $region36
        $region35: #{transformer_forward.3} parent=11 // pred_region
          _
        $region36: #{transformer_forward.3} parent=11 // pred_fallthru
          _
        // Predicated region
        $region37: #{transformer_forward.3} parent=11 // pred_check
          %p359 = pneg %p195
        $region38: #{transformer_forward.3} parent=11 // pred_check_branch
          %361 = sbr.rel (%p359) target = $region40
        $region39: #{transformer_forward.3} parent=11 // pred_region
          _
        $region40: #{transformer_forward.3} parent=11 // pred_fallthru
          _
        // Predicated region
        $region41: #{transformer_forward.3} parent=11 // pred_check
          %p362 = pneg %p216
        $region42: #{transformer_forward.3} parent=11 // pred_check_branch
          %364 = sbr.rel (%p362) target = $region44
        $region43: #{transformer_forward.3} parent=11 // pred_region
          _
        $region44: #{transformer_forward.3} parent=11 // pred_fallthru
          _
        // Predicated region
        $region45: #{transformer_forward.3} parent=11 // pred_check
          %p365 = pneg %p237
        $region46: #{transformer_forward.3} parent=11 // pred_check_branch
          %367 = sbr.rel (%p365) target = $region48
        $region47: #{transformer_forward.3} parent=11 // pred_region
          _
        $region48: #{transformer_forward.3} parent=11 // pred_fallthru
          _
        // Predicated region
        $region49: #{transformer_forward.3} parent=11 // pred_check
          %p368 = pneg %p258
        $region50: #{transformer_forward.3} parent=11 // pred_check_branch
          %370 = sbr.rel (%p368) target = $region52
        $region51: #{transformer_forward.3} parent=11 // pred_region
          _
        $region52: #{transformer_forward.3} parent=11 // pred_fallthru
          _
        // Predicated region
        $region53: #{transformer_forward.3} parent=11 // pred_check
          %p371 = pneg %p279
        $region54: #{transformer_forward.3} parent=11 // pred_check_branch
          %373 = sbr.rel (%p371) target = $region56
        $region55: #{transformer_forward.3} parent=11 // pred_region
          _
        $region56: #{transformer_forward.3} parent=11 // pred_fallthru
          _
        // Predicated region
        $region57: #{transformer_forward.3} parent=11 // pred_check
          %p374 = pneg %p300
        $region58: #{transformer_forward.3} parent=11 // pred_check_branch
          %376 = sbr.rel (%p374) target = $region60
        $region59: #{transformer_forward.3} parent=11 // pred_region
          _
        $region60: #{transformer_forward.3} parent=11 // pred_fallthru
          _
      $region12: #{transformer_forward.3} parent=5 // pred_fallthru
        _
      %p377 = scmp.lt.s32.totalorder %s22, 2
      // Predicated region
      $region61: #{transformer_forward.3} parent=5 // pred_check
        %p378 = pneg %p377
      $region62: #{transformer_forward.3} parent=5 // pred_check_branch
        %380 = sbr.rel (%p378) target = $region64
      $region63: #{transformer_forward.3} parent=5 // pred_region
        // Predicated region
        $region65: #{transformer_forward.3} parent=63 // pred_check
          %p381 = pneg %p42
        $region66: #{transformer_forward.3} parent=63 // pred_check_branch
          %383 = sbr.rel (%p381) target = $region68
        $region67: #{transformer_forward.3} parent=63 // pred_region
          %p384 = scmp.lt.s32.totalorder %s22, 1
          %s385 = scalar_select %p384, %s22, 1
          %s386 = smul.addr %s385, 8
          %s387 = scalar_lea.vmem %s0, %s386
        $region68: #{transformer_forward.3} parent=63 // pred_fallthru
          _
      $region64: #{transformer_forward.3} parent=5 // pred_fallthru
        _
      %p388 = scmp.le.s32.totalorder 1, %s22
      %p389 = scmp.lt.s32.totalorder %s22, 3
      %p390 = pnand %p388, %p389
      %p391 = pneg %p390
      // Predicated region
      $region69: #{transformer_forward.3} parent=5 // pred_check
        _
      $region70: #{transformer_forward.3} parent=5 // pred_check_branch
        %393 = sbr.rel (%p390) target = $region72
      $region71: #{transformer_forward.3} parent=5 // pred_region
        %s394 = ssub.s32 %s22, 1
        %p395 = scmp.lt.s32.totalorder %s27, 1
        %s396 = scalar_select %p395, %s27, 1
        %s397 = smul.addr %s396, 8
        %s398 = scalar_lea.vmem %s0, %s397
        %p399 = pneg %p48
        %p400 = pneg %p45
        %p401 = pneg %p69
        %p402 = pneg %p66
        %p403 = pneg %p90
        %p404 = pneg %p87
        %p405 = pneg %p111
        %p406 = pneg %p108
        %p407 = pneg %p132
        %p408 = pneg %p129
        %p409 = pneg %p153
        %p410 = pneg %p150
        %p411 = pneg %p174
        %p412 = pneg %p171
        %p413 = pneg %p195
        %p414 = pneg %p192
        %p415 = pneg %p216
        %p416 = pneg %p213
        %p417 = pneg %p237
        %p418 = pneg %p234
        %p419 = pneg %p258
        %p420 = pneg %p255
        %p421 = pneg %p279
        %p422 = pneg %p276
        %p423 = pneg %p300
        %p424 = pneg %p297
        %p425 = pneg %p326
        %p426 = pneg %p323
        %s427 = sand.u32 %s313, 1
        %s428 = scalar_lea.sflag [#allocation3], %s427
        %s429 = sand.u32 %s313, 1
        %s430 = smul.addr %s429, 8
        %s431 = scalar_lea.vmem [#allocation2], %s430
        %p432 = scmp.lt.s32.totalorder %s27, 1
        %s433 = scalar_select %p432, %s27, 1
        %s434 = smul.addr %s433, 8
        %s435 = scalar_lea.vmem %s0, %s434
        %v437 = vld [vmem:[%s435] sm:$0xff]
        %v438 = vpack.c.bf16 %v437, %v437
        %v439 = vld [vmem:[%s1] sm:$0xf]
        %v440 = vld [vmem:[%s1 + $0x4] sm:$0xf]
        %v441 = vld [vmem:[%s1 + $0x8] sm:$0xf]
        %v442 = vld [vmem:[%s1 + $0xc] sm:$0xf]
        %v443 = vld [vmem:[%s1 + $0x10] sm:$0xf]
        %v444 = vld [vmem:[%s1 + $0x14] sm:$0xf]
        %v445 = vld [vmem:[%s1 + $0x18] sm:$0xf]
        %v446 = vld [vmem:[%s1 + $0x1c] sm:$0xf]
        %v447 = vld [vmem:[%s1 + $0x20] sm:$0xf]
        %v448 = vld [vmem:[%s1 + $0x24] sm:$0xf]
        %v449 = vld [vmem:[%s1 + $0x28] sm:$0xf]
        %v450 = vld [vmem:[%s1 + $0x2c] sm:$0xf]
        %v451 = vld [vmem:[%s1 + $0x30] sm:$0xf]
        %v452 = vld [vmem:[%s1 + $0x34] sm:$0xf]
        %v453 = vld [vmem:[%s1 + $0x38] sm:$0xf]
        %v454 = vld [vmem:[%s1 + $0x3c] sm:$0xf]
        %v455 = vld [vmem:[%s1 + $0x40] sm:$0xf]
        %v456 = vld [vmem:[%s1 + $0x44] sm:$0xf]
        %v457 = vld [vmem:[%s1 + $0x48] sm:$0xf]
        %v458 = vld [vmem:[%s1 + $0x4c] sm:$0xf]
        %v459 = vld [vmem:[%s1 + $0x50] sm:$0xf]
        %v460 = vld [vmem:[%s1 + $0x54] sm:$0xf]
        %v461 = vld [vmem:[%s1 + $0x58] sm:$0xf]
        %v462 = vld [vmem:[%s1 + $0x5c] sm:$0xf]
        %v463 = vld [vmem:[%s1 + $0x60] sm:$0xf]
        %v464 = vld [vmem:[%s1 + $0x64] sm:$0xf]
        %v465 = vld [vmem:[%s1 + $0x68] sm:$0xf]
        %v466 = vld [vmem:[%s1 + $0x6c] sm:$0xf]
        %v467 = vld [vmem:[%s1 + $0x70] sm:$0xf]
        %v468 = vld [vmem:[%s1 + $0x74] sm:$0xf]
        %v469 = vld [vmem:[%s1 + $0x78] sm:$0xf]
        %v470 = vld [vmem:[%s1 + $0x7c] sm:$0xf]
        %v471 = vld [vmem:[%s1 + $0x80] sm:$0xf]
        %v472 = vld [vmem:[%s1 + $0x84] sm:$0xf]
        %v473 = vld [vmem:[%s1 + $0x88] sm:$0xf]
        %v474 = vld [vmem:[%s1 + $0x8c] sm:$0xf]
        %v475 = vld [vmem:[%s1 + $0x90] sm:$0xf]
        %v476 = vld [vmem:[%s1 + $0x94] sm:$0xf]
        %v477 = vld [vmem:[%s1 + $0x98] sm:$0xf]
        %v478 = vld [vmem:[%s1 + $0x9c] sm:$0xf]
        %v479 = vld [vmem:[%s1 + $0xa0] sm:$0xf]
        %v480 = vld [vmem:[%s1 + $0xa4] sm:$0xf]
        %v481 = vld [vmem:[%s1 + $0xa8] sm:$0xf]
        %v482 = vld [vmem:[%s1 + $0xac] sm:$0xf]
        %v483 = vld [vmem:[%s1 + $0xb0] sm:$0xf]
        %v484 = vld [vmem:[%s1 + $0xb4] sm:$0xf]
        %v485 = vld [vmem:[%s1 + $0xb8] sm:$0xf]
        %v486 = vld [vmem:[%s1 + $0xbc] sm:$0xf]
        %v487 = vld [vmem:[%s2] sm:$0x1]
        %v488 = vld [vmem:[%s2 + $0x1] sm:$0x1]
        %v489 = vld [vmem:[%s2 + $0x2] sm:$0x1]
        %v490 = vld [vmem:[%s2 + $0x3] sm:$0x1]
        %v491 = vld [vmem:[%s2 + $0x4] sm:$0x1]
        %v492 = vld [vmem:[%s2 + $0x5] sm:$0x1]
        %v493 = vld [vmem:[%s2 + $0x6] sm:$0x1]
        %v494 = vld [vmem:[%s2 + $0x7] sm:$0x1]
        %v495 = vld [vmem:[%s2 + $0x8] sm:$0x1]
        %v496 = vld [vmem:[%s2 + $0x9] sm:$0x1]
        %v497 = vld [vmem:[%s2 + $0xa] sm:$0x1]
        %v498 = vld [vmem:[%s2 + $0xb] sm:$0x1]
        %v511 = vperm.slane %v487, 0
        %v512 = vperm.slane %v488, 0
        %v513 = vperm.slane %v489, 0
        %v514 = vperm.slane %v490, 0
        %v515 = vperm.slane %v491, 0
        %v516 = vperm.slane %v492, 0
        %v517 = vperm.slane %v493, 0
        %v518 = vperm.slane %v494, 0
        %v519 = vperm.slane %v495, 0
        %v520 = vperm.slane %v496, 0
        %v521 = vperm.slane %v497, 0
        %v522 = vperm.slane %v498, 0
        %v539 = vunpack.c.l.b16 %v439
        %v540 = vunpack.c.l.b16 %v440
        %v541 = vunpack.c.l.b16 %v441
        %v542 = vunpack.c.l.b16 %v442
        %v543 = vpack.c.b16 %v540, %v539
        %v544 = vpack.c.b16 %v542, %v541
        %vm547 = vcmask 261120
        %v549 = vsel %vm547, %v438, 0
        %551 = vmatpush.bf16.msra.mxu0 0
        %552 = vmatpush.bf16.msra.mxu0 0
        %553 = vmatpush.bf16.msra.mxu0 0
        %554 = vmatpush.bf16.msra.mxu0 0
        %555 = vmatpush.bf16.msra.mxu0 0
        %556 = vmatpush.bf16.msra.mxu0 0
        %557 = vmatpush.bf16.msra.mxu0 %v544
        %558 = vmatpush.bf16.msra.mxu0 %v543
        %559 = vmatmul.bf16.gmra.mxu0 %v549
        %v560 = vpop.f32.mrf.mxu0
        %v561 = vadd.f32 %v511, %v560
        %v562 = vpop.f32.mrf.mxu0
        %563 = vdwg.mxu0
        %v568 = vunpack.c.l.b16 %v443
        %v569 = vunpack.c.l.b16 %v444
        %v570 = vunpack.c.l.b16 %v445
        %v571 = vunpack.c.l.b16 %v446
        %v572 = vpack.c.b16 %v569, %v568
        %v573 = vpack.c.b16 %v571, %v570
        %576 = vmatpush.bf16.msra.mxu0 0
        %577 = vmatpush.bf16.msra.mxu0 0
        %578 = vmatpush.bf16.msra.mxu0 0
        %579 = vmatpush.bf16.msra.mxu0 0
        %580 = vmatpush.bf16.msra.mxu0 0
        %581 = vmatpush.bf16.msra.mxu0 0
        %582 = vmatpush.bf16.msra.mxu0 %v573
        %583 = vmatpush.bf16.msra.mxu0 %v572
        %584 = vmatmul.bf16.gmra.mxu0 %v549
        %v585 = vpop.f32.mrf.mxu0
        %v586 = vadd.f32 %v512, %v585
        %v587 = vpop.f32.mrf.mxu0
        %588 = vdwg.mxu0
        %v593 = vunpack.c.l.b16 %v447
        %v594 = vunpack.c.l.b16 %v448
        %v595 = vunpack.c.l.b16 %v449
        %v596 = vunpack.c.l.b16 %v450
        %v597 = vpack.c.b16 %v594, %v593
        %v598 = vpack.c.b16 %v596, %v595
        %601 = vmatpush.bf16.msra.mxu0 0
        %602 = vmatpush.bf16.msra.mxu0 0
        %603 = vmatpush.bf16.msra.mxu0 0
        %604 = vmatpush.bf16.msra.mxu0 0
        %605 = vmatpush.bf16.msra.mxu0 0
        %606 = vmatpush.bf16.msra.mxu0 0
        %607 = vmatpush.bf16.msra.mxu0 %v598
        %608 = vmatpush.bf16.msra.mxu0 %v597
        %609 = vmatmul.bf16.gmra.mxu0 %v549
        %v610 = vpop.f32.mrf.mxu0
        %v611 = vadd.f32 %v513, %v610
        %v612 = vpop.f32.mrf.mxu0
        %613 = vdwg.mxu0
        %v618 = vunpack.c.l.b16 %v451
        %v619 = vunpack.c.l.b16 %v452
        %v620 = vunpack.c.l.b16 %v453
        %v621 = vunpack.c.l.b16 %v454
        %v622 = vpack.c.b16 %v619, %v618
        %v623 = vpack.c.b16 %v621, %v620
        %626 = vmatpush.bf16.msra.mxu0 0
        %627 = vmatpush.bf16.msra.mxu0 0
        %628 = vmatpush.bf16.msra.mxu0 0
        %629 = vmatpush.bf16.msra.mxu0 0
        %630 = vmatpush.bf16.msra.mxu0 0
        %631 = vmatpush.bf16.msra.mxu0 0
        %632 = vmatpush.bf16.msra.mxu0 %v623
        %633 = vmatpush.bf16.msra.mxu0 %v622
        %634 = vmatmul.bf16.gmra.mxu0 %v549
        %v635 = vpop.f32.mrf.mxu0
        %v636 = vadd.f32 %v514, %v635
        %v637 = vpop.f32.mrf.mxu0
        %638 = vdwg.mxu0
        %v643 = vunpack.c.l.b16 %v455
        %v644 = vunpack.c.l.b16 %v456
        %v645 = vunpack.c.l.b16 %v457
        %v646 = vunpack.c.l.b16 %v458
        %v647 = vpack.c.b16 %v644, %v643
        %v648 = vpack.c.b16 %v646, %v645
        %651 = vmatpush.bf16.msra.mxu0 0
        %652 = vmatpush.bf16.msra.mxu0 0
        %653 = vmatpush.bf16.msra.mxu0 0
        %654 = vmatpush.bf16.msra.mxu0 0
        %655 = vmatpush.bf16.msra.mxu0 0
        %656 = vmatpush.bf16.msra.mxu0 0
        %657 = vmatpush.bf16.msra.mxu0 %v648
        %658 = vmatpush.bf16.msra.mxu0 %v647
        %659 = vmatmul.bf16.gmra.mxu0 %v549
        %v660 = vpop.f32.mrf.mxu0
        %v661 = vadd.f32 %v515, %v660
        %v662 = vpop.f32.mrf.mxu0
        %663 = vdwg.mxu0
        %v668 = vunpack.c.l.b16 %v459
        %v669 = vunpack.c.l.b16 %v460
        %v670 = vunpack.c.l.b16 %v461
        %v671 = vunpack.c.l.b16 %v462
        %v672 = vpack.c.b16 %v669, %v668
        %v673 = vpack.c.b16 %v671, %v670
        %676 = vmatpush.bf16.msra.mxu0 0
        %677 = vmatpush.bf16.msra.mxu0 0
        %678 = vmatpush.bf16.msra.mxu0 0
        %679 = vmatpush.bf16.msra.mxu0 0
        %680 = vmatpush.bf16.msra.mxu0 0
        %681 = vmatpush.bf16.msra.mxu0 0
        %682 = vmatpush.bf16.msra.mxu0 %v673
        %683 = vmatpush.bf16.msra.mxu0 %v672
        %684 = vmatmul.bf16.gmra.mxu0 %v549
        %v685 = vpop.f32.mrf.mxu0
        %v686 = vadd.f32 %v516, %v685
        %v687 = vpop.f32.mrf.mxu0
        %688 = vdwg.mxu0
        %v693 = vunpack.c.l.b16 %v463
        %v694 = vunpack.c.l.b16 %v464
        %v695 = vunpack.c.l.b16 %v465
        %v696 = vunpack.c.l.b16 %v466
        %v697 = vpack.c.b16 %v694, %v693
        %v698 = vpack.c.b16 %v696, %v695
        %701 = vmatpush.bf16.msra.mxu0 0
        %702 = vmatpush.bf16.msra.mxu0 0
        %703 = vmatpush.bf16.msra.mxu0 0
        %704 = vmatpush.bf16.msra.mxu0 0
        %705 = vmatpush.bf16.msra.mxu0 0
        %706 = vmatpush.bf16.msra.mxu0 0
        %707 = vmatpush.bf16.msra.mxu0 %v698
        %708 = vmatpush.bf16.msra.mxu0 %v697
        %709 = vmatmul.bf16.gmra.mxu0 %v549
        %v710 = vpop.f32.mrf.mxu0
        %v711 = vadd.f32 %v517, %v710
        %v712 = vpop.f32.mrf.mxu0
        %713 = vdwg.mxu0
        %v718 = vunpack.c.l.b16 %v467
        %v719 = vunpack.c.l.b16 %v468
        %v720 = vunpack.c.l.b16 %v469
        %v721 = vunpack.c.l.b16 %v470
        %v722 = vpack.c.b16 %v719, %v718
        %v723 = vpack.c.b16 %v721, %v720
        %726 = vmatpush.bf16.msra.mxu0 0
        %727 = vmatpush.bf16.msra.mxu0 0
        %728 = vmatpush.bf16.msra.mxu0 0
        %729 = vmatpush.bf16.msra.mxu0 0
        %730 = vmatpush.bf16.msra.mxu0 0
        %731 = vmatpush.bf16.msra.mxu0 0
        %732 = vmatpush.bf16.msra.mxu0 %v723
        %733 = vmatpush.bf16.msra.mxu0 %v722
        %734 = vmatmul.bf16.gmra.mxu0 %v549
        %v735 = vpop.f32.mrf.mxu0
        %v736 = vadd.f32 %v518, %v735
        %v737 = vpop.f32.mrf.mxu0
        %738 = vdwg.mxu0
        %v743 = vunpack.c.l.b16 %v471
        %v744 = vunpack.c.l.b16 %v472
        %v745 = vunpack.c.l.b16 %v473
        %v746 = vunpack.c.l.b16 %v474
        %v747 = vpack.c.b16 %v744, %v743
        %v748 = vpack.c.b16 %v746, %v745
        %751 = vmatpush.bf16.msra.mxu0 0
        %752 = vmatpush.bf16.msra.mxu0 0
        %753 = vmatpush.bf16.msra.mxu0 0
        %754 = vmatpush.bf16.msra.mxu0 0
        %755 = vmatpush.bf16.msra.mxu0 0
        %756 = vmatpush.bf16.msra.mxu0 0
        %757 = vmatpush.bf16.msra.mxu0 %v748
        %758 = vmatpush.bf16.msra.mxu0 %v747
        %759 = vmatmul.bf16.gmra.mxu0 %v549
        %v760 = vpop.f32.mrf.mxu0
        %v761 = vadd.f32 %v519, %v760
        %v762 = vpop.f32.mrf.mxu0
        %763 = vdwg.mxu0
        %v768 = vunpack.c.l.b16 %v475
        %v769 = vunpack.c.l.b16 %v476
        %v770 = vunpack.c.l.b16 %v477
        %v771 = vunpack.c.l.b16 %v478
        %v772 = vpack.c.b16 %v769, %v768
        %v773 = vpack.c.b16 %v771, %v770
        %776 = vmatpush.bf16.msra.mxu0 0
        %777 = vmatpush.bf16.msra.mxu0 0
        %778 = vmatpush.bf16.msra.mxu0 0
        %779 = vmatpush.bf16.msra.mxu0 0
        %780 = vmatpush.bf16.msra.mxu0 0
        %781 = vmatpush.bf16.msra.mxu0 0
        %782 = vmatpush.bf16.msra.mxu0 %v773
        %783 = vmatpush.bf16.msra.mxu0 %v772
        %784 = vmatmul.bf16.gmra.mxu0 %v549
        %v785 = vpop.f32.mrf.mxu0
        %v786 = vadd.f32 %v520, %v785
        %v787 = vpop.f32.mrf.mxu0
        %788 = vdwg.mxu0
        %v793 = vunpack.c.l.b16 %v479
        %v794 = vunpack.c.l.b16 %v480
        %v795 = vunpack.c.l.b16 %v481
        %v796 = vunpack.c.l.b16 %v482
        %v797 = vpack.c.b16 %v794, %v793
        %v798 = vpack.c.b16 %v796, %v795
        %801 = vmatpush.bf16.msra.mxu0 0
        %802 = vmatpush.bf16.msra.mxu0 0
        %803 = vmatpush.bf16.msra.mxu0 0
        %804 = vmatpush.bf16.msra.mxu0 0
        %805 = vmatpush.bf16.msra.mxu0 0
        %806 = vmatpush.bf16.msra.mxu0 0
        %807 = vmatpush.bf16.msra.mxu0 %v798
        %808 = vmatpush.bf16.msra.mxu0 %v797
        %809 = vmatmul.bf16.gmra.mxu0 %v549
        %v810 = vpop.f32.mrf.mxu0
        %v811 = vadd.f32 %v521, %v810
        %v812 = vpop.f32.mrf.mxu0
        %813 = vdwg.mxu0
        %v818 = vunpack.c.l.b16 %v483
        %v819 = vunpack.c.l.b16 %v484
        %v820 = vunpack.c.l.b16 %v485
        %v821 = vunpack.c.l.b16 %v486
        %v822 = vpack.c.b16 %v819, %v818
        %v823 = vpack.c.b16 %v821, %v820
        %826 = vmatpush.bf16.msra.mxu0 0
        %827 = vmatpush.bf16.msra.mxu0 0
        %828 = vmatpush.bf16.msra.mxu0 0
        %829 = vmatpush.bf16.msra.mxu0 0
        %830 = vmatpush.bf16.msra.mxu0 0
        %831 = vmatpush.bf16.msra.mxu0 0
        %832 = vmatpush.bf16.msra.mxu0 %v823
        %833 = vmatpush.bf16.msra.mxu0 %v822
        %834 = vmatmul.bf16.gmra.mxu0 %v549
        %v835 = vpop.f32.mrf.mxu0
        %v836 = vadd.f32 %v522, %v835
        %v837 = vpop.f32.mrf.mxu0
        %838 = vdwg.mxu0
        %v839 = vpack.c.bf16 %v561, %v561
        %v840 = vpack.c.bf16 %v586, %v586
        %v841 = vpack.c.bf16 %v611, %v611
        %v842 = vpack.c.bf16 %v636, %v636
        %v843 = vpack.c.bf16 %v661, %v661
        %v844 = vpack.c.bf16 %v686, %v686
        %v845 = vpack.c.bf16 %v711, %v711
        %v846 = vpack.c.bf16 %v736, %v736
        %vm847 = vcmask 64512
        %v849 = vsel %vm847, %v839, 0
        %v852 = vsel %vm847, %v843, 0
        %854 = vmatpush.bf16.xpose.msra.mxu0 0
        %855 = vmatpush.bf16.xpose.msra.mxu0 0
        %856 = vmatpush.bf16.xpose.msra.mxu0 0
        %857 = vmatpush.bf16.xpose.msra.mxu0 0
        %858 = vmatpush.bf16.xpose.msra.mxu0 0
        %859 = vmatpush.bf16.xpose.msra.mxu0 0
        %860 = vmatpush.bf16.xpose.msra.mxu0 0
        %861 = vmatpush.bf16.xpose.msra.mxu0 %v852
        %862 = vmatmul.bf16.gmra.mxu0 %v849
        %v863 = vpop.f32.mrf.mxu0
        %v864 = vadd.f32 0.0, %v863
        %v865 = vpop.f32.mrf.mxu0
        %866 = vdwg.mxu0
        %v868 = vsel %vm847, %v840, 0
        %v871 = vsel %vm847, %v844, 0
        %873 = vmatpush.bf16.xpose.msra.mxu0 0
        %874 = vmatpush.bf16.xpose.msra.mxu0 0
        %875 = vmatpush.bf16.xpose.msra.mxu0 0
        %876 = vmatpush.bf16.xpose.msra.mxu0 0
        %877 = vmatpush.bf16.xpose.msra.mxu0 0
        %878 = vmatpush.bf16.xpose.msra.mxu0 0
        %879 = vmatpush.bf16.xpose.msra.mxu0 0
        %880 = vmatpush.bf16.xpose.msra.mxu0 %v871
        %881 = vmatmul.bf16.gmra.mxu0 %v868
        %v882 = vpop.f32.mrf.mxu0
        %v883 = vadd.f32 0.0, %v882
        %v884 = vpop.f32.mrf.mxu0
        %885 = vdwg.mxu0
        %v887 = vsel %vm847, %v841, 0
        %v890 = vsel %vm847, %v845, 0
        %892 = vmatpush.bf16.xpose.msra.mxu0 0
        %893 = vmatpush.bf16.xpose.msra.mxu0 0
        %894 = vmatpush.bf16.xpose.msra.mxu0 0
        %895 = vmatpush.bf16.xpose.msra.mxu0 0
        %896 = vmatpush.bf16.xpose.msra.mxu0 0
        %897 = vmatpush.bf16.xpose.msra.mxu0 0
        %898 = vmatpush.bf16.xpose.msra.mxu0 0
        %899 = vmatpush.bf16.xpose.msra.mxu0 %v890
        %900 = vmatmul.bf16.gmra.mxu0 %v887
        %v901 = vpop.f32.mrf.mxu0
        %v902 = vadd.f32 0.0, %v901
        %v903 = vpop.f32.mrf.mxu0
        %904 = vdwg.mxu0
        %v906 = vsel %vm847, %v842, 0
        %v909 = vsel %vm847, %v846, 0
        %911 = vmatpush.bf16.xpose.msra.mxu0 0
        %912 = vmatpush.bf16.xpose.msra.mxu0 0
        %913 = vmatpush.bf16.xpose.msra.mxu0 0
        %914 = vmatpush.bf16.xpose.msra.mxu0 0
        %915 = vmatpush.bf16.xpose.msra.mxu0 0
        %916 = vmatpush.bf16.xpose.msra.mxu0 0
        %917 = vmatpush.bf16.xpose.msra.mxu0 0
        %918 = vmatpush.bf16.xpose.msra.mxu0 %v909
        %919 = vmatmul.bf16.gmra.mxu0 %v906
        %v920 = vpop.f32.mrf.mxu0
        %v921 = vadd.f32 0.0, %v920
        %v922 = vpop.f32.mrf.mxu0
        %923 = vdwg.mxu0
        %v924 = vsel %vm847, %v864, -inf
        %925 = vmax.xlane.f32.xlu0 %v924
        %v926 = vpop.xlane.xlu0 %925
        %v927 = vsel %vm847, %v883, -inf
        %928 = vmax.xlane.f32.xlu0 %v927
        %v929 = vpop.xlane.xlu0 %928
        %v930 = vsel %vm847, %v902, -inf
        %931 = vmax.xlane.f32.xlu0 %v930
        %v932 = vpop.xlane.xlu0 %931
        %v933 = vsel %vm847, %v921, -inf
        %934 = vmax.xlane.f32.xlu0 %v933
        %v935 = vpop.xlane.xlu0 %934
        %v936 = vsub.f32 %v864, %v926
        %v937 = vsub.f32 %v883, %v929
        %v938 = vsub.f32 %v902, %v932
        %v939 = vsub.f32 %v921, %v935
        %v940 = vmul.f32 %v936, 1.442695
        %v941 = vpow.pop %v940
        %v942 = vmul.f32 %v937, 1.442695
        %v943 = vpow.pop %v942
        %v944 = vmul.f32 %v938, 1.442695
        %v945 = vpow.pop %v944
        %v946 = vmul.f32 %v939, 1.442695
        %v947 = vpow.pop %v946
        %v948 = vsel %vm847, %v941, 0.0
        %949 = vadd.xlane.f32.xlu0 %v948
        %v950 = vpop.xlane.xlu0 %949
        %v951 = vsel %vm847, %v943, 0.0
        %952 = vadd.xlane.f32.xlu0 %v951
        %v953 = vpop.xlane.xlu0 %952
        %v954 = vsel %vm847, %v945, 0.0
        %955 = vadd.xlane.f32.xlu0 %v954
        %v956 = vpop.xlane.xlu0 %955
        %v957 = vsel %vm847, %v947, 0.0
        %958 = vadd.xlane.f32.xlu0 %v957
        %v959 = vpop.xlane.xlu0 %958
        %v960 = vrcp.pop %v950
        %v961 = vrcp.pop %v953
        %v962 = vrcp.pop %v956
        %v963 = vrcp.pop %v959
        %v964 = vmul.f32 %v941, %v960
        %v965 = vmul.f32 %v943, %v961
        %v966 = vmul.f32 %v945, %v962
        %v967 = vmul.f32 %v947, %v963
        %v968 = vpack.c.bf16 %v964, %v964
        %v969 = vpack.c.bf16 %v965, %v965
        %v970 = vpack.c.bf16 %v966, %v966
        %v971 = vpack.c.bf16 %v967, %v967
        %v972 = vpack.c.bf16 %v761, %v761
        %v973 = vpack.c.bf16 %v786, %v786
        %v974 = vpack.c.bf16 %v811, %v811
        %v975 = vpack.c.bf16 %v836, %v836
        %v977 = vsel %vm847, %v968, 0
        %vm979 = vcmask 1043456
        %v981 = vsel %vm979, %v972, 0
        %983 = vmatpush.bf16.msra.mxu0 0
        %984 = vmatpush.bf16.msra.mxu0 0
        %985 = vmatpush.bf16.msra.mxu0 0
        %986 = vmatpush.bf16.msra.mxu0 0
        %987 = vmatpush.bf16.msra.mxu0 0
        %988 = vmatpush.bf16.msra.mxu0 0
        %989 = vmatpush.bf16.msra.mxu0 0
        %990 = vmatpush.bf16.msra.mxu0 %v981
        %991 = vmatmul.bf16.gmra.mxu0 %v977
        %v992 = vpop.f32.mrf.mxu0
        %v993 = vadd.f32 0.0, %v992
        %v994 = vpop.f32.mrf.mxu0
        %995 = vdwg.mxu0
        %v997 = vsel %vm847, %v969, 0
        %v1000 = vsel %vm979, %v973, 0
        %1002 = vmatpush.bf16.msra.mxu0 0
        %1003 = vmatpush.bf16.msra.mxu0 0
        %1004 = vmatpush.bf16.msra.mxu0 0
        %1005 = vmatpush.bf16.msra.mxu0 0
        %1006 = vmatpush.bf16.msra.mxu0 0
        %1007 = vmatpush.bf16.msra.mxu0 0
        %1008 = vmatpush.bf16.msra.mxu0 0
        %1009 = vmatpush.bf16.msra.mxu0 %v1000
        %1010 = vmatmul.bf16.gmra.mxu0 %v997
        %v1011 = vpop.f32.mrf.mxu0
        %v1012 = vadd.f32 0.0, %v1011
        %v1013 = vpop.f32.mrf.mxu0
        %1014 = vdwg.mxu0
        %v1016 = vsel %vm847, %v970, 0
        %v1019 = vsel %vm979, %v974, 0
        %1021 = vmatpush.bf16.msra.mxu0 0
        %1022 = vmatpush.bf16.msra.mxu0 0
        %1023 = vmatpush.bf16.msra.mxu0 0
        %1024 = vmatpush.bf16.msra.mxu0 0
        %1025 = vmatpush.bf16.msra.mxu0 0
        %1026 = vmatpush.bf16.msra.mxu0 0
        %1027 = vmatpush.bf16.msra.mxu0 0
        %1028 = vmatpush.bf16.msra.mxu0 %v1019
        %1029 = vmatmul.bf16.gmra.mxu0 %v1016
        %v1030 = vpop.f32.mrf.mxu0
        %v1031 = vadd.f32 0.0, %v1030
        %v1032 = vpop.f32.mrf.mxu0
        %1033 = vdwg.mxu0
        %v1035 = vsel %vm847, %v971, 0
        %v1038 = vsel %vm979, %v975, 0
        %1040 = vmatpush.bf16.msra.mxu0 0
        %1041 = vmatpush.bf16.msra.mxu0 0
        %1042 = vmatpush.bf16.msra.mxu0 0
        %1043 = vmatpush.bf16.msra.mxu0 0
        %1044 = vmatpush.bf16.msra.mxu0 0
        %1045 = vmatpush.bf16.msra.mxu0 0
        %1046 = vmatpush.bf16.msra.mxu0 0
        %1047 = vmatpush.bf16.msra.mxu0 %v1038
        %1048 = vmatmul.bf16.gmra.mxu0 %v1035
        %v1049 = vpop.f32.mrf.mxu0
        %v1050 = vadd.f32 0.0, %v1049
        %v1051 = vpop.f32.mrf.mxu0
        %1052 = vdwg.mxu0
        %v1053 = vpack.c.bf16 %v993, %v993
        %v1054 = vpack.c.bf16 %v1012, %v1012
        %v1055 = vpack.c.bf16 %v1031, %v1031
        %v1056 = vpack.c.bf16 %v1050, %v1050
        %v1057 = vld [vmem:[%s3] sm:$0xf]
        %v1058 = vld [vmem:[%s3 + $0x4] sm:$0xf]
        %v1059 = vld [vmem:[%s3 + $0x8] sm:$0xf]
        %v1060 = vld [vmem:[%s3 + $0xc] sm:$0xf]
        %v1062 = vsel %vm847, %v1053, 0
        %v1065 = vsel %vm979, %v1057, 0
        %1067 = vmatpush.bf16.msra.mxu0 0
        %1068 = vmatpush.bf16.msra.mxu0 0
        %1069 = vmatpush.bf16.msra.mxu0 0
        %1070 = vmatpush.bf16.msra.mxu0 0
        %1071 = vmatpush.bf16.msra.mxu0 0
        %1072 = vmatpush.bf16.msra.mxu0 0
        %1073 = vmatpush.bf16.msra.mxu0 0
        %1074 = vmatpush.bf16.msra.mxu0 %v1065
        %1075 = vmatmul.bf16.gmra.mxu0 %v1062
        %v1076 = vpop.f32.mrf.mxu0
        %v1077 = vadd.f32 0.0, %v1076
        %v1078 = vpop.f32.mrf.mxu0
        %1079 = vdwg.mxu0
        %v1081 = vsel %vm847, %v1054, 0
        %v1084 = vsel %vm979, %v1058, 0
        %1086 = vmatpush.bf16.msra.mxu0 0
        %1087 = vmatpush.bf16.msra.mxu0 0
        %1088 = vmatpush.bf16.msra.mxu0 0
        %1089 = vmatpush.bf16.msra.mxu0 0
        %1090 = vmatpush.bf16.msra.mxu0 0
        %1091 = vmatpush.bf16.msra.mxu0 0
        %1092 = vmatpush.bf16.msra.mxu0 0
        %1093 = vmatpush.bf16.msra.mxu0 %v1084
        %1094 = vmatmul.bf16.gmra.mxu0 %v1081
        %v1095 = vpop.f32.mrf.mxu0
        %v1096 = vadd.f32 0.0, %v1095
        %v1097 = vpop.f32.mrf.mxu0
        %1098 = vdwg.mxu0
        %v1100 = vsel %vm847, %v1055, 0
        %v1103 = vsel %vm979, %v1059, 0
        %1105 = vmatpush.bf16.msra.mxu0 0
        %1106 = vmatpush.bf16.msra.mxu0 0
        %1107 = vmatpush.bf16.msra.mxu0 0
        %1108 = vmatpush.bf16.msra.mxu0 0
        %1109 = vmatpush.bf16.msra.mxu0 0
        %1110 = vmatpush.bf16.msra.mxu0 0
        %1111 = vmatpush.bf16.msra.mxu0 0
        %1112 = vmatpush.bf16.msra.mxu0 %v1103
        %1113 = vmatmul.bf16.gmra.mxu0 %v1100
        %v1114 = vpop.f32.mrf.mxu0
        %v1115 = vadd.f32 0.0, %v1114
        %v1116 = vpop.f32.mrf.mxu0
        %1117 = vdwg.mxu0
        %v1119 = vsel %vm847, %v1056, 0
        %v1122 = vsel %vm979, %v1060, 0
        %1124 = vmatpush.bf16.msra.mxu0 0
        %1125 = vmatpush.bf16.msra.mxu0 0
        %1126 = vmatpush.bf16.msra.mxu0 0
        %1127 = vmatpush.bf16.msra.mxu0 0
        %1128 = vmatpush.bf16.msra.mxu0 0
        %1129 = vmatpush.bf16.msra.mxu0 0
        %1130 = vmatpush.bf16.msra.mxu0 0
        %1131 = vmatpush.bf16.msra.mxu0 %v1122
        %1132 = vmatmul.bf16.gmra.mxu0 %v1119
        %v1133 = vpop.f32.mrf.mxu0
        %v1134 = vadd.f32 0.0, %v1133
        %v1135 = vpop.f32.mrf.mxu0
        %1136 = vdwg.mxu0
        %v1137 = vsel %vm547, %v1077, 0.0
        %v1138 = vsel %vm547, %v1096, 0.0
        %v1139 = vadd.f32 %v1137, %v1138
        %v1140 = vsel %vm547, %v1115, 0.0
        %v1141 = vadd.f32 %v1139, %v1140
        %v1142 = vsel %vm547, %v1134, 0.0
        %v1143 = vadd.f32 %v1141, %v1142
        %v1144 = vld [vmem:[%s4] sm:$0x1]
        %v1146 = vperm.slane %v1144, 0
        %v1148 = vadd.f32 %v1143, %v1146
        %v1149 = vadd.f32 %v1148, %v437
        %v1150 = vld [vmem:[%s5] sm:$0x1]
        %v1151 = vld [vmem:[%s6] sm:$0x1]
        %v1152 = vsel %vm547, %v1149, 0.0
        %1153 = vadd.xlane.f32.xlu0 %v1152
        %v1154 = vpop.xlane.xlu0 %1153
        %v1155 = vrcp.pop 32.0
        %v1156 = vmul.f32 32.0, %v1155
        %v1157 = vsub.f32 1.0, %v1156
        %v1158 = vmul.f32 %v1155, %v1157
        %v1159 = vadd.f32 %v1155, %v1158
        %vm1160 = vweird.f32 %v1155
        %v1161 = vsel %vm1160, %v1155, %v1159
        %v1162 = vmul.f32 %v1154, %v1161
        %v1163 = vsub.f32 %v1149, %v1162
        %v1164 = vmul.f32 %v1163, %v1163
        %v1165 = vsel %vm547, %v1164, 0.0
        %1166 = vadd.xlane.f32.xlu0 %v1165
        %v1167 = vpop.xlane.xlu0 %1166
        %v1168 = vmul.f32 %v1167, %v1161
        %v1169 = vadd.f32 %v1168, 1e-05
        %v1170 = vrsqrt.pop %v1169
        %v1171 = vmul.f32 %v1170, %v1169
        %v1172 = vmul.f32 %v1171, %v1170
        %v1173 = vmul.f32 0.5, %v1172
        %v1174 = vsub.f32 1.5, %v1173
        %v1175 = vmul.f32 %v1170, %v1174
        %vm1176 = vweird.f32 %v1169
        %vm1177 = vweird.f32 %v1170
        %vm1178 = vmor %vm1176, %vm1177
        %v1179 = vsel %vm1178, %v1170, %v1175
        %v1180 = vmul.f32 %v1163, %v1179
        %v1182 = vperm.slane %v1150, 0
        %v1184 = vmul.f32 %v1180, %v1182
        %v1186 = vperm.slane %v1151, 0
        %v1188 = vadd.f32 %v1184, %v1186
        %v1189 = vpack.c.bf16 %v1188, %v1188
        %v1190 = vld [vmem:[%s7] sm:$0xf]
        %v1191 = vld [vmem:[%s7 + $0x4] sm:$0xf]
        %v1192 = vld [vmem:[%s7 + $0x8] sm:$0xf]
        %v1193 = vld [vmem:[%s7 + $0xc] sm:$0xf]
        %v1194 = vld [vmem:[%s8] sm:$0x1]
        %v1196 = vperm.slane %v1194, 0
        %v1202 = vunpack.c.l.b16 %v1190
        %v1203 = vunpack.c.l.b16 %v1191
        %v1204 = vunpack.c.l.b16 %v1192
        %v1205 = vunpack.c.l.b16 %v1193
        %v1206 = vpack.c.b16 %v1203, %v1202
        %v1207 = vpack.c.b16 %v1205, %v1204
        %v1211 = vsel %vm547, %v1189, 0
        %1213 = vmatpush.bf16.msra.mxu0 0
        %1214 = vmatpush.bf16.msra.mxu0 0
        %1215 = vmatpush.bf16.msra.mxu0 0
        %1216 = vmatpush.bf16.msra.mxu0 0
        %1217 = vmatpush.bf16.msra.mxu0 0
        %1218 = vmatpush.bf16.msra.mxu0 0
        %1219 = vmatpush.bf16.msra.mxu0 %v1207
        %1220 = vmatpush.bf16.msra.mxu0 %v1206
        %1221 = vmatmul.bf16.gmra.mxu0 %v1211
        %v1222 = vpop.f32.mrf.mxu0
        %v1223 = vadd.f32 %v1196, %v1222
        %v1224 = vpop.f32.mrf.mxu0
        %1225 = vdwg.mxu0
        %v1226 = vmax.f32 %v1223, 0.0
        %v1227 = vpack.c.bf16 %v1226, %v1226
        %v1228 = vld [vmem:[%s9] sm:$0xf]
        %v1229 = vld [vmem:[%s9 + $0x4] sm:$0xf]
        %v1230 = vld [vmem:[%s9 + $0x8] sm:$0xf]
        %v1231 = vld [vmem:[%s9 + $0xc] sm:$0xf]
        %v1232 = vld [vmem:[%s9 + $0x10] sm:$0xf]
        %v1233 = vld [vmem:[%s9 + $0x14] sm:$0xf]
        %v1234 = vld [vmem:[%s9 + $0x18] sm:$0xf]
        %v1235 = vld [vmem:[%s9 + $0x1c] sm:$0xf]
        %v1236 = vld [vmem:[%s10] sm:$0x1]
        %v1238 = vperm.slane %v1236, 0
        %v1248 = vunpack.c.l.b16 %v1228
        %v1249 = vunpack.c.l.b16 %v1229
        %v1250 = vunpack.c.l.b16 %v1230
        %v1251 = vunpack.c.l.b16 %v1231
        %v1252 = vunpack.c.l.b16 %v1232
        %v1253 = vunpack.c.l.b16 %v1233
        %v1254 = vunpack.c.l.b16 %v1234
        %v1255 = vunpack.c.l.b16 %v1235
        %v1256 = vpack.c.b16 %v1249, %v1248
        %v1257 = vpack.c.b16 %v1251, %v1250
        %v1258 = vpack.c.b16 %v1253, %v1252
        %v1259 = vpack.c.b16 %v1255, %v1254
        %vm1264 = vcmask 523264
        %v1266 = vsel %vm1264, %v1227, 0
        %1268 = vmatpush.bf16.msra.mxu0 0
        %1269 = vmatpush.bf16.msra.mxu0 0
        %1270 = vmatpush.bf16.msra.mxu0 0
        %1271 = vmatpush.bf16.msra.mxu0 0
        %1272 = vmatpush.bf16.msra.mxu0 %v1259
        %1273 = vmatpush.bf16.msra.mxu0 %v1258
        %1274 = vmatpush.bf16.msra.mxu0 %v1257
        %1275 = vmatpush.bf16.msra.mxu0 %v1256
        %1276 = vmatmul.bf16.gmra.mxu0 %v1266
        %v1277 = vpop.f32.mrf.mxu0
        %v1278 = vadd.f32 %v1238, %v1277
        %v1279 = vpop.f32.mrf.mxu0
        %1280 = vdwg.mxu0
        %v1281 = vadd.f32 %v1278, %v1188
        %v1282 = vld [vmem:[%s11] sm:$0x1]
        %v1283 = vld [vmem:[%s12] sm:$0x1]
        %v1284 = vsel %vm547, %v1281, 0.0
        %1285 = vadd.xlane.f32.xlu0 %v1284
        %v1286 = vpop.xlane.xlu0 %1285
        %v1287 = vmul.f32 %v1286, %v1161
        %v1288 = vsub.f32 %v1281, %v1287
        %v1289 = vmul.f32 %v1288, %v1288
        %v1290 = vsel %vm547, %v1289, 0.0
        %1291 = vadd.xlane.f32.xlu0 %v1290
        %v1292 = vpop.xlane.xlu0 %1291
        %v1293 = vmul.f32 %v1292, %v1161
        %v1294 = vadd.f32 %v1293, 1e-05
        %v1295 = vrsqrt.pop %v1294
        %v1296 = vmul.f32 %v1295, %v1294
        %v1297 = vmul.f32 %v1296, %v1295
        %v1298 = vmul.f32 0.5, %v1297
        %v1299 = vsub.f32 1.5, %v1298
        %v1300 = vmul.f32 %v1295, %v1299
        %vm1301 = vweird.f32 %v1294
        %vm1302 = vweird.f32 %v1295
        %vm1303 = vmor %vm1301, %vm1302
        %v1304 = vsel %vm1303, %v1295, %v1300
        %v1305 = vmul.f32 %v1288, %v1304
        %v1307 = vperm.slane %v1282, 0
        %v1309 = vmul.f32 %v1305, %v1307
        %v1311 = vperm.slane %v1283, 0
        %v1313 = vadd.f32 %v1309, %v1311
        %1314 = vst.msk [vmem:[%s431] sm:$0xff] %vm547, %v1313
        %s1315 = sand.u32 %s313, 1
        %s1316 = scalar_lea.sflag [#allocation3], %s1315
        %s1317 = sand.u32 %s313, 1
        %s1318 = smul.addr %s1317, 8
        %s1319 = scalar_lea.vmem [#allocation2], %s1318
        // Predicated region
        $region73: #{transformer_forward.3} parent=71 // pred_check
          %p1320 = pneg %p323
        $region74: #{transformer_forward.3} parent=71 // pred_check_branch
          %1322 = sbr.rel (%p1320) target = $region76
        $region75: #{transformer_forward.3} parent=71 // pred_region
          %1324 = vsyncadd %s1316, 0
          %s1325 = smul.addr %s27, 8
          %s1326 = scalar_lea.hbm %s13, %s1325
          %s1328 = sshll.u32 %s1319, 4
          %s1329 = int_to_ptr.vmem [resolvable:$true] %s1328
          %s1330 = sshll.u32 %s1326, 4
          %s1331 = int_to_ptr.hbm [resolvable:$true] %s1330
          %1333 = dma.vmem_to_hbm [thread:$0]  %s1329, 128, %s1331, %s1316
        $region76: #{transformer_forward.3} parent=71 // pred_fallthru
          _
      $region72: #{transformer_forward.3} parent=5 // pred_fallthru
        _
      %p1334 = scmp.le.s32.totalorder 2, %s22
      // Predicated region
      $region77: #{transformer_forward.3} parent=5 // pred_check
        %p1335 = pneg %p1334
      $region78: #{transformer_forward.3} parent=5 // pred_check_branch
        %1337 = sbr.rel (%p1335) target = $region80
      $region79: #{transformer_forward.3} parent=5 // pred_region
        %s1338 = ssub.s32 %s22, 2
        // Predicated region
        $region81: #{transformer_forward.3} parent=79 // pred_check
          %p1339 = pneg %p329
        $region82: #{transformer_forward.3} parent=79 // pred_check_branch
          %1341 = sbr.rel (%p1339) target = $region84
        $region83: #{transformer_forward.3} parent=79 // pred_region
          %s1342 = sand.u32 %s314, 1
          %s1343 = scalar_lea.sflag [#allocation3], %s1342
          %s1344 = sand.u32 %s314, 1
          %s1345 = smul.addr %s1344, 8
          %s1346 = scalar_lea.vmem [#allocation2], %s1345
          %1348 = dma.done %s1343, 128
        $region84: #{transformer_forward.3} parent=79 // pred_fallthru
          _
      $region80: #{transformer_forward.3} parent=5 // pred_fallthru
        _
    $region6: #{transformer_forward.3} parent=1 // loop_footer
      %s26 = sadd.s32 1, %s22
    $region7: #{transformer_forward.3} parent=1 // loop_footer_branch
      %21 = sbr.rel target = $region3
    $region8: #{transformer_forward.3} parent=1 // loop_exit
      _
    %1349 = vsyncpa [#allocation3], 1
    %s1350 = scalar_lea.sflag [#allocation3], 1
    %1351 = vsyncpa %s1350, 1

// kernel: transformer_forward.2
$region0: #{transformer_forward.2}
  #allocation0 [shape = 'u32[]', space=smem, size = 0x4, offset = 0x4, fixed_abs, tag = 'smem constant byte address 0x4 - core index']
  #allocation1 [shape = 'u32[72,128]{1,0:T(1,128)}', space=vmem, size = 0x9000, scoped, tag = 'internal scratch']
  %s0 = inlined_call_operand.vmem [shape: f32[2,8,32], index: 0, kind: input, shape index: {}]
  %s1 = inlined_call_operand.vmem [shape: bf16[12,32,8], index: 1, kind: input, shape index: {}]
  %s2 = inlined_call_operand.vmem [shape: f32[12,1,8], index: 2, kind: input, shape index: {}]
  %s3 = inlined_call_operand.vmem [shape: bf16[4,8,32], index: 3, kind: input, shape index: {}]
  %s4 = inlined_call_operand.vmem [shape: f32[1,32], index: 4, kind: input, shape index: {}]
  %s5 = inlined_call_operand.vmem [shape: f32[1,32], index: 5, kind: input, shape index: {}]
  %s6 = inlined_call_operand.vmem [shape: f32[1,32], index: 6, kind: input, shape index: {}]
  %s7 = inlined_call_operand.vmem [shape: bf16[32,64], index: 7, kind: input, shape index: {}]
  %s8 = inlined_call_operand.vmem [shape: f32[1,64], index: 8, kind: input, shape index: {}]
  %s9 = inlined_call_operand.vmem [shape: bf16[64,32], index: 9, kind: input, shape index: {}]
  %s10 = inlined_call_operand.vmem [shape: f32[1,32], index: 10, kind: input, shape index: {}]
  %s11 = inlined_call_operand.vmem [shape: f32[1,32], index: 11, kind: input, shape index: {}]
  %s12 = inlined_call_operand.vmem [shape: f32[1,32], index: 12, kind: input, shape index: {}]
  %s13 = inlined_call_operand.vmem [shape: f32[2,8,32], index: 13, kind: output, shape index: {}]
  %s14 = sld [smem:[#allocation0]]
  $region85: #{transformer_forward.2} parent=0
    _
  %s16 = ssub.s32 1, %s14
  %s17 = scalar_select 0, %s16, %s14
  loop: start=0, step=1, limit=4
  $region2: #{transformer_forward.2} parent=0 // loop_pre_header
    _
  $region3: #{transformer_forward.2} parent=0 // loop_header
    %s19 = sphi 0, %s23
    %p20 = scmp.ge.s32.totalorder %s19, 4
    %s29 = sphi 0, %s31
    %s32 = sphi 0, %s29
    %s33 = sphi 0, %s32
    %s49 = sphi 0, %s33
    %s53 = sphi 0, %s53
    %s55 = sphi 0, %s53
    %s56 = sphi 0, %s55
    %s70 = sphi 0, %s56
    %s74 = sphi 0, %s74
    %s76 = sphi 0, %s74
    %s77 = sphi 0, %s76
    %s91 = sphi 0, %s77
    %s95 = sphi 0, %s95
    %s97 = sphi 0, %s95
    %s98 = sphi 0, %s97
    %s112 = sphi 0, %s98
    %s116 = sphi 0, %s116
    %s118 = sphi 0, %s116
    %s119 = sphi 0, %s118
    %s133 = sphi 0, %s119
    %s137 = sphi 0, %s137
    %s139 = sphi 0, %s137
    %s140 = sphi 0, %s139
    %s154 = sphi 0, %s140
    %s158 = sphi 0, %s158
    %s160 = sphi 0, %s158
    %s161 = sphi 0, %s160
    %s175 = sphi 0, %s161
    %s179 = sphi 0, %s179
    %s181 = sphi 0, %s179
    %s182 = sphi 0, %s181
    %s196 = sphi 0, %s182
    %s200 = sphi 0, %s200
    %s202 = sphi 0, %s200
    %s203 = sphi 0, %s202
    %s217 = sphi 0, %s203
    %s221 = sphi 0, %s221
    %s223 = sphi 0, %s221
    %s224 = sphi 0, %s223
    %s238 = sphi 0, %s224
    %s242 = sphi 0, %s242
    %s244 = sphi 0, %s242
    %s245 = sphi 0, %s244
    %s259 = sphi 0, %s245
    %s263 = sphi 0, %s263
    %s265 = sphi 0, %s263
    %s266 = sphi 0, %s265
    %s280 = sphi 0, %s266
    %s284 = sphi 0, %s284
    %s286 = sphi 0, %s284
    %s287 = sphi 0, %s286
    %s301 = sphi 0, %s287
    %s307 = sphi 0, %s309
    %s310 = sphi 0, %s307
    %s311 = sphi 0, %s310
    %s327 = sphi 0, %s311
  $region4: #{transformer_forward.2} parent=0 // loop_header_branch
    %22 = sbr.rel (%p20) target = $region8
  $region5: #{transformer_forward.2} parent=0 // loop_body
    %s24 = ssub.s32 %s19, 1
    %s25 = ssub.s32 %s19, 2
    %s26 = sadd.s32 %s19, 1
    %s27 = ssub.s32 %s19, %s26
    %p28 = scmp.eq.s32.totalorder %s27, 0
    %s30 = sadd.s32 %s29, 1
    %s31 = scalar_select %p28, %s29, %s30
    %p34 = pneg %p28
    %p35 = scmp.eq.s32.totalorder %s19, 1
    %p36 = por %p34, %p35
    %p37 = scmp.ne.s32.totalorder %s29, %s32
    %p38 = scmp.eq.s32.totalorder %s19, 0
    %p39 = por %p37, %p38
    %p40 = scmp.ne.s32.totalorder %s29, %s32
    %p41 = scmp.eq.s32.totalorder %s24, 1
    %p42 = por %p40, %p41
    %p43 = scmp.ne.s32.totalorder %s32, %s33
    %p44 = scmp.eq.s32.totalorder %s24, 0
    %p45 = por %p43, %p44
    %p46 = scmp.ne.s32.totalorder %s32, %s33
    %p47 = scmp.eq.s32.totalorder %s25, 1
    %p48 = por %p46, %p47
    %p50 = scmp.ne.s32.totalorder %s33, %s49
    %p51 = scmp.eq.s32.totalorder %s25, 0
    %p52 = por %p50, %p51
    %s54 = sadd.s32 %s53, 1
    %p57 = scmp.eq.s32.totalorder %s19, 1
    %p58 = scmp.ne.s32.totalorder %s53, %s55
    %p59 = scmp.eq.s32.totalorder %s19, 0
    %p60 = por %p58, %p59
    %p61 = scmp.ne.s32.totalorder %s53, %s55
    %p62 = scmp.eq.s32.totalorder %s24, 1
    %p63 = por %p61, %p62
    %p64 = scmp.ne.s32.totalorder %s55, %s56
    %p65 = scmp.eq.s32.totalorder %s24, 0
    %p66 = por %p64, %p65
    %p67 = scmp.ne.s32.totalorder %s55, %s56
    %p68 = scmp.eq.s32.totalorder %s25, 1
    %p69 = por %p67, %p68
    %p71 = scmp.ne.s32.totalorder %s56, %s70
    %p72 = scmp.eq.s32.totalorder %s25, 0
    %p73 = por %p71, %p72
    %s75 = sadd.s32 %s74, 1
    %p78 = scmp.eq.s32.totalorder %s19, 1
    %p79 = scmp.ne.s32.totalorder %s74, %s76
    %p80 = scmp.eq.s32.totalorder %s19, 0
    %p81 = por %p79, %p80
    %p82 = scmp.ne.s32.totalorder %s74, %s76
    %p83 = scmp.eq.s32.totalorder %s24, 1
    %p84 = por %p82, %p83
    %p85 = scmp.ne.s32.totalorder %s76, %s77
    %p86 = scmp.eq.s32.totalorder %s24, 0
    %p87 = por %p85, %p86
    %p88 = scmp.ne.s32.totalorder %s76, %s77
    %p89 = scmp.eq.s32.totalorder %s25, 1
    %p90 = por %p88, %p89
    %p92 = scmp.ne.s32.totalorder %s77, %s91
    %p93 = scmp.eq.s32.totalorder %s25, 0
    %p94 = por %p92, %p93
    %s96 = sadd.s32 %s95, 1
    %p99 = scmp.eq.s32.totalorder %s19, 1
    %p100 = scmp.ne.s32.totalorder %s95, %s97
    %p101 = scmp.eq.s32.totalorder %s19, 0
    %p102 = por %p100, %p101
    %p103 = scmp.ne.s32.totalorder %s95, %s97
    %p104 = scmp.eq.s32.totalorder %s24, 1
    %p105 = por %p103, %p104
    %p106 = scmp.ne.s32.totalorder %s97, %s98
    %p107 = scmp.eq.s32.totalorder %s24, 0
    %p108 = por %p106, %p107
    %p109 = scmp.ne.s32.totalorder %s97, %s98
    %p110 = scmp.eq.s32.totalorder %s25, 1
    %p111 = por %p109, %p110
    %p113 = scmp.ne.s32.totalorder %s98, %s112
    %p114 = scmp.eq.s32.totalorder %s25, 0
    %p115 = por %p113, %p114
    %s117 = sadd.s32 %s116, 1
    %p120 = scmp.eq.s32.totalorder %s19, 1
    %p121 = scmp.ne.s32.totalorder %s116, %s118
    %p122 = scmp.eq.s32.totalorder %s19, 0
    %p123 = por %p121, %p122
    %p124 = scmp.ne.s32.totalorder %s116, %s118
    %p125 = scmp.eq.s32.totalorder %s24, 1
    %p126 = por %p124, %p125
    %p127 = scmp.ne.s32.totalorder %s118, %s119
    %p128 = scmp.eq.s32.totalorder %s24, 0
    %p129 = por %p127, %p128
    %p130 = scmp.ne.s32.totalorder %s118, %s119
    %p131 = scmp.eq.s32.totalorder %s25, 1
    %p132 = por %p130, %p131
    %p134 = scmp.ne.s32.totalorder %s119, %s133
    %p135 = scmp.eq.s32.totalorder %s25, 0
    %p136 = por %p134, %p135
    %s138 = sadd.s32 %s137, 1
    %p141 = scmp.eq.s32.totalorder %s19, 1
    %p142 = scmp.ne.s32.totalorder %s137, %s139
    %p143 = scmp.eq.s32.totalorder %s19, 0
    %p144 = por %p142, %p143
    %p145 = scmp.ne.s32.totalorder %s137, %s139
    %p146 = scmp.eq.s32.totalorder %s24, 1
    %p147 = por %p145, %p146
    %p148 = scmp.ne.s32.totalorder %s139, %s140
    %p149 = scmp.eq.s32.totalorder %s24, 0
    %p150 = por %p148, %p149
    %p151 = scmp.ne.s32.totalorder %s139, %s140
    %p152 = scmp.eq.s32.totalorder %s25, 1
    %p153 = por %p151, %p152
    %p155 = scmp.ne.s32.totalorder %s140, %s154
    %p156 = scmp.eq.s32.totalorder %s25, 0
    %p157 = por %p155, %p156
    %s159 = sadd.s32 %s158, 1
    %p162 = scmp.eq.s32.totalorder %s19, 1
    %p163 = scmp.ne.s32.totalorder %s158, %s160
    %p164 = scmp.eq.s32.totalorder %s19, 0
    %p165 = por %p163, %p164
    %p166 = scmp.ne.s32.totalorder %s158, %s160
    %p167 = scmp.eq.s32.totalorder %s24, 1
    %p168 = por %p166, %p167
    %p169 = scmp.ne.s32.totalorder %s160, %s161
    %p170 = scmp.eq.s32.totalorder %s24, 0
    %p171 = por %p169, %p170
    %p172 = scmp.ne.s32.totalorder %s160, %s161
    %p173 = scmp.eq.s32.totalorder %s25, 1
    %p174 = por %p172, %p173
    %p176 = scmp.ne.s32.totalorder %s161, %s175
    %p177 = scmp.eq.s32.totalorder %s25, 0
    %p178 = por %p176, %p177
    %s180 = sadd.s32 %s179, 1
    %p183 = scmp.eq.s32.totalorder %s19, 1
    %p184 = scmp.ne.s32.totalorder %s179, %s181
    %p185 = scmp.eq.s32.totalorder %s19, 0
    %p186 = por %p184, %p185
    %p187 = scmp.ne.s32.totalorder %s179, %s181
    %p188 = scmp.eq.s32.totalorder %s24, 1
    %p189 = por %p187, %p188
    %p190 = scmp.ne.s32.totalorder %s181, %s182
    %p191 = scmp.eq.s32.totalorder %s24, 0
    %p192 = por %p190, %p191
    %p193 = scmp.ne.s32.totalorder %s181, %s182
    %p194 = scmp.eq.s32.totalorder %s25, 1
    %p195 = por %p193, %p194
    %p197 = scmp.ne.s32.totalorder %s182, %s196
    %p198 = scmp.eq.s32.totalorder %s25, 0
    %p199 = por %p197, %p198
    %s201 = sadd.s32 %s200, 1
    %p204 = scmp.eq.s32.totalorder %s19, 1
    %p205 = scmp.ne.s32.totalorder %s200, %s202
    %p206 = scmp.eq.s32.totalorder %s19, 0
    %p207 = por %p205, %p206
    %p208 = scmp.ne.s32.totalorder %s200, %s202
    %p209 = scmp.eq.s32.totalorder %s24, 1
    %p210 = por %p208, %p209
    %p211 = scmp.ne.s32.totalorder %s202, %s203
    %p212 = scmp.eq.s32.totalorder %s24, 0
    %p213 = por %p211, %p212
    %p214 = scmp.ne.s32.totalorder %s202, %s203
    %p215 = scmp.eq.s32.totalorder %s25, 1
    %p216 = por %p214, %p215
    %p218 = scmp.ne.s32.totalorder %s203, %s217
    %p219 = scmp.eq.s32.totalorder %s25, 0
    %p220 = por %p218, %p219
    %s222 = sadd.s32 %s221, 1
    %p225 = scmp.eq.s32.totalorder %s19, 1
    %p226 = scmp.ne.s32.totalorder %s221, %s223
    %p227 = scmp.eq.s32.totalorder %s19, 0
    %p228 = por %p226, %p227
    %p229 = scmp.ne.s32.totalorder %s221, %s223
    %p230 = scmp.eq.s32.totalorder %s24, 1
    %p231 = por %p229, %p230
    %p232 = scmp.ne.s32.totalorder %s223, %s224
    %p233 = scmp.eq.s32.totalorder %s24, 0
    %p234 = por %p232, %p233
    %p235 = scmp.ne.s32.totalorder %s223, %s224
    %p236 = scmp.eq.s32.totalorder %s25, 1
    %p237 = por %p235, %p236
    %p239 = scmp.ne.s32.totalorder %s224, %s238
    %p240 = scmp.eq.s32.totalorder %s25, 0
    %p241 = por %p239, %p240
    %s243 = sadd.s32 %s242, 1
    %p246 = scmp.eq.s32.totalorder %s19, 1
    %p247 = scmp.ne.s32.totalorder %s242, %s244
    %p248 = scmp.eq.s32.totalorder %s19, 0
    %p249 = por %p247, %p248
    %p250 = scmp.ne.s32.totalorder %s242, %s244
    %p251 = scmp.eq.s32.totalorder %s24, 1
    %p252 = por %p250, %p251
    %p253 = scmp.ne.s32.totalorder %s244, %s245
    %p254 = scmp.eq.s32.totalorder %s24, 0
    %p255 = por %p253, %p254
    %p256 = scmp.ne.s32.totalorder %s244, %s245
    %p257 = scmp.eq.s32.totalorder %s25, 1
    %p258 = por %p256, %p257
    %p260 = scmp.ne.s32.totalorder %s245, %s259
    %p261 = scmp.eq.s32.totalorder %s25, 0
    %p262 = por %p260, %p261
    %s264 = sadd.s32 %s263, 1
    %p267 = scmp.eq.s32.totalorder %s19, 1
    %p268 = scmp.ne.s32.totalorder %s263, %s265
    %p269 = scmp.eq.s32.totalorder %s19, 0
    %p270 = por %p268, %p269
    %p271 = scmp.ne.s32.totalorder %s263, %s265
    %p272 = scmp.eq.s32.totalorder %s24, 1
    %p273 = por %p271, %p272
    %p274 = scmp.ne.s32.totalorder %s265, %s266
    %p275 = scmp.eq.s32.totalorder %s24, 0
    %p276 = por %p274, %p275
    %p277 = scmp.ne.s32.totalorder %s265, %s266
    %p278 = scmp.eq.s32.totalorder %s25, 1
    %p279 = por %p277, %p278
    %p281 = scmp.ne.s32.totalorder %s266, %s280
    %p282 = scmp.eq.s32.totalorder %s25, 0
    %p283 = por %p281, %p282
    %s285 = sadd.s32 %s284, 1
    %p288 = scmp.eq.s32.totalorder %s19, 1
    %p289 = scmp.ne.s32.totalorder %s284, %s286
    %p290 = scmp.eq.s32.totalorder %s19, 0
    %p291 = por %p289, %p290
    %p292 = scmp.ne.s32.totalorder %s284, %s286
    %p293 = scmp.eq.s32.totalorder %s24, 1
    %p294 = por %p292, %p293
    %p295 = scmp.ne.s32.totalorder %s286, %s287
    %p296 = scmp.eq.s32.totalorder %s24, 0
    %p297 = por %p295, %p296
    %p298 = scmp.ne.s32.totalorder %s286, %s287
    %p299 = scmp.eq.s32.totalorder %s25, 1
    %p300 = por %p298, %p299
    %p302 = scmp.ne.s32.totalorder %s287, %s301
    %p303 = scmp.eq.s32.totalorder %s25, 0
    %p304 = por %p302, %p303
    %s305 = ssub.s32 %s19, %s26
    %p306 = scmp.eq.s32.totalorder %s305, 0
    %s308 = sadd.s32 %s307, 1
    %s309 = scalar_select %p306, %s307, %s308
    %p312 = pneg %p306
    %p313 = scmp.eq.s32.totalorder %s19, 1
    %p314 = por %p312, %p313
    %p315 = scmp.ne.s32.totalorder %s307, %s310
    %p316 = scmp.eq.s32.totalorder %s19, 0
    %p317 = por %p315, %p316
    %p318 = scmp.ne.s32.totalorder %s307, %s310
    %p319 = scmp.eq.s32.totalorder %s24, 1
    %p320 = por %p318, %p319
    %p321 = scmp.ne.s32.totalorder %s310, %s311
    %p322 = scmp.eq.s32.totalorder %s24, 0
    %p323 = por %p321, %p322
    %p324 = scmp.ne.s32.totalorder %s310, %s311
    %p325 = scmp.eq.s32.totalorder %s25, 1
    %p326 = por %p324, %p325
    %p328 = scmp.ne.s32.totalorder %s311, %s327
    %p329 = scmp.eq.s32.totalorder %s25, 0
    %p330 = por %p328, %p329
    %p331 = scmp.le.s32.totalorder 1, %s19
    %p332 = scmp.lt.s32.totalorder %s19, 3
    %p333 = pnand %p331, %p332
    %p334 = pneg %p333
    // Predicated region
    $region9: #{transformer_forward.2} parent=5 // pred_check
      _
    $region10: #{transformer_forward.2} parent=5 // pred_check_branch
      %336 = sbr.rel (%p333) target = $region12
    $region11: #{transformer_forward.2} parent=5 // pred_region
      %s337 = ssub.s32 %s19, 1
      // Predicated region
      $region13: #{transformer_forward.2} parent=11 // pred_check
        %p338 = pneg %p66
      $region14: #{transformer_forward.2} parent=11 // pred_check_branch
        %340 = sbr.rel (%p338) target = $region16
      $region15: #{transformer_forward.2} parent=11 // pred_region
        _
      $region16: #{transformer_forward.2} parent=11 // pred_fallthru
        _
      // Predicated region
      $region17: #{transformer_forward.2} parent=11 // pred_check
        %p341 = pneg %p87
      $region18: #{transformer_forward.2} parent=11 // pred_check_branch
        %343 = sbr.rel (%p341) target = $region20
      $region19: #{transformer_forward.2} parent=11 // pred_region
        _
      $region20: #{transformer_forward.2} parent=11 // pred_fallthru
        _
      // Predicated region
      $region21: #{transformer_forward.2} parent=11 // pred_check
        %p344 = pneg %p108
      $region22: #{transformer_forward.2} parent=11 // pred_check_branch
        %346 = sbr.rel (%p344) target = $region24
      $region23: #{transformer_forward.2} parent=11 // pred_region
        _
      $region24: #{transformer_forward.2} parent=11 // pred_fallthru
        _
      // Predicated region
      $region25: #{transformer_forward.2} parent=11 // pred_check
        %p347 = pneg %p129
      $region26: #{transformer_forward.2} parent=11 // pred_check_branch
        %349 = sbr.rel (%p347) target = $region28
      $region27: #{transformer_forward.2} parent=11 // pred_region
        _
      $region28: #{transformer_forward.2} parent=11 // pred_fallthru
        _
      // Predicated region
      $region29: #{transformer_forward.2} parent=11 // pred_check
        %p350 = pneg %p150
      $region30: #{transformer_forward.2} parent=11 // pred_check_branch
        %352 = sbr.rel (%p350) target = $region32
      $region31: #{transformer_forward.2} parent=11 // pred_region
        _
      $region32: #{transformer_forward.2} parent=11 // pred_fallthru
        _
      // Predicated region
      $region33: #{transformer_forward.2} parent=11 // pred_check
        %p353 = pneg %p171
      $region34: #{transformer_forward.2} parent=11 // pred_check_branch
        %355 = sbr.rel (%p353) target = $region36
      $region35: #{transformer_forward.2} parent=11 // pred_region
        _
      $region36: #{transformer_forward.2} parent=11 // pred_fallthru
        _
      // Predicated region
      $region37: #{transformer_forward.2} parent=11 // pred_check
        %p356 = pneg %p192
      $region38: #{transformer_forward.2} parent=11 // pred_check_branch
        %358 = sbr.rel (%p356) target = $region40
      $region39: #{transformer_forward.2} parent=11 // pred_region
        _
      $region40: #{transformer_forward.2} parent=11 // pred_fallthru
        _
      // Predicated region
      $region41: #{transformer_forward.2} parent=11 // pred_check
        %p359 = pneg %p213
      $region42: #{transformer_forward.2} parent=11 // pred_check_branch
        %361 = sbr.rel (%p359) target = $region44
      $region43: #{transformer_forward.2} parent=11 // pred_region
        _
      $region44: #{transformer_forward.2} parent=11 // pred_fallthru
        _
      // Predicated region
      $region45: #{transformer_forward.2} parent=11 // pred_check
        %p362 = pneg %p234
      $region46: #{transformer_forward.2} parent=11 // pred_check_branch
        %364 = sbr.rel (%p362) target = $region48
      $region47: #{transformer_forward.2} parent=11 // pred_region
        _
      $region48: #{transformer_forward.2} parent=11 // pred_fallthru
        _
      // Predicated region
      $region49: #{transformer_forward.2} parent=11 // pred_check
        %p365 = pneg %p255
      $region50: #{transformer_forward.2} parent=11 // pred_check_branch
        %367 = sbr.rel (%p365) target = $region52
      $region51: #{transformer_forward.2} parent=11 // pred_region
        _
      $region52: #{transformer_forward.2} parent=11 // pred_fallthru
        _
      // Predicated region
      $region53: #{transformer_forward.2} parent=11 // pred_check
        %p368 = pneg %p276
      $region54: #{transformer_forward.2} parent=11 // pred_check_branch
        %370 = sbr.rel (%p368) target = $region56
      $region55: #{transformer_forward.2} parent=11 // pred_region
        _
      $region56: #{transformer_forward.2} parent=11 // pred_fallthru
        _
      // Predicated region
      $region57: #{transformer_forward.2} parent=11 // pred_check
        %p371 = pneg %p297
      $region58: #{transformer_forward.2} parent=11 // pred_check_branch
        %373 = sbr.rel (%p371) target = $region60
      $region59: #{transformer_forward.2} parent=11 // pred_region
        _
      $region60: #{transformer_forward.2} parent=11 // pred_fallthru
        _
    $region12: #{transformer_forward.2} parent=5 // pred_fallthru
      _
    %p374 = scmp.lt.s32.totalorder %s19, 2
    // Predicated region
    $region61: #{transformer_forward.2} parent=5 // pred_check
      %p375 = pneg %p374
    $region62: #{transformer_forward.2} parent=5 // pred_check_branch
      %377 = sbr.rel (%p375) target = $region64
    $region63: #{transformer_forward.2} parent=5 // pred_region
      // Predicated region
      $region65: #{transformer_forward.2} parent=63 // pred_check
        %p378 = pneg %p39
      $region66: #{transformer_forward.2} parent=63 // pred_check_branch
        %380 = sbr.rel (%p378) target = $region68
      $region67: #{transformer_forward.2} parent=63 // pred_region
        %p381 = scmp.lt.s32.totalorder %s19, 1
        %s382 = scalar_select %p381, %s19, 1
        %s383 = smul.addr %s382, 8
        %s384 = scalar_lea.vmem %s0, %s383
      $region68: #{transformer_forward.2} parent=63 // pred_fallthru
        _
    $region64: #{transformer_forward.2} parent=5 // pred_fallthru
      _
    %p385 = scmp.le.s32.totalorder 1, %s19
    %p386 = scmp.lt.s32.totalorder %s19, 3
    %p387 = pnand %p385, %p386
    %p388 = pneg %p387
    // Predicated region
    $region69: #{transformer_forward.2} parent=5 // pred_check
      _
    $region70: #{transformer_forward.2} parent=5 // pred_check_branch
      %390 = sbr.rel (%p387) target = $region72
    $region71: #{transformer_forward.2} parent=5 // pred_region
      %s391 = ssub.s32 %s19, 1
      %p392 = scmp.lt.s32.totalorder %s24, 1
      %s393 = scalar_select %p392, %s24, 1
      %s394 = smul.addr %s393, 8
      %s395 = scalar_lea.vmem %s0, %s394
      %p396 = pneg %p45
      %p397 = pneg %p42
      %p398 = pneg %p66
      %p399 = pneg %p63
      %p400 = pneg %p87
      %p401 = pneg %p84
      %p402 = pneg %p108
      %p403 = pneg %p105
      %p404 = pneg %p129
      %p405 = pneg %p126
      %p406 = pneg %p150
      %p407 = pneg %p147
      %p408 = pneg %p171
      %p409 = pneg %p168
      %p410 = pneg %p192
      %p411 = pneg %p189
      %p412 = pneg %p213
      %p413 = pneg %p210
      %p414 = pneg %p234
      %p415 = pneg %p231
      %p416 = pneg %p255
      %p417 = pneg %p252
      %p418 = pneg %p276
      %p419 = pneg %p273
      %p420 = pneg %p297
      %p421 = pneg %p294
      %p422 = pneg %p323
      %p423 = pneg %p320
      %p424 = scmp.lt.s32.totalorder %s24, 1
      %s425 = scalar_select %p424, %s24, 1
      %s426 = smul.addr %s425, 8
      %s427 = scalar_lea.vmem %s13, %s426
      %p428 = scmp.lt.s32.totalorder %s24, 1
      %s429 = scalar_select %p428, %s24, 1
      %s430 = smul.addr %s429, 8
      %s431 = scalar_lea.vmem %s0, %s430
      %p432 = scmp.lt.s32.totalorder %s24, 1
      %s433 = scalar_select %p432, %s24, 1
      %s434 = smul.addr %s433, 8
      %s435 = scalar_lea.vmem %s13, %s434
      %v437 = vld [vmem:[%s431] sm:$0xff]
      %v438 = vpack.c.bf16 %v437, %v437
      %v439 = vld [vmem:[%s1] sm:$0xf]
      %v440 = vld [vmem:[%s1 + $0x4] sm:$0xf]
      %v441 = vld [vmem:[%s1 + $0x8] sm:$0xf]
      %v442 = vld [vmem:[%s1 + $0xc] sm:$0xf]
      %v443 = vld [vmem:[%s1 + $0x10] sm:$0xf]
      %v444 = vld [vmem:[%s1 + $0x14] sm:$0xf]
      %v445 = vld [vmem:[%s1 + $0x18] sm:$0xf]
      %v446 = vld [vmem:[%s1 + $0x1c] sm:$0xf]
      %v447 = vld [vmem:[%s1 + $0x20] sm:$0xf]
      %v448 = vld [vmem:[%s1 + $0x24] sm:$0xf]
      %v449 = vld [vmem:[%s1 + $0x28] sm:$0xf]
      %v450 = vld [vmem:[%s1 + $0x2c] sm:$0xf]
      %v451 = vld [vmem:[%s1 + $0x30] sm:$0xf]
      %v452 = vld [vmem:[%s1 + $0x34] sm:$0xf]
      %v453 = vld [vmem:[%s1 + $0x38] sm:$0xf]
      %v454 = vld [vmem:[%s1 + $0x3c] sm:$0xf]
      %v455 = vld [vmem:[%s1 + $0x40] sm:$0xf]
      %v456 = vld [vmem:[%s1 + $0x44] sm:$0xf]
      %v457 = vld [vmem:[%s1 + $0x48] sm:$0xf]
      %v458 = vld [vmem:[%s1 + $0x4c] sm:$0xf]
      %v459 = vld [vmem:[%s1 + $0x50] sm:$0xf]
      %v460 = vld [vmem:[%s1 + $0x54] sm:$0xf]
      %v461 = vld [vmem:[%s1 + $0x58] sm:$0xf]
      %v462 = vld [vmem:[%s1 + $0x5c] sm:$0xf]
      %v463 = vld [vmem:[%s1 + $0x60] sm:$0xf]
      %v464 = vld [vmem:[%s1 + $0x64] sm:$0xf]
      %v465 = vld [vmem:[%s1 + $0x68] sm:$0xf]
      %v466 = vld [vmem:[%s1 + $0x6c] sm:$0xf]
      %v467 = vld [vmem:[%s1 + $0x70] sm:$0xf]
      %v468 = vld [vmem:[%s1 + $0x74] sm:$0xf]
      %v469 = vld [vmem:[%s1 + $0x78] sm:$0xf]
      %v470 = vld [vmem:[%s1 + $0x7c] sm:$0xf]
      %v471 = vld [vmem:[%s1 + $0x80] sm:$0xf]
      %v472 = vld [vmem:[%s1 + $0x84] sm:$0xf]
      %v473 = vld [vmem:[%s1 + $0x88] sm:$0xf]
      %v474 = vld [vmem:[%s1 + $0x8c] sm:$0xf]
      %v475 = vld [vmem:[%s1 + $0x90] sm:$0xf]
      %v476 = vld [vmem:[%s1 + $0x94] sm:$0xf]
      %v477 = vld [vmem:[%s1 + $0x98] sm:$0xf]
      %v478 = vld [vmem:[%s1 + $0x9c] sm:$0xf]
      %v479 = vld [vmem:[%s1 + $0xa0] sm:$0xf]
      %v480 = vld [vmem:[%s1 + $0xa4] sm:$0xf]
      %v481 = vld [vmem:[%s1 + $0xa8] sm:$0xf]
      %v482 = vld [vmem:[%s1 + $0xac] sm:$0xf]
      %v483 = vld [vmem:[%s1 + $0xb0] sm:$0xf]
      %v484 = vld [vmem:[%s1 + $0xb4] sm:$0xf]
      %v485 = vld [vmem:[%s1 + $0xb8] sm:$0xf]
      %v486 = vld [vmem:[%s1 + $0xbc] sm:$0xf]
      %v487 = vld [vmem:[%s2] sm:$0x1]
      %v488 = vld [vmem:[%s2 + $0x1] sm:$0x1]
      %v489 = vld [vmem:[%s2 + $0x2] sm:$0x1]
      %v490 = vld [vmem:[%s2 + $0x3] sm:$0x1]
      %v491 = vld [vmem:[%s2 + $0x4] sm:$0x1]
      %v492 = vld [vmem:[%s2 + $0x5] sm:$0x1]
      %v493 = vld [vmem:[%s2 + $0x6] sm:$0x1]
      %v494 = vld [vmem:[%s2 + $0x7] sm:$0x1]
      %v495 = vld [vmem:[%s2 + $0x8] sm:$0x1]
      %v496 = vld [vmem:[%s2 + $0x9] sm:$0x1]
      %v497 = vld [vmem:[%s2 + $0xa] sm:$0x1]
      %v498 = vld [vmem:[%s2 + $0xb] sm:$0x1]
      %v511 = vperm.slane %v487, 0
      %v512 = vperm.slane %v488, 0
      %v513 = vperm.slane %v489, 0
      %v514 = vperm.slane %v490, 0
      %v515 = vperm.slane %v491, 0
      %v516 = vperm.slane %v492, 0
      %v517 = vperm.slane %v493, 0
      %v518 = vperm.slane %v494, 0
      %v519 = vperm.slane %v495, 0
      %v520 = vperm.slane %v496, 0
      %v521 = vperm.slane %v497, 0
      %v522 = vperm.slane %v498, 0
      %v539 = vunpack.c.l.b16 %v439
      %v540 = vunpack.c.l.b16 %v440
      %v541 = vunpack.c.l.b16 %v441
      %v542 = vunpack.c.l.b16 %v442
      %v543 = vpack.c.b16 %v540, %v539
      %v544 = vpack.c.b16 %v542, %v541
      %vm547 = vcmask 261120
      %v549 = vsel %vm547, %v438, 0
      %551 = vmatpush.bf16.msra.mxu0 0
      %552 = vmatpush.bf16.msra.mxu0 0
      %553 = vmatpush.bf16.msra.mxu0 0
      %554 = vmatpush.bf16.msra.mxu0 0
      %555 = vmatpush.bf16.msra.mxu0 0
      %556 = vmatpush.bf16.msra.mxu0 0
      %557 = vmatpush.bf16.msra.mxu0 %v544
      %558 = vmatpush.bf16.msra.mxu0 %v543
      %559 = vmatmul.bf16.gmra.mxu0 %v549
      %v560 = vpop.f32.mrf.mxu0
      %v561 = vadd.f32 %v511, %v560
      %v562 = vpop.f32.mrf.mxu0
      %563 = vdwg.mxu0
      %v568 = vunpack.c.l.b16 %v443
      %v569 = vunpack.c.l.b16 %v444
      %v570 = vunpack.c.l.b16 %v445
      %v571 = vunpack.c.l.b16 %v446
      %v572 = vpack.c.b16 %v569, %v568
      %v573 = vpack.c.b16 %v571, %v570
      %576 = vmatpush.bf16.msra.mxu0 0
      %577 = vmatpush.bf16.msra.mxu0 0
      %578 = vmatpush.bf16.msra.mxu0 0
      %579 = vmatpush.bf16.msra.mxu0 0
      %580 = vmatpush.bf16.msra.mxu0 0
      %581 = vmatpush.bf16.msra.mxu0 0
      %582 = vmatpush.bf16.msra.mxu0 %v573
      %583 = vmatpush.bf16.msra.mxu0 %v572
      %584 = vmatmul.bf16.gmra.mxu0 %v549
      %v585 = vpop.f32.mrf.mxu0
      %v586 = vadd.f32 %v512, %v585
      %v587 = vpop.f32.mrf.mxu0
      %588 = vdwg.mxu0
      %v593 = vunpack.c.l.b16 %v447
      %v594 = vunpack.c.l.b16 %v448
      %v595 = vunpack.c.l.b16 %v449
      %v596 = vunpack.c.l.b16 %v450
      %v597 = vpack.c.b16 %v594, %v593
      %v598 = vpack.c.b16 %v596, %v595
      %601 = vmatpush.bf16.msra.mxu0 0
      %602 = vmatpush.bf16.msra.mxu0 0
      %603 = vmatpush.bf16.msra.mxu0 0
      %604 = vmatpush.bf16.msra.mxu0 0
      %605 = vmatpush.bf16.msra.mxu0 0
      %606 = vmatpush.bf16.msra.mxu0 0
      %607 = vmatpush.bf16.msra.mxu0 %v598
      %608 = vmatpush.bf16.msra.mxu0 %v597
      %609 = vmatmul.bf16.gmra.mxu0 %v549
      %v610 = vpop.f32.mrf.mxu0
      %v611 = vadd.f32 %v513, %v610
      %v612 = vpop.f32.mrf.mxu0
      %613 = vdwg.mxu0
      %v618 = vunpack.c.l.b16 %v451
      %v619 = vunpack.c.l.b16 %v452
      %v620 = vunpack.c.l.b16 %v453
      %v621 = vunpack.c.l.b16 %v454
      %v622 = vpack.c.b16 %v619, %v618
      %v623 = vpack.c.b16 %v621, %v620
      %626 = vmatpush.bf16.msra.mxu0 0
      %627 = vmatpush.bf16.msra.mxu0 0
      %628 = vmatpush.bf16.msra.mxu0 0
      %629 = vmatpush.bf16.msra.mxu0 0
      %630 = vmatpush.bf16.msra.mxu0 0
      %631 = vmatpush.bf16.msra.mxu0 0
      %632 = vmatpush.bf16.msra.mxu0 %v623
      %633 = vmatpush.bf16.msra.mxu0 %v622
      %634 = vmatmul.bf16.gmra.mxu0 %v549
      %v635 = vpop.f32.mrf.mxu0
      %v636 = vadd.f32 %v514, %v635
      %v637 = vpop.f32.mrf.mxu0
      %638 = vdwg.mxu0
      %v643 = vunpack.c.l.b16 %v455
      %v644 = vunpack.c.l.b16 %v456
      %v645 = vunpack.c.l.b16 %v457
      %v646 = vunpack.c.l.b16 %v458
      %v647 = vpack.c.b16 %v644, %v643
      %v648 = vpack.c.b16 %v646, %v645
      %651 = vmatpush.bf16.msra.mxu0 0
      %652 = vmatpush.bf16.msra.mxu0 0
      %653 = vmatpush.bf16.msra.mxu0 0
      %654 = vmatpush.bf16.msra.mxu0 0
      %655 = vmatpush.bf16.msra.mxu0 0
      %656 = vmatpush.bf16.msra.mxu0 0
      %657 = vmatpush.bf16.msra.mxu0 %v648
      %658 = vmatpush.bf16.msra.mxu0 %v647
      %659 = vmatmul.bf16.gmra.mxu0 %v549
      %v660 = vpop.f32.mrf.mxu0
      %v661 = vadd.f32 %v515, %v660
      %v662 = vpop.f32.mrf.mxu0
      %663 = vdwg.mxu0
      %v668 = vunpack.c.l.b16 %v459
      %v669 = vunpack.c.l.b16 %v460
      %v670 = vunpack.c.l.b16 %v461
      %v671 = vunpack.c.l.b16 %v462
      %v672 = vpack.c.b16 %v669, %v668
      %v673 = vpack.c.b16 %v671, %v670
      %676 = vmatpush.bf16.msra.mxu0 0
      %677 = vmatpush.bf16.msra.mxu0 0
      %678 = vmatpush.bf16.msra.mxu0 0
      %679 = vmatpush.bf16.msra.mxu0 0
      %680 = vmatpush.bf16.msra.mxu0 0
      %681 = vmatpush.bf16.msra.mxu0 0
      %682 = vmatpush.bf16.msra.mxu0 %v673
      %683 = vmatpush.bf16.msra.mxu0 %v672
      %684 = vmatmul.bf16.gmra.mxu0 %v549
      %v685 = vpop.f32.mrf.mxu0
      %v686 = vadd.f32 %v516, %v685
      %v687 = vpop.f32.mrf.mxu0
      %688 = vdwg.mxu0
      %v693 = vunpack.c.l.b16 %v463
      %v694 = vunpack.c.l.b16 %v464
      %v695 = vunpack.c.l.b16 %v465
      %v696 = vunpack.c.l.b16 %v466
      %v697 = vpack.c.b16 %v694, %v693
      %v698 = vpack.c.b16 %v696, %v695
      %701 = vmatpush.bf16.msra.mxu0 0
      %702 = vmatpush.bf16.msra.mxu0 0
      %703 = vmatpush.bf16.msra.mxu0 0
      %704 = vmatpush.bf16.msra.mxu0 0
      %705 = vmatpush.bf16.msra.mxu0 0
      %706 = vmatpush.bf16.msra.mxu0 0
      %707 = vmatpush.bf16.msra.mxu0 %v698
      %708 = vmatpush.bf16.msra.mxu0 %v697
      %709 = vmatmul.bf16.gmra.mxu0 %v549
      %v710 = vpop.f32.mrf.mxu0
      %v711 = vadd.f32 %v517, %v710
      %v712 = vpop.f32.mrf.mxu0
      %713 = vdwg.mxu0
      %v718 = vunpack.c.l.b16 %v467
      %v719 = vunpack.c.l.b16 %v468
      %v720 = vunpack.c.l.b16 %v469
      %v721 = vunpack.c.l.b16 %v470
      %v722 = vpack.c.b16 %v719, %v718
      %v723 = vpack.c.b16 %v721, %v720
      %726 = vmatpush.bf16.msra.mxu0 0
      %727 = vmatpush.bf16.msra.mxu0 0
      %728 = vmatpush.bf16.msra.mxu0 0
      %729 = vmatpush.bf16.msra.mxu0 0
      %730 = vmatpush.bf16.msra.mxu0 0
      %731 = vmatpush.bf16.msra.mxu0 0
      %732 = vmatpush.bf16.msra.mxu0 %v723
      %733 = vmatpush.bf16.msra.mxu0 %v722
      %734 = vmatmul.bf16.gmra.mxu0 %v549
      %v735 = vpop.f32.mrf.mxu0
      %v736 = vadd.f32 %v518, %v735
      %v737 = vpop.f32.mrf.mxu0
      %738 = vdwg.mxu0
      %v743 = vunpack.c.l.b16 %v471
      %v744 = vunpack.c.l.b16 %v472
      %v745 = vunpack.c.l.b16 %v473
      %v746 = vunpack.c.l.b16 %v474
      %v747 = vpack.c.b16 %v744, %v743
      %v748 = vpack.c.b16 %v746, %v745
      %751 = vmatpush.bf16.msra.mxu0 0
      %752 = vmatpush.bf16.msra.mxu0 0
      %753 = vmatpush.bf16.msra.mxu0 0
      %754 = vmatpush.bf16.msra.mxu0 0
      %755 = vmatpush.bf16.msra.mxu0 0
      %756 = vmatpush.bf16.msra.mxu0 0
      %757 = vmatpush.bf16.msra.mxu0 %v748
      %758 = vmatpush.bf16.msra.mxu0 %v747
      %759 = vmatmul.bf16.gmra.mxu0 %v549
      %v760 = vpop.f32.mrf.mxu0
      %v761 = vadd.f32 %v519, %v760
      %v762 = vpop.f32.mrf.mxu0
      %763 = vdwg.mxu0
      %v768 = vunpack.c.l.b16 %v475
      %v769 = vunpack.c.l.b16 %v476
      %v770 = vunpack.c.l.b16 %v477
      %v771 = vunpack.c.l.b16 %v478
      %v772 = vpack.c.b16 %v769, %v768
      %v773 = vpack.c.b16 %v771, %v770
      %776 = vmatpush.bf16.msra.mxu0 0
      %777 = vmatpush.bf16.msra.mxu0 0
      %778 = vmatpush.bf16.msra.mxu0 0
      %779 = vmatpush.bf16.msra.mxu0 0
      %780 = vmatpush.bf16.msra.mxu0 0
      %781 = vmatpush.bf16.msra.mxu0 0
      %782 = vmatpush.bf16.msra.mxu0 %v773
      %783 = vmatpush.bf16.msra.mxu0 %v772
      %784 = vmatmul.bf16.gmra.mxu0 %v549
      %v785 = vpop.f32.mrf.mxu0
      %v786 = vadd.f32 %v520, %v785
      %v787 = vpop.f32.mrf.mxu0
      %788 = vdwg.mxu0
      %v793 = vunpack.c.l.b16 %v479
      %v794 = vunpack.c.l.b16 %v480
      %v795 = vunpack.c.l.b16 %v481
      %v796 = vunpack.c.l.b16 %v482
      %v797 = vpack.c.b16 %v794, %v793
      %v798 = vpack.c.b16 %v796, %v795
      %801 = vmatpush.bf16.msra.mxu0 0
      %802 = vmatpush.bf16.msra.mxu0 0
      %803 = vmatpush.bf16.msra.mxu0 0
      %804 = vmatpush.bf16.msra.mxu0 0
      %805 = vmatpush.bf16.msra.mxu0 0
      %806 = vmatpush.bf16.msra.mxu0 0
      %807 = vmatpush.bf16.msra.mxu0 %v798
      %808 = vmatpush.bf16.msra.mxu0 %v797
      %809 = vmatmul.bf16.gmra.mxu0 %v549
      %v810 = vpop.f32.mrf.mxu0
      %v811 = vadd.f32 %v521, %v810
      %v812 = vpop.f32.mrf.mxu0
      %813 = vdwg.mxu0
      %v818 = vunpack.c.l.b16 %v483
      %v819 = vunpack.c.l.b16 %v484
      %v820 = vunpack.c.l.b16 %v485
      %v821 = vunpack.c.l.b16 %v486
      %v822 = vpack.c.b16 %v819, %v818
      %v823 = vpack.c.b16 %v821, %v820
      %826 = vmatpush.bf16.msra.mxu0 0
      %827 = vmatpush.bf16.msra.mxu0 0
      %828 = vmatpush.bf16.msra.mxu0 0
      %829 = vmatpush.bf16.msra.mxu0 0
      %830 = vmatpush.bf16.msra.mxu0 0
      %831 = vmatpush.bf16.msra.mxu0 0
      %832 = vmatpush.bf16.msra.mxu0 %v823
      %833 = vmatpush.bf16.msra.mxu0 %v822
      %834 = vmatmul.bf16.gmra.mxu0 %v549
      %v835 = vpop.f32.mrf.mxu0
      %v836 = vadd.f32 %v522, %v835
      %v837 = vpop.f32.mrf.mxu0
      %838 = vdwg.mxu0
      %v839 = vpack.c.bf16 %v561, %v561
      %v840 = vpack.c.bf16 %v586, %v586
      %v841 = vpack.c.bf16 %v611, %v611
      %v842 = vpack.c.bf16 %v636, %v636
      %v843 = vpack.c.bf16 %v661, %v661
      %v844 = vpack.c.bf16 %v686, %v686
      %v845 = vpack.c.bf16 %v711, %v711
      %v846 = vpack.c.bf16 %v736, %v736
      %vm847 = vcmask 64512
      %v849 = vsel %vm847, %v839, 0
      %v852 = vsel %vm847, %v843, 0
      %854 = vmatpush.bf16.xpose.msra.mxu0 0
      %855 = vmatpush.bf16.xpose.msra.mxu0 0
      %856 = vmatpush.bf16.xpose.msra.mxu0 0
      %857 = vmatpush.bf16.xpose.msra.mxu0 0
      %858 = vmatpush.bf16.xpose.msra.mxu0 0
      %859 = vmatpush.bf16.xpose.msra.mxu0 0
      %860 = vmatpush.bf16.xpose.msra.mxu0 0
      %861 = vmatpush.bf16.xpose.msra.mxu0 %v852
      %862 = vmatmul.bf16.gmra.mxu0 %v849
      %v863 = vpop.f32.mrf.mxu0
      %v864 = vadd.f32 0.0, %v863
      %v865 = vpop.f32.mrf.mxu0
      %866 = vdwg.mxu0
      %v868 = vsel %vm847, %v840, 0
      %v871 = vsel %vm847, %v844, 0
      %873 = vmatpush.bf16.xpose.msra.mxu0 0
      %874 = vmatpush.bf16.xpose.msra.mxu0 0
      %875 = vmatpush.bf16.xpose.msra.mxu0 0
      %876 = vmatpush.bf16.xpose.msra.mxu0 0
      %877 = vmatpush.bf16.xpose.msra.mxu0 0
      %878 = vmatpush.bf16.xpose.msra.mxu0 0
      %879 = vmatpush.bf16.xpose.msra.mxu0 0
      %880 = vmatpush.bf16.xpose.msra.mxu0 %v871
      %881 = vmatmul.bf16.gmra.mxu0 %v868
      %v882 = vpop.f32.mrf.mxu0
      %v883 = vadd.f32 0.0, %v882
      %v884 = vpop.f32.mrf.mxu0
      %885 = vdwg.mxu0
      %v887 = vsel %vm847, %v841, 0
      %v890 = vsel %vm847, %v845, 0
      %892 = vmatpush.bf16.xpose.msra.mxu0 0
      %893 = vmatpush.bf16.xpose.msra.mxu0 0
      %894 = vmatpush.bf16.xpose.msra.mxu0 0
      %895 = vmatpush.bf16.xpose.msra.mxu0 0
      %896 = vmatpush.bf16.xpose.msra.mxu0 0
      %897 = vmatpush.bf16.xpose.msra.mxu0 0
      %898 = vmatpush.bf16.xpose.msra.mxu0 0
      %899 = vmatpush.bf16.xpose.msra.mxu0 %v890
      %900 = vmatmul.bf16.gmra.mxu0 %v887
      %v901 = vpop.f32.mrf.mxu0
      %v902 = vadd.f32 0.0, %v901
      %v903 = vpop.f32.mrf.mxu0
      %904 = vdwg.mxu0
      %v906 = vsel %vm847, %v842, 0
      %v909 = vsel %vm847, %v846, 0
      %911 = vmatpush.bf16.xpose.msra.mxu0 0
      %912 = vmatpush.bf16.xpose.msra.mxu0 0
      %913 = vmatpush.bf16.xpose.msra.mxu0 0
      %914 = vmatpush.bf16.xpose.msra.mxu0 0
      %915 = vmatpush.bf16.xpose.msra.mxu0 0
      %916 = vmatpush.bf16.xpose.msra.mxu0 0
      %917 = vmatpush.bf16.xpose.msra.mxu0 0
      %918 = vmatpush.bf16.xpose.msra.mxu0 %v909
      %919 = vmatmul.bf16.gmra.mxu0 %v906
      %v920 = vpop.f32.mrf.mxu0
      %v921 = vadd.f32 0.0, %v920
      %v922 = vpop.f32.mrf.mxu0
      %923 = vdwg.mxu0
      %v924 = vsel %vm847, %v864, -inf
      %925 = vmax.xlane.f32.xlu0 %v924
      %v926 = vpop.xlane.xlu0 %925
      %v927 = vsel %vm847, %v883, -inf
      %928 = vmax.xlane.f32.xlu0 %v927
      %v929 = vpop.xlane.xlu0 %928
      %v930 = vsel %vm847, %v902, -inf
      %931 = vmax.xlane.f32.xlu0 %v930
      %v932 = vpop.xlane.xlu0 %931
      %v933 = vsel %vm847, %v921, -inf
      %934 = vmax.xlane.f32.xlu0 %v933
      %v935 = vpop.xlane.xlu0 %934
      %v936 = vsub.f32 %v864, %v926
      %v937 = vsub.f32 %v883, %v929
      %v938 = vsub.f32 %v902, %v932
      %v939 = vsub.f32 %v921, %v935
      %v940 = vmul.f32 %v936, 1.442695
      %v941 = vpow.pop %v940
      %v942 = vmul.f32 %v937, 1.442695
      %v943 = vpow.pop %v942
      %v944 = vmul.f32 %v938, 1.442695
      %v945 = vpow.pop %v944
      %v946 = vmul.f32 %v939, 1.442695
      %v947 = vpow.pop %v946
      %v948 = vsel %vm847, %v941, 0.0
      %949 = vadd.xlane.f32.xlu0 %v948
      %v950 = vpop.xlane.xlu0 %949
      %v951 = vsel %vm847, %v943, 0.0
      %952 = vadd.xlane.f32.xlu0 %v951
      %v953 = vpop.xlane.xlu0 %952
      %v954 = vsel %vm847, %v945, 0.0
      %955 = vadd.xlane.f32.xlu0 %v954
      %v956 = vpop.xlane.xlu0 %955
      %v957 = vsel %vm847, %v947, 0.0
      %958 = vadd.xlane.f32.xlu0 %v957
      %v959 = vpop.xlane.xlu0 %958
      %v960 = vrcp.pop %v950
      %v961 = vrcp.pop %v953
      %v962 = vrcp.pop %v956
      %v963 = vrcp.pop %v959
      %v964 = vmul.f32 %v941, %v960
      %v965 = vmul.f32 %v943, %v961
      %v966 = vmul.f32 %v945, %v962
      %v967 = vmul.f32 %v947, %v963
      %v968 = vpack.c.bf16 %v964, %v964
      %v969 = vpack.c.bf16 %v965, %v965
      %v970 = vpack.c.bf16 %v966, %v966
      %v971 = vpack.c.bf16 %v967, %v967
      %v972 = vpack.c.bf16 %v761, %v761
      %v973 = vpack.c.bf16 %v786, %v786
      %v974 = vpack.c.bf16 %v811, %v811
      %v975 = vpack.c.bf16 %v836, %v836
      %v977 = vsel %vm847, %v968, 0
      %vm979 = vcmask 1043456
      %v981 = vsel %vm979, %v972, 0
      %983 = vmatpush.bf16.msra.mxu0 0
      %984 = vmatpush.bf16.msra.mxu0 0
      %985 = vmatpush.bf16.msra.mxu0 0
      %986 = vmatpush.bf16.msra.mxu0 0
      %987 = vmatpush.bf16.msra.mxu0 0
      %988 = vmatpush.bf16.msra.mxu0 0
      %989 = vmatpush.bf16.msra.mxu0 0
      %990 = vmatpush.bf16.msra.mxu0 %v981
      %991 = vmatmul.bf16.gmra.mxu0 %v977
      %v992 = vpop.f32.mrf.mxu0
      %v993 = vadd.f32 0.0, %v992
      %v994 = vpop.f32.mrf.mxu0
      %995 = vdwg.mxu0
      %v997 = vsel %vm847, %v969, 0
      %v1000 = vsel %vm979, %v973, 0
      %1002 = vmatpush.bf16.msra.mxu0 0
      %1003 = vmatpush.bf16.msra.mxu0 0
      %1004 = vmatpush.bf16.msra.mxu0 0
      %1005 = vmatpush.bf16.msra.mxu0 0
      %1006 = vmatpush.bf16.msra.mxu0 0
      %1007 = vmatpush.bf16.msra.mxu0 0
      %1008 = vmatpush.bf16.msra.mxu0 0
      %1009 = vmatpush.bf16.msra.mxu0 %v1000
      %1010 = vmatmul.bf16.gmra.mxu0 %v997
      %v1011 = vpop.f32.mrf.mxu0
      %v1012 = vadd.f32 0.0, %v1011
      %v1013 = vpop.f32.mrf.mxu0
      %1014 = vdwg.mxu0
      %v1016 = vsel %vm847, %v970, 0
      %v1019 = vsel %vm979, %v974, 0
      %1021 = vmatpush.bf16.msra.mxu0 0
      %1022 = vmatpush.bf16.msra.mxu0 0
      %1023 = vmatpush.bf16.msra.mxu0 0
      %1024 = vmatpush.bf16.msra.mxu0 0
      %1025 = vmatpush.bf16.msra.mxu0 0
      %1026 = vmatpush.bf16.msra.mxu0 0
      %1027 = vmatpush.bf16.msra.mxu0 0
      %1028 = vmatpush.bf16.msra.mxu0 %v1019
      %1029 = vmatmul.bf16.gmra.mxu0 %v1016
      %v1030 = vpop.f32.mrf.mxu0
      %v1031 = vadd.f32 0.0, %v1030
      %v1032 = vpop.f32.mrf.mxu0
      %1033 = vdwg.mxu0
      %v1035 = vsel %vm847, %v971, 0
      %v1038 = vsel %vm979, %v975, 0
      %1040 = vmatpush.bf16.msra.mxu0 0
      %1041 = vmatpush.bf16.msra.mxu0 0
      %1042 = vmatpush.bf16.msra.mxu0 0
      %1043 = vmatpush.bf16.msra.mxu0 0
      %1044 = vmatpush.bf16.msra.mxu0 0
      %1045 = vmatpush.bf16.msra.mxu0 0
      %1046 = vmatpush.bf16.msra.mxu0 0
      %1047 = vmatpush.bf16.msra.mxu0 %v1038
      %1048 = vmatmul.bf16.gmra.mxu0 %v1035
      %v1049 = vpop.f32.mrf.mxu0
      %v1050 = vadd.f32 0.0, %v1049
      %v1051 = vpop.f32.mrf.mxu0
      %1052 = vdwg.mxu0
      %v1053 = vpack.c.bf16 %v993, %v993
      %v1054 = vpack.c.bf16 %v1012, %v1012
      %v1055 = vpack.c.bf16 %v1031, %v1031
      %v1056 = vpack.c.bf16 %v1050, %v1050
      %v1057 = vld [vmem:[%s3] sm:$0xf]
      %v1058 = vld [vmem:[%s3 + $0x4] sm:$0xf]
      %v1059 = vld [vmem:[%s3 + $0x8] sm:$0xf]
      %v1060 = vld [vmem:[%s3 + $0xc] sm:$0xf]
      %v1062 = vsel %vm847, %v1053, 0
      %v1065 = vsel %vm979, %v1057, 0
      %1067 = vmatpush.bf16.msra.mxu0 0
      %1068 = vmatpush.bf16.msra.mxu0 0
      %1069 = vmatpush.bf16.msra.mxu0 0
      %1070 = vmatpush.bf16.msra.mxu0 0
      %1071 = vmatpush.bf16.msra.mxu0 0
      %1072 = vmatpush.bf16.msra.mxu0 0
      %1073 = vmatpush.bf16.msra.mxu0 0
      %1074 = vmatpush.bf16.msra.mxu0 %v1065
      %1075 = vmatmul.bf16.gmra.mxu0 %v1062
      %v1076 = vpop.f32.mrf.mxu0
      %v1077 = vadd.f32 0.0, %v1076
      %v1078 = vpop.f32.mrf.mxu0
      %1079 = vdwg.mxu0
      %v1081 = vsel %vm847, %v1054, 0
      %v1084 = vsel %vm979, %v1058, 0
      %1086 = vmatpush.bf16.msra.mxu0 0
      %1087 = vmatpush.bf16.msra.mxu0 0
      %1088 = vmatpush.bf16.msra.mxu0 0
      %1089 = vmatpush.bf16.msra.mxu0 0
      %1090 = vmatpush.bf16.msra.mxu0 0
      %1091 = vmatpush.bf16.msra.mxu0 0
      %1092 = vmatpush.bf16.msra.mxu0 0
      %1093 = vmatpush.bf16.msra.mxu0 %v1084
      %1094 = vmatmul.bf16.gmra.mxu0 %v1081
      %v1095 = vpop.f32.mrf.mxu0
      %v1096 = vadd.f32 0.0, %v1095
      %v1097 = vpop.f32.mrf.mxu0
      %1098 = vdwg.mxu0
      %v1100 = vsel %vm847, %v1055, 0
      %v1103 = vsel %vm979, %v1059, 0
      %1105 = vmatpush.bf16.msra.mxu0 0
      %1106 = vmatpush.bf16.msra.mxu0 0
      %1107 = vmatpush.bf16.msra.mxu0 0
      %1108 = vmatpush.bf16.msra.mxu0 0
      %1109 = vmatpush.bf16.msra.mxu0 0
      %1110 = vmatpush.bf16.msra.mxu0 0
      %1111 = vmatpush.bf16.msra.mxu0 0
      %1112 = vmatpush.bf16.msra.mxu0 %v1103
      %1113 = vmatmul.bf16.gmra.mxu0 %v1100
      %v1114 = vpop.f32.mrf.mxu0
      %v1115 = vadd.f32 0.0, %v1114
      %v1116 = vpop.f32.mrf.mxu0
      %1117 = vdwg.mxu0
      %v1119 = vsel %vm847, %v1056, 0
      %v1122 = vsel %vm979, %v1060, 0
      %1124 = vmatpush.bf16.msra.mxu0 0
      %1125 = vmatpush.bf16.msra.mxu0 0
      %1126 = vmatpush.bf16.msra.mxu0 0
      %1127 = vmatpush.bf16.msra.mxu0 0
      %1128 = vmatpush.bf16.msra.mxu0 0
      %1129 = vmatpush.bf16.msra.mxu0 0
      %1130 = vmatpush.bf16.msra.mxu0 0
      %1131 = vmatpush.bf16.msra.mxu0 %v1122
      %1132 = vmatmul.bf16.gmra.mxu0 %v1119
      %v1133 = vpop.f32.mrf.mxu0
      %v1134 = vadd.f32 0.0, %v1133
      %v1135 = vpop.f32.mrf.mxu0
      %1136 = vdwg.mxu0
      %v1137 = vsel %vm547, %v1077, 0.0
      %v1138 = vsel %vm547, %v1096, 0.0
      %v1139 = vadd.f32 %v1137, %v1138
      %v1140 = vsel %vm547, %v1115, 0.0
      %v1141 = vadd.f32 %v1139, %v1140
      %v1142 = vsel %vm547, %v1134, 0.0
      %v1143 = vadd.f32 %v1141, %v1142
      %v1144 = vld [vmem:[%s4] sm:$0x1]
      %v1146 = vperm.slane %v1144, 0
      %v1148 = vadd.f32 %v1143, %v1146
      %v1149 = vadd.f32 %v1148, %v437
      %v1150 = vld [vmem:[%s5] sm:$0x1]
      %v1151 = vld [vmem:[%s6] sm:$0x1]
      %v1152 = vsel %vm547, %v1149, 0.0
      %1153 = vadd.xlane.f32.xlu0 %v1152
      %v1154 = vpop.xlane.xlu0 %1153
      %v1155 = vrcp.pop 32.0
      %v1156 = vmul.f32 32.0, %v1155
      %v1157 = vsub.f32 1.0, %v1156
      %v1158 = vmul.f32 %v1155, %v1157
      %v1159 = vadd.f32 %v1155, %v1158
      %vm1160 = vweird.f32 %v1155
      %v1161 = vsel %vm1160, %v1155, %v1159
      %v1162 = vmul.f32 %v1154, %v1161
      %v1163 = vsub.f32 %v1149, %v1162
      %v1164 = vmul.f32 %v1163, %v1163
      %v1165 = vsel %vm547, %v1164, 0.0
      %1166 = vadd.xlane.f32.xlu0 %v1165
      %v1167 = vpop.xlane.xlu0 %1166
      %v1168 = vmul.f32 %v1167, %v1161
      %v1169 = vadd.f32 %v1168, 1e-05
      %v1170 = vrsqrt.pop %v1169
      %v1171 = vmul.f32 %v1170, %v1169
      %v1172 = vmul.f32 %v1171, %v1170
      %v1173 = vmul.f32 0.5, %v1172
      %v1174 = vsub.f32 1.5, %v1173
      %v1175 = vmul.f32 %v1170, %v1174
      %vm1176 = vweird.f32 %v1169
      %vm1177 = vweird.f32 %v1170
      %vm1178 = vmor %vm1176, %vm1177
      %v1179 = vsel %vm1178, %v1170, %v1175
      %v1180 = vmul.f32 %v1163, %v1179
      %v1182 = vperm.slane %v1150, 0
      %v1184 = vmul.f32 %v1180, %v1182
      %v1186 = vperm.slane %v1151, 0
      %v1188 = vadd.f32 %v1184, %v1186
      %v1189 = vpack.c.bf16 %v1188, %v1188
      %v1190 = vld [vmem:[%s7] sm:$0xf]
      %v1191 = vld [vmem:[%s7 + $0x4] sm:$0xf]
      %v1192 = vld [vmem:[%s7 + $0x8] sm:$0xf]
      %v1193 = vld [vmem:[%s7 + $0xc] sm:$0xf]
      %v1194 = vld [vmem:[%s8] sm:$0x1]
      %v1196 = vperm.slane %v1194, 0
      %v1202 = vunpack.c.l.b16 %v1190
      %v1203 = vunpack.c.l.b16 %v1191
      %v1204 = vunpack.c.l.b16 %v1192
      %v1205 = vunpack.c.l.b16 %v1193
      %v1206 = vpack.c.b16 %v1203, %v1202
      %v1207 = vpack.c.b16 %v1205, %v1204
      %v1211 = vsel %vm547, %v1189, 0
      %1213 = vmatpush.bf16.msra.mxu0 0
      %1214 = vmatpush.bf16.msra.mxu0 0
      %1215 = vmatpush.bf16.msra.mxu0 0
      %1216 = vmatpush.bf16.msra.mxu0 0
      %1217 = vmatpush.bf16.msra.mxu0 0
      %1218 = vmatpush.bf16.msra.mxu0 0
      %1219 = vmatpush.bf16.msra.mxu0 %v1207
      %1220 = vmatpush.bf16.msra.mxu0 %v1206
      %1221 = vmatmul.bf16.gmra.mxu0 %v1211
      %v1222 = vpop.f32.mrf.mxu0
      %v1223 = vadd.f32 %v1196, %v1222
      %v1224 = vpop.f32.mrf.mxu0
      %1225 = vdwg.mxu0
      %v1226 = vmax.f32 %v1223, 0.0
      %v1227 = vpack.c.bf16 %v1226, %v1226
      %v1228 = vld [vmem:[%s9] sm:$0xf]
      %v1229 = vld [vmem:[%s9 + $0x4] sm:$0xf]
      %v1230 = vld [vmem:[%s9 + $0x8] sm:$0xf]
      %v1231 = vld [vmem:[%s9 + $0xc] sm:$0xf]
      %v1232 = vld [vmem:[%s9 + $0x10] sm:$0xf]
      %v1233 = vld [vmem:[%s9 + $0x14] sm:$0xf]
      %v1234 = vld [vmem:[%s9 + $0x18] sm:$0xf]
      %v1235 = vld [vmem:[%s9 + $0x1c] sm:$0xf]
      %v1236 = vld [vmem:[%s10] sm:$0x1]
      %v1238 = vperm.slane %v1236, 0
      %v1248 = vunpack.c.l.b16 %v1228
      %v1249 = vunpack.c.l.b16 %v1229
      %v1250 = vunpack.c.l.b16 %v1230
      %v1251 = vunpack.c.l.b16 %v1231
      %v1252 = vunpack.c.l.b16 %v1232
      %v1253 = vunpack.c.l.b16 %v1233
      %v1254 = vunpack.c.l.b16 %v1234
      %v1255 = vunpack.c.l.b16 %v1235
      %v1256 = vpack.c.b16 %v1249, %v1248
      %v1257 = vpack.c.b16 %v1251, %v1250
      %v1258 = vpack.c.b16 %v1253, %v1252
      %v1259 = vpack.c.b16 %v1255, %v1254
      %vm1264 = vcmask 523264
      %v1266 = vsel %vm1264, %v1227, 0
      %1268 = vmatpush.bf16.msra.mxu0 0
      %1269 = vmatpush.bf16.msra.mxu0 0
      %1270 = vmatpush.bf16.msra.mxu0 0
      %1271 = vmatpush.bf16.msra.mxu0 0
      %1272 = vmatpush.bf16.msra.mxu0 %v1259
      %1273 = vmatpush.bf16.msra.mxu0 %v1258
      %1274 = vmatpush.bf16.msra.mxu0 %v1257
      %1275 = vmatpush.bf16.msra.mxu0 %v1256
      %1276 = vmatmul.bf16.gmra.mxu0 %v1266
      %v1277 = vpop.f32.mrf.mxu0
      %v1278 = vadd.f32 %v1238, %v1277
      %v1279 = vpop.f32.mrf.mxu0
      %1280 = vdwg.mxu0
      %v1281 = vadd.f32 %v1278, %v1188
      %v1282 = vld [vmem:[%s11] sm:$0x1]
      %v1283 = vld [vmem:[%s12] sm:$0x1]
      %v1284 = vsel %vm547, %v1281, 0.0
      %1285 = vadd.xlane.f32.xlu0 %v1284
      %v1286 = vpop.xlane.xlu0 %1285
      %v1287 = vmul.f32 %v1286, %v1161
      %v1288 = vsub.f32 %v1281, %v1287
      %v1289 = vmul.f32 %v1288, %v1288
      %v1290 = vsel %vm547, %v1289, 0.0
      %1291 = vadd.xlane.f32.xlu0 %v1290
      %v1292 = vpop.xlane.xlu0 %1291
      %v1293 = vmul.f32 %v1292, %v1161
      %v1294 = vadd.f32 %v1293, 1e-05
      %v1295 = vrsqrt.pop %v1294
      %v1296 = vmul.f32 %v1295, %v1294
      %v1297 = vmul.f32 %v1296, %v1295
      %v1298 = vmul.f32 0.5, %v1297
      %v1299 = vsub.f32 1.5, %v1298
      %v1300 = vmul.f32 %v1295, %v1299
      %vm1301 = vweird.f32 %v1294
      %vm1302 = vweird.f32 %v1295
      %vm1303 = vmor %vm1301, %vm1302
      %v1304 = vsel %vm1303, %v1295, %v1300
      %v1305 = vmul.f32 %v1288, %v1304
      %v1307 = vperm.slane %v1282, 0
      %v1309 = vmul.f32 %v1305, %v1307
      %v1311 = vperm.slane %v1283, 0
      %v1313 = vadd.f32 %v1309, %v1311
      %1314 = vst.msk [vmem:[%s435] sm:$0xff] %vm547, %v1313
      %p1315 = scmp.lt.s32.totalorder %s24, 1
      %s1316 = scalar_select %p1315, %s24, 1
      %s1317 = smul.addr %s1316, 8
      %s1318 = scalar_lea.vmem %s13, %s1317
      // Predicated region
      $region73: #{transformer_forward.2} parent=71 // pred_check
        %p1319 = pneg %p320
      $region74: #{transformer_forward.2} parent=71 // pred_check_branch
        %1321 = sbr.rel (%p1319) target = $region76
      $region75: #{transformer_forward.2} parent=71 // pred_region
        _
      $region76: #{transformer_forward.2} parent=71 // pred_fallthru
        _
    $region72: #{transformer_forward.2} parent=5 // pred_fallthru
      _
    %p1322 = scmp.le.s32.totalorder 2, %s19
    // Predicated region
    $region77: #{transformer_forward.2} parent=5 // pred_check
      %p1323 = pneg %p1322
    $region78: #{transformer_forward.2} parent=5 // pred_check_branch
      %1325 = sbr.rel (%p1323) target = $region80
    $region79: #{transformer_forward.2} parent=5 // pred_region
      %s1326 = ssub.s32 %s19, 2
      // Predicated region
      $region81: #{transformer_forward.2} parent=79 // pred_check
        %p1327 = pneg %p326
      $region82: #{transformer_forward.2} parent=79 // pred_check_branch
        %1329 = sbr.rel (%p1327) target = $region84
      $region83: #{transformer_forward.2} parent=79 // pred_region
        %p1330 = scmp.lt.s32.totalorder %s25, 1
        %s1331 = scalar_select %p1330, %s25, 1
        %s1332 = smul.addr %s1331, 8
        %s1333 = scalar_lea.vmem %s13, %s1332
      $region84: #{transformer_forward.2} parent=79 // pred_fallthru
        _
    $region80: #{transformer_forward.2} parent=5 // pred_fallthru
      _
  $region6: #{transformer_forward.2} parent=0 // loop_footer
    %s23 = sadd.s32 1, %s19
  $region7: #{transformer_forward.2} parent=0 // loop_footer_branch
    %18 = sbr.rel target = $region3
  $region8: #{transformer_forward.2} parent=0 // loop_exit
    _

</llo_original>
